<compile_context>
chip_gen: v5e
topology: v5e:2x2
jax: 0.10.0
libtpu: 0.0.40
codegen_flags: <defaults>
</compile_context>

<pallas_src>
import functools

import jax
import jax.numpy as jnp
from jax.experimental import pallas as pl
from jax.experimental.pallas import tpu as pltpu

EPS = 1e-5
NEG_SLOPE = 0.01  # nn.LeakyReLU default


# ------------------------------ Pallas kernel ------------------------------
def nvp_kernel(x_ref, isg_ref, mask_ref, wp1_ref, bp1_ref, wq_ref, w2_ref, b2_ref,
               out_ref, *, n_coupling, n_pts, bt, ht_min, ht_max, ht_shift):
    # Channel-major: y is (3, M) with M = bt * n_pts points on the lane axis.
    y = x_ref[...]

    # Static unroll over the coupling layers (L is small here; switch to
    # lax.fori_loop + dynamic weight indexing if n_coupling grows beyond ~8).
    for l in range(n_coupling):
        # projection layer 1 (mask already folded into the weight):
        #   h = relu(Wp1m @ y + bp1)                                  (2P, M)
        h = jnp.dot(wp1_ref[l], y, preferred_element_type=jnp.float32) + bp1_ref[l]
        h = jnp.maximum(h, 0.0)

        # fused [proj layer 2] . [map_s conv1 | map_t conv1]          (2H, M)
        # (Fi, bs1/bt1 and bp2 are per-channel constants over the N points and
        #  cancel in the following InstanceNorm, so no bias / no Fi here.)
        ust = jnp.dot(wq_ref[l], h, preferred_element_type=jnp.float32)

        # InstanceNorm per batch element: one-pass stats over the N-point
        # lane segment of each batch element, then LeakyReLU.
        segs = []
        for b in range(bt):
            seg = ust[:, b * n_pts:(b + 1) * n_pts]        # 128-aligned lane slice
            m1 = jnp.mean(seg, axis=1, keepdims=True)
            m2 = jnp.mean(seg * seg, axis=1, keepdims=True)
            segs.append((seg - m1) * jax.lax.rsqrt(m2 - m1 * m1 + EPS))
        ust = segs[0] if bt == 1 else jnp.concatenate(segs, axis=1)
        ust = jnp.where(ust >= 0.0, ust, NEG_SLOPE * ust)

        # fused block-diagonal second convs -> rows 0..2 = s, rows 3..5 = t
        st = jnp.dot(w2_ref[l], ust, preferred_element_type=jnp.float32) + b2_ref[l]
        s = jnp.clip(st[0:3, :], ht_min, ht_max) + ht_shift   # Hardtanh + Shift
        t = st[3:6, :]

        # coupling update: rows with mask==1 keep y; others get (y - t)*exp(-s)
        y = jnp.where(mask_ref[l] > 0.5, y, (y - t) * jnp.exp(-s))

    out_ref[...] = y * isg_ref[...]       # y / sigma + mu   (mu == 0)


# ------------------------- plain-JAX glue / reference -----------------------
def _leaky_relu(u):
    return jnp.where(u >= 0, u, NEG_SLOPE * u)


def _mlp_instancenorm(x3, w1, b1, w2, b2):
    # x3: (B, L, Cin). Conv1d(kernel=1) == pointwise linear; InstanceNorm over L.
    h = jnp.einsum('blc,cd->bld', x3, w1) + b1
    mu = h.mean(axis=1, keepdims=True)
    var = ((h - mu) ** 2).mean(axis=1, keepdims=True)
    h = _leaky_relu((h - mu) / jnp.sqrt(var + EPS))
    return jnp.einsum('blh,ho->blo', h, w2) + b2


def _sigma_and_fi(params, F, n_layers):
    hs = jnp.maximum(F @ params['wsc1'] + params['bsc1'], 0.0)
    sigma = jax.nn.elu(hs @ params['wsc2'] + params['bsc2']) + 1.0      # (B, 3)
    fis = []
    for i in range(n_layers):
        Fi = _mlp_instancenorm(F[:, None, :],
                               params['wc1'][i], params['bc1'][i],
                               params['wc2'][i], params['bc2'][i])      # (B, 1, Df)
        fis.append(Fi)
        fis.append(Fi)  # same Fi feeds both coupling sub-layers of block i
    fi_all = jnp.stack(fis, axis=1)                                     # (B, L, 1, Df)
    return sigma, fi_all


@functools.partial(jax.jit, static_argnames=("n_layers", "ht"))
def forward_ref(params, F, x, n_layers, ht):
    """Pure-JAX reference mirroring the PyTorch forward exactly."""
    ht_min, ht_max, ht_shift = ht
    B, Df = F.shape
    _, N, _ = x.shape
    sigma, fi_all = _sigma_and_fi(params, F, n_layers)
    y = x[:, :, None, :]                                               # (B, N, 1, 3)
    for i in range(n_layers):
        for sub in range(2):
            l = 2 * i + sub
            Fi4 = jnp.broadcast_to(fi_all[:, l][:, None], (B, N, 1, Df))
            mask = params['masks'][l].reshape(1, 1, 1, 3)
            y1 = y * mask
            h = jnp.maximum(
                jnp.einsum('bnod,de->bnoe', y1, params['wp1'][l]) + params['bp1'][l], 0.0)
            p = jnp.einsum('bnod,de->bnoe', h, params['wp2'][l]) + params['bp2'][l]
            fy1 = jnp.concatenate([Fi4, p], axis=-1)
            x3 = fy1.reshape(B, N, -1)
            s = _mlp_instancenorm(x3, params['ws1'][l], params['bs1'][l],
                                  params['ws2'][l], params['bs2'][l])
            s = jnp.clip(s, ht_min, ht_max) + ht_shift
            t = _mlp_instancenorm(x3, params['wt1'][l], params['bt1'][l],
                                  params['wt2'][l], params['bt2'][l])
            s = s.reshape(B, N, 1, 3)
            t = t.reshape(B, N, 1, 3)
            y = y1 + (1.0 - mask) * ((y - t) * jnp.exp(-s))
    return y / sigma[:, None, None, :]


def _pick_block_batch(B, N, target_pts=512):
    """Batch elements per grid step: block last dim must be a multiple of 128
    (or the full B*N); prefer >= target points per program, with the smallest
    such block so the grid stays >= 2 where possible (v7x megacore)."""
    cands = [bt for bt in range(1, B + 1)
             if B % bt == 0 and ((bt * N) % 128 == 0 or bt == B)]
    big = [bt for bt in cands if bt * N >= target_pts]
    return min(big) if big else max(cands)


@functools.partial(jax.jit, static_argnames=("n_layers", "ht"))
def nvp_forward_pallas(params, F, x, n_layers, ht):
    ht_min, ht_max, ht_shift = ht
    B, Df = F.shape
    _, N, _ = x.shape
    L = 2 * n_layers
    P = params['wp2'].shape[-1]
    H = params['ws1'].shape[-1]

    # ---- tiny per-batch glue: sigma from the `scales` net, inverted ----
    hs = jnp.maximum(F @ params['wsc1'] + params['bsc1'], 0.0)
    sigma = jax.nn.elu(hs @ params['wsc2'] + params['bsc2']) + 1.0        # (B, 3)
    inv_sigma = 1.0 / sigma

    # ---- weight folding (exact; see header comments) ----
    masks = params['masks']                                               # (L, 1, 3)
    mask_col = jnp.transpose(masks, (0, 2, 1))                            # (L, 3, 1)

    # mask folded into projection W1; transposed for channel-major matmuls
    wp1m_t = jnp.transpose(params['wp1'] * jnp.transpose(masks, (0, 2, 1)),
                           (0, 2, 1))                                     # (L, 2P, 3)
    bp1_t = jnp.transpose(params['bp1'], (0, 2, 1))                       # (L, 2P, 1)

    # fused [proj W2] @ [ws1 | wt1] (only the rows acting on the projection
    # output survive the InstanceNorm; Fi / bs1 / bt1 / bp2 cancel)
    wst1 = jnp.concatenate([params['ws1'][:, Df:, :], params['wt1'][:, Df:, :]],
                           axis=-1)                                       # (L, P, 2H)
    wq_t = jnp.transpose(jnp.einsum('lab,lbc->lac', params['wp2'], wst1),
                         (0, 2, 1))                                       # (L, 2H, 2P)

    # block-diagonal fused second convs: rows 0..2 -> s, rows 3..5 -> t
    ws2_t = jnp.transpose(params['ws2'], (0, 2, 1))                       # (L, 3, H)
    wt2_t = jnp.transpose(params['wt2'], (0, 2, 1))                       # (L, 3, H)
    z = jnp.zeros_like(ws2_t)
    w2_t = jnp.concatenate([jnp.concatenate([ws2_t, z], axis=-1),
                            jnp.concatenate([z, wt2_t], axis=-1)], axis=1)  # (L, 6, 2H)
    b2_t = jnp.transpose(jnp.concatenate([params['bs2'], params['bt2']], axis=-1),
                         (0, 2, 1))                                       # (L, 6, 1)

    # ---- channel-major data layout: points on the lane axis ----
    x_t = jnp.transpose(x, (2, 0, 1)).reshape(3, B * N)                   # (3, B*N)
    isg_t = jnp.broadcast_to(jnp.transpose(inv_sigma)[:, :, None],
                             (3, B, N)).reshape(3, B * N)                 # (3, B*N)

    Bt = _pick_block_batch(B, N)
    M = Bt * N
    grid = (B // Bt,)

    kernel = functools.partial(nvp_kernel, n_coupling=L, n_pts=N, bt=Bt,
                               ht_min=ht_min, ht_max=ht_max, ht_shift=ht_shift)

    def batch_spec():
        return pl.BlockSpec((3, M), lambda i: (0, i))

    def full_spec(shape):
        nd = len(shape)
        return pl.BlockSpec(shape, lambda i, _nd=nd: (0,) * _nd)

    out_t = pl.pallas_call(
        kernel,
        out_shape=jax.ShapeDtypeStruct((3, B * N), jnp.float32),
        grid=grid,
        in_specs=[
            batch_spec(),                       # x   (channel-major)
            batch_spec(),                       # 1/sigma broadcast over points
            full_spec((L, 3, 1)),               # coupling masks
            full_spec((L, 2 * P, 3)),           # mask-folded proj W1^T
            full_spec((L, 2 * P, 1)),           # proj b1
            full_spec((L, 2 * H, 2 * P)),       # fused (proj W2 . [ws1|wt1])^T
            full_spec((L, 6, 2 * H)),           # block-diag [ws2; wt2]^T
            full_spec((L, 6, 1)),               # [bs2 | bt2]
        ],
        out_specs=batch_spec(),
        compiler_params=pltpu.CompilerParams(dimension_semantics=("parallel",)),
    )(x_t, isg_t, mask_col, wp1m_t, bp1_t, wq_t, w2_t, b2_t)

    y = jnp.transpose(out_t.reshape(3, B, N), (1, 2, 0))                  # (B, N, 3)
    return y[:, :, None, :]                                               # (B, N, 1, 3)


# ------------------------------ parameter init ------------------------------
def make_params(key, n_layers, Df, P, H):
    L = 2 * n_layers
    Cin = Df + P
    ks = iter(jax.random.split(key, 32))

    def w(shape, scale=0.1):
        return scale * jax.random.normal(next(ks), shape, jnp.float32)

    params = dict(
        wp1=w((L, 3, 2 * P)),   bp1=w((L, 1, 2 * P), 0.02),
        wp2=w((L, 2 * P, P)),   bp2=w((L, 1, P), 0.02),
        ws1=w((L, Cin, H)),     bs1=w((L, 1, H), 0.02),
        ws2=w((L, H, 3)),       bs2=w((L, 1, 3), 0.02),
        wt1=w((L, Cin, H)),     bt1=w((L, 1, H), 0.02),
        wt2=w((L, H, 3)),       bt2=w((L, 1, 3), 0.02),
        wc1=w((n_layers, Df, Df)), bc1=w((n_layers, 1, Df), 0.02),
        wc2=w((n_layers, Df, Df)), bc2=w((n_layers, 1, Df), 0.02),
        wsc1=w((Df, H)),        bsc1=w((H,), 0.02),
        wsc2=w((H, 3)),         bsc2=w((3,), 0.02),
    )

    # deterministic stand-in for torch.randperm(3) mask selection
    perm = [2, 0, 1]
    mask_sel = []
    while len(mask_sel) < n_layers:
        mask_sel.extend(perm)
    masks = []
    for i in range(n_layers):
        m2 = jnp.zeros((3,), jnp.float32).at[mask_sel[i]].set(1.0)
        masks.append(1.0 - m2)   # layers1[i] mask
        masks.append(m2)         # layers2[i] mask
    params['masks'] = jnp.stack(masks)[:, None, :]   # (L, 1, 3)
    return params


# ----------------------------------- main -----------------------------------
if __name__ == "__main__":
    n_layers = 2      # flow blocks (each = two coupling layers)
    Df = 8            # feature_dims
    P = 8             # proj_dims
    H = 32            # hidden_size
    B = 4             # batch
    N = 256           # numCoor (points) -- multiple of 128 for lane-dense tiles

    hardtanh_range = (-10.0, 10.0)
    ht_shift = (hardtanh_range[1] + hardtanh_range[0]) / 2.0
    ht = (hardtanh_range[0] - ht_shift, hardtanh_range[1] - ht_shift, ht_shift)

    key = jax.random.PRNGKey(0)
    kp, kF, kx = jax.random.split(key, 3)
    params = make_params(kp, n_layers, Df, P, H)
    F = jax.random.normal(kF, (B, Df), jnp.float32)          # latent code
    x = jax.random.normal(kx, (B, N, 3), jnp.float32)        # points

    y_pallas = jax.block_until_ready(nvp_forward_pallas(params, F, x, n_layers, ht))
    y_ref = jax.block_until_ready(forward_ref(params, F, x, n_layers, ht))

    assert y_pallas.shape == (B, N, 1, 3), y_pallas.shape
    max_abs = float(jnp.max(jnp.abs(y_ref))) + 1e-6
    rel_err = float(jnp.max(jnp.abs(y_pallas - y_ref))) / max_abs
    if not rel_err < 2e-2:
        raise AssertionError(f"Pallas/reference mismatch, rel_err={rel_err}")
    print("KERNEL_OK")
</pallas_src>

<mosaic_0001>
module attributes {stable_mosaic.version = 11 : i64} {
  func.func @nvp_kernel(%arg0: i32, %arg1: memref<3x512xf32, #tpu.memory_space<vmem>>, %arg2: memref<3x512xf32, #tpu.memory_space<vmem>>, %arg3: memref<4x3x1xf32, #tpu.memory_space<vmem>>, %arg4: memref<4x16x3xf32, #tpu.memory_space<vmem>>, %arg5: memref<4x16x1xf32, #tpu.memory_space<vmem>>, %arg6: memref<4x64x16xf32, #tpu.memory_space<vmem>>, %arg7: memref<4x6x64xf32, #tpu.memory_space<vmem>>, %arg8: memref<4x6x1xf32, #tpu.memory_space<vmem>>, %arg9: memref<3x512xf32, #tpu.memory_space<vmem>>) attributes {dimension_semantics = [#tpu.dimension_semantics<parallel>], iteration_bounds = array<i64: 2>, scalar_prefetch = 0 : i64, scratch_operands = 0 : i64, tpu.core_type = #tpu.core_type<tc>, window_params = [{transform_indices = @transform_0, window_bounds = array<i64: 3, 512>}, {transform_indices = @transform_1, window_bounds = array<i64: 3, 512>}, {pipeline_mode = #tpu.pipeline_mode<synchronous>, transform_indices = @transform_2, window_bounds = array<i64: 4, 3, 1>}, {pipeline_mode = #tpu.pipeline_mode<synchronous>, transform_indices = @transform_3, window_bounds = array<i64: 4, 16, 3>}, {pipeline_mode = #tpu.pipeline_mode<synchronous>, transform_indices = @transform_4, window_bounds = array<i64: 4, 16, 1>}, {pipeline_mode = #tpu.pipeline_mode<synchronous>, transform_indices = @transform_5, window_bounds = array<i64: 4, 64, 16>}, {pipeline_mode = #tpu.pipeline_mode<synchronous>, transform_indices = @transform_6, window_bounds = array<i64: 4, 6, 64>}, {pipeline_mode = #tpu.pipeline_mode<synchronous>, transform_indices = @transform_7, window_bounds = array<i64: 4, 6, 1>}, {transform_indices = @transform_8, window_bounds = array<i64: 3, 512>}]} {
    %c0 = arith.constant 0 : index
    %c0_0 = arith.constant 0 : index
    %0 = vector.load %arg1[%c0, %c0_0] : memref<3x512xf32, #tpu.memory_space<vmem>>, vector<3x512xf32>
    %c0_1 = arith.constant 0 : index
    %c0_2 = arith.constant 0 : index
    %c0_3 = arith.constant 0 : index
    %1 = vector.load %arg4[%c0_1, %c0_2, %c0_3] : memref<4x16x3xf32, #tpu.memory_space<vmem>>, vector<1x16x3xf32>
    %2 = vector.shape_cast %1 : vector<1x16x3xf32> to vector<16x3xf32>
    %cst = arith.constant dense<0.000000e+00> : vector<16x512xf32>
    %3 = tpu.matmul %2, %0, %cst {dimension_numbers = #tpu.dot_dimension_numbers<[1], [0], [0], [1], [0, 0, 1, 1], [], []>} : vector<16x3xf32>, vector<3x512xf32>, vector<16x512xf32> -> vector<16x512xf32>
    %c0_4 = arith.constant 0 : index
    %c0_5 = arith.constant 0 : index
    %c0_6 = arith.constant 0 : index
    %4 = vector.load %arg5[%c0_4, %c0_5, %c0_6] : memref<4x16x1xf32, #tpu.memory_space<vmem>>, vector<1x16x1xf32>
    %5 = vector.shape_cast %4 : vector<1x16x1xf32> to vector<16x1xf32>
    %6 = vector.broadcast %5 : vector<16x1xf32> to vector<16x512xf32>
    %7 = arith.addf %3, %6 : vector<16x512xf32>
    %cst_7 = arith.constant 0.000000e+00 : f32
    %8 = vector.broadcast %cst_7 : f32 to vector<16x512xf32>
    %9 = arith.maximumf %7, %8 : vector<16x512xf32>
    %c0_8 = arith.constant 0 : index
    %c0_9 = arith.constant 0 : index
    %c0_10 = arith.constant 0 : index
    %10 = vector.load %arg6[%c0_8, %c0_9, %c0_10] : memref<4x64x16xf32, #tpu.memory_space<vmem>>, vector<1x64x16xf32>
    %11 = vector.shape_cast %10 : vector<1x64x16xf32> to vector<64x16xf32>
    %cst_11 = arith.constant dense<0.000000e+00> : vector<64x512xf32>
    %12 = tpu.matmul %11, %9, %cst_11 {dimension_numbers = #tpu.dot_dimension_numbers<[1], [0], [0], [1], [0, 0, 1, 1], [], []>} : vector<64x16xf32>, vector<16x512xf32>, vector<64x512xf32> -> vector<64x512xf32>
    %13 = vector.extract_strided_slice %12 {offsets = [0, 0], sizes = [64, 256], strides = [1, 1]} : vector<64x512xf32> to vector<64x256xf32>
    %cst_12 = arith.constant dense<0.000000e+00> : vector<64xf32>
    %14 = vector.multi_reduction <add>, %13, %cst_12 [1] : vector<64x256xf32> to vector<64xf32>
    %15 = vector.shape_cast %14 : vector<64xf32> to vector<64x1xf32>
    %cst_13 = arith.constant 2.560000e+02 : f32
    %16 = vector.broadcast %cst_13 : f32 to vector<64x1xf32>
    %17 = arith.divf %15, %16 : vector<64x1xf32>
    %18 = arith.mulf %13, %13 : vector<64x256xf32>
    %cst_14 = arith.constant dense<0.000000e+00> : vector<64xf32>
    %19 = vector.multi_reduction <add>, %18, %cst_14 [1] : vector<64x256xf32> to vector<64xf32>
    %20 = vector.shape_cast %19 : vector<64xf32> to vector<64x1xf32>
    %cst_15 = arith.constant 2.560000e+02 : f32
    %21 = vector.broadcast %cst_15 : f32 to vector<64x1xf32>
    %22 = arith.divf %20, %21 : vector<64x1xf32>
    %23 = vector.broadcast %17 : vector<64x1xf32> to vector<64x256xf32>
    %24 = arith.subf %13, %23 : vector<64x256xf32>
    %25 = arith.mulf %17, %17 : vector<64x1xf32>
    %26 = arith.subf %22, %25 : vector<64x1xf32>
    %cst_16 = arith.constant 9.99999974E-6 : f32
    %27 = vector.broadcast %cst_16 : f32 to vector<64x1xf32>
    %28 = arith.addf %26, %27 : vector<64x1xf32>
    %29 = math.rsqrt %28 : vector<64x1xf32>
    %30 = vector.broadcast %29 : vector<64x1xf32> to vector<64x256xf32>
    %31 = arith.mulf %24, %30 : vector<64x256xf32>
    %32 = vector.extract_strided_slice %12 {offsets = [0, 256], sizes = [64, 256], strides = [1, 1]} : vector<64x512xf32> to vector<64x256xf32>
    %cst_17 = arith.constant dense<0.000000e+00> : vector<64xf32>
    %33 = vector.multi_reduction <add>, %32, %cst_17 [1] : vector<64x256xf32> to vector<64xf32>
    %34 = vector.shape_cast %33 : vector<64xf32> to vector<64x1xf32>
    %cst_18 = arith.constant 2.560000e+02 : f32
    %35 = vector.broadcast %cst_18 : f32 to vector<64x1xf32>
    %36 = arith.divf %34, %35 : vector<64x1xf32>
    %37 = arith.mulf %32, %32 : vector<64x256xf32>
    %cst_19 = arith.constant dense<0.000000e+00> : vector<64xf32>
    %38 = vector.multi_reduction <add>, %37, %cst_19 [1] : vector<64x256xf32> to vector<64xf32>
    %39 = vector.shape_cast %38 : vector<64xf32> to vector<64x1xf32>
    %cst_20 = arith.constant 2.560000e+02 : f32
    %40 = vector.broadcast %cst_20 : f32 to vector<64x1xf32>
    %41 = arith.divf %39, %40 : vector<64x1xf32>
    %42 = vector.broadcast %36 : vector<64x1xf32> to vector<64x256xf32>
    %43 = arith.subf %32, %42 : vector<64x256xf32>
    %44 = arith.mulf %36, %36 : vector<64x1xf32>
    %45 = arith.subf %41, %44 : vector<64x1xf32>
    %cst_21 = arith.constant 9.99999974E-6 : f32
    %46 = vector.broadcast %cst_21 : f32 to vector<64x1xf32>
    %47 = arith.addf %45, %46 : vector<64x1xf32>
    %48 = math.rsqrt %47 : vector<64x1xf32>
    %49 = vector.broadcast %48 : vector<64x1xf32> to vector<64x256xf32>
    %50 = arith.mulf %43, %49 : vector<64x256xf32>
    %51 = tpu.concatenate %31, %50 in 1 : vector<64x256xf32>, vector<64x256xf32> -> vector<64x512xf32>
    %cst_22 = arith.constant 0.000000e+00 : f32
    %52 = vector.broadcast %cst_22 : f32 to vector<64x512xf32>
    %53 = arith.cmpf oge, %51, %52 : vector<64x512xf32>
    %cst_23 = arith.constant 0.00999999977 : f32
    %54 = vector.broadcast %cst_23 : f32 to vector<64x512xf32>
    %55 = arith.mulf %54, %51 : vector<64x512xf32>
    %56 = arith.select %53, %51, %55 : vector<64x512xi1>, vector<64x512xf32>
    %c0_24 = arith.constant 0 : index
    %c0_25 = arith.constant 0 : index
    %c0_26 = arith.constant 0 : index
    %57 = vector.load %arg7[%c0_24, %c0_25, %c0_26] : memref<4x6x64xf32, #tpu.memory_space<vmem>>, vector<1x6x64xf32>
    %58 = vector.shape_cast %57 : vector<1x6x64xf32> to vector<6x64xf32>
    %cst_27 = arith.constant dense<0.000000e+00> : vector<6x512xf32>
    %59 = tpu.matmul %58, %56, %cst_27 {dimension_numbers = #tpu.dot_dimension_numbers<[1], [0], [0], [1], [0, 0, 1, 1], [], []>} : vector<6x64xf32>, vector<64x512xf32>, vector<6x512xf32> -> vector<6x512xf32>
    %c0_28 = arith.constant 0 : index
    %c0_29 = arith.constant 0 : index
    %c0_30 = arith.constant 0 : index
    %60 = vector.load %arg8[%c0_28, %c0_29, %c0_30] : memref<4x6x1xf32, #tpu.memory_space<vmem>>, vector<1x6x1xf32>
    %61 = vector.shape_cast %60 : vector<1x6x1xf32> to vector<6x1xf32>
    %62 = vector.broadcast %61 : vector<6x1xf32> to vector<6x512xf32>
    %63 = arith.addf %59, %62 : vector<6x512xf32>
    %64 = vector.extract_strided_slice %63 {offsets = [0, 0], sizes = [3, 512], strides = [1, 1]} : vector<6x512xf32> to vector<3x512xf32>
    %cst_31 = arith.constant -1.000000e+01 : f32
    %cst_32 = arith.constant 1.000000e+01 : f32
    %65 = vector.broadcast %cst_31 : f32 to vector<3x512xf32>
    %66 = arith.maximumf %65, %64 : vector<3x512xf32>
    %67 = vector.broadcast %cst_32 : f32 to vector<3x512xf32>
    %68 = arith.minimumf %67, %66 : vector<3x512xf32>
    %cst_33 = arith.constant 0.000000e+00 : f32
    %69 = vector.broadcast %cst_33 : f32 to vector<3x512xf32>
    %70 = arith.addf %68, %69 : vector<3x512xf32>
    %71 = vector.extract_strided_slice %63 {offsets = [3, 0], sizes = [3, 512], strides = [1, 1]} : vector<6x512xf32> to vector<3x512xf32>
    %c0_34 = arith.constant 0 : index
    %c0_35 = arith.constant 0 : index
    %c0_36 = arith.constant 0 : index
    %72 = vector.load %arg3[%c0_34, %c0_35, %c0_36] : memref<4x3x1xf32, #tpu.memory_space<vmem>>, vector<1x3x1xf32>
    %73 = vector.shape_cast %72 : vector<1x3x1xf32> to vector<3x1xf32>
    %cst_37 = arith.constant 5.000000e-01 : f32
    %74 = vector.broadcast %cst_37 : f32 to vector<3x1xf32>
    %75 = arith.cmpf ogt, %73, %74 : vector<3x1xf32>
    %76 = arith.subf %0, %71 : vector<3x512xf32>
    %cst_38 = arith.constant 0.000000e+00 : f32
    %77 = vector.broadcast %cst_38 : f32 to vector<3x512xf32>
    %78 = arith.subf %77, %70 : vector<3x512xf32>
    %79 = math.exp %78 : vector<3x512xf32>
    %80 = arith.mulf %76, %79 : vector<3x512xf32>
    %81 = vector.shape_cast %75 : vector<3x1xi1> to vector<3x1xi1>
    %82 = vector.broadcast %81 : vector<3x1xi1> to vector<3x512xi1>
    %83 = arith.select %82, %0, %80 : vector<3x512xi1>, vector<3x512xf32>
    %c1 = arith.constant 1 : index
    %c0_39 = arith.constant 0 : index
    %c0_40 = arith.constant 0 : index
    %84 = vector.load %arg4[%c1, %c0_39, %c0_40] : memref<4x16x3xf32, #tpu.memory_space<vmem>>, vector<1x16x3xf32>
    %85 = vector.shape_cast %84 : vector<1x16x3xf32> to vector<16x3xf32>
    %cst_41 = arith.constant dense<0.000000e+00> : vector<16x512xf32>
    %86 = tpu.matmul %85, %83, %cst_41 {dimension_numbers = #tpu.dot_dimension_numbers<[1], [0], [0], [1], [0, 0, 1, 1], [], []>} : vector<16x3xf32>, vector<3x512xf32>, vector<16x512xf32> -> vector<16x512xf32>
    %c1_42 = arith.constant 1 : index
    %c0_43 = arith.constant 0 : index
    %c0_44 = arith.constant 0 : index
    %87 = vector.load %arg5[%c1_42, %c0_43, %c0_44] : memref<4x16x1xf32, #tpu.memory_space<vmem>>, vector<1x16x1xf32>
    %88 = vector.shape_cast %87 : vector<1x16x1xf32> to vector<16x1xf32>
    %89 = vector.broadcast %88 : vector<16x1xf32> to vector<16x512xf32>
    %90 = arith.addf %86, %89 : vector<16x512xf32>
    %cst_45 = arith.constant 0.000000e+00 : f32
    %91 = vector.broadcast %cst_45 : f32 to vector<16x512xf32>
    %92 = arith.maximumf %90, %91 : vector<16x512xf32>
    %c1_46 = arith.constant 1 : index
    %c0_47 = arith.constant 0 : index
    %c0_48 = arith.constant 0 : index
    %93 = vector.load %arg6[%c1_46, %c0_47, %c0_48] : memref<4x64x16xf32, #tpu.memory_space<vmem>>, vector<1x64x16xf32>
    %94 = vector.shape_cast %93 : vector<1x64x16xf32> to vector<64x16xf32>
    %cst_49 = arith.constant dense<0.000000e+00> : vector<64x512xf32>
    %95 = tpu.matmul %94, %92, %cst_49 {dimension_numbers = #tpu.dot_dimension_numbers<[1], [0], [0], [1], [0, 0, 1, 1], [], []>} : vector<64x16xf32>, vector<16x512xf32>, vector<64x512xf32> -> vector<64x512xf32>
    %96 = vector.extract_strided_slice %95 {offsets = [0, 0], sizes = [64, 256], strides = [1, 1]} : vector<64x512xf32> to vector<64x256xf32>
    %cst_50 = arith.constant dense<0.000000e+00> : vector<64xf32>
    %97 = vector.multi_reduction <add>, %96, %cst_50 [1] : vector<64x256xf32> to vector<64xf32>
    %98 = vector.shape_cast %97 : vector<64xf32> to vector<64x1xf32>
    %cst_51 = arith.constant 2.560000e+02 : f32
    %99 = vector.broadcast %cst_51 : f32 to vector<64x1xf32>
    %100 = arith.divf %98, %99 : vector<64x1xf32>
    %101 = arith.mulf %96, %96 : vector<64x256xf32>
    %cst_52 = arith.constant dense<0.000000e+00> : vector<64xf32>
    %102 = vector.multi_reduction <add>, %101, %cst_52 [1] : vector<64x256xf32> to vector<64xf32>
    %103 = vector.shape_cast %102 : vector<64xf32> to vector<64x1xf32>
    %cst_53 = arith.constant 2.560000e+02 : f32
    %104 = vector.broadcast %cst_53 : f32 to vector<64x1xf32>
    %105 = arith.divf %103, %104 : vector<64x1xf32>
    %106 = vector.broadcast %100 : vector<64x1xf32> to vector<64x256xf32>
    %107 = arith.subf %96, %106 : vector<64x256xf32>
    %108 = arith.mulf %100, %100 : vector<64x1xf32>
    %109 = arith.subf %105, %108 : vector<64x1xf32>
    %cst_54 = arith.constant 9.99999974E-6 : f32
    %110 = vector.broadcast %cst_54 : f32 to vector<64x1xf32>
    %111 = arith.addf %109, %110 : vector<64x1xf32>
    %112 = math.rsqrt %111 : vector<64x1xf32>
    %113 = vector.broadcast %112 : vector<64x1xf32> to vector<64x256xf32>
    %114 = arith.mulf %107, %113 : vector<64x256xf32>
    %115 = vector.extract_strided_slice %95 {offsets = [0, 256], sizes = [64, 256], strides = [1, 1]} : vector<64x512xf32> to vector<64x256xf32>
    %cst_55 = arith.constant dense<0.000000e+00> : vector<64xf32>
    %116 = vector.multi_reduction <add>, %115, %cst_55 [1] : vector<64x256xf32> to vector<64xf32>
    %117 = vector.shape_cast %116 : vector<64xf32> to vector<64x1xf32>
    %cst_56 = arith.constant 2.560000e+02 : f32
    %118 = vector.broadcast %cst_56 : f32 to vector<64x1xf32>
    %119 = arith.divf %117, %118 : vector<64x1xf32>
    %120 = arith.mulf %115, %115 : vector<64x256xf32>
    %cst_57 = arith.constant dense<0.000000e+00> : vector<64xf32>
    %121 = vector.multi_reduction <add>, %120, %cst_57 [1] : vector<64x256xf32> to vector<64xf32>
    %122 = vector.shape_cast %121 : vector<64xf32> to vector<64x1xf32>
    %cst_58 = arith.constant 2.560000e+02 : f32
    %123 = vector.broadcast %cst_58 : f32 to vector<64x1xf32>
    %124 = arith.divf %122, %123 : vector<64x1xf32>
    %125 = vector.broadcast %119 : vector<64x1xf32> to vector<64x256xf32>
    %126 = arith.subf %115, %125 : vector<64x256xf32>
    %127 = arith.mulf %119, %119 : vector<64x1xf32>
    %128 = arith.subf %124, %127 : vector<64x1xf32>
    %cst_59 = arith.constant 9.99999974E-6 : f32
    %129 = vector.broadcast %cst_59 : f32 to vector<64x1xf32>
    %130 = arith.addf %128, %129 : vector<64x1xf32>
    %131 = math.rsqrt %130 : vector<64x1xf32>
    %132 = vector.broadcast %131 : vector<64x1xf32> to vector<64x256xf32>
    %133 = arith.mulf %126, %132 : vector<64x256xf32>
    %134 = tpu.concatenate %114, %133 in 1 : vector<64x256xf32>, vector<64x256xf32> -> vector<64x512xf32>
    %cst_60 = arith.constant 0.000000e+00 : f32
    %135 = vector.broadcast %cst_60 : f32 to vector<64x512xf32>
    %136 = arith.cmpf oge, %134, %135 : vector<64x512xf32>
    %cst_61 = arith.constant 0.00999999977 : f32
    %137 = vector.broadcast %cst_61 : f32 to vector<64x512xf32>
    %138 = arith.mulf %137, %134 : vector<64x512xf32>
    %139 = arith.select %136, %134, %138 : vector<64x512xi1>, vector<64x512xf32>
    %c1_62 = arith.constant 1 : index
    %c0_63 = arith.constant 0 : index
    %c0_64 = arith.constant 0 : index
    %140 = vector.load %arg7[%c1_62, %c0_63, %c0_64] : memref<4x6x64xf32, #tpu.memory_space<vmem>>, vector<1x6x64xf32>
    %141 = vector.shape_cast %140 : vector<1x6x64xf32> to vector<6x64xf32>
    %cst_65 = arith.constant dense<0.000000e+00> : vector<6x512xf32>
    %142 = tpu.matmul %141, %139, %cst_65 {dimension_numbers = #tpu.dot_dimension_numbers<[1], [0], [0], [1], [0, 0, 1, 1], [], []>} : vector<6x64xf32>, vector<64x512xf32>, vector<6x512xf32> -> vector<6x512xf32>
    %c1_66 = arith.constant 1 : index
    %c0_67 = arith.constant 0 : index
    %c0_68 = arith.constant 0 : index
    %143 = vector.load %arg8[%c1_66, %c0_67, %c0_68] : memref<4x6x1xf32, #tpu.memory_space<vmem>>, vector<1x6x1xf32>
    %144 = vector.shape_cast %143 : vector<1x6x1xf32> to vector<6x1xf32>
    %145 = vector.broadcast %144 : vector<6x1xf32> to vector<6x512xf32>
    %146 = arith.addf %142, %145 : vector<6x512xf32>
    %147 = vector.extract_strided_slice %146 {offsets = [0, 0], sizes = [3, 512], strides = [1, 1]} : vector<6x512xf32> to vector<3x512xf32>
    %cst_69 = arith.constant -1.000000e+01 : f32
    %cst_70 = arith.constant 1.000000e+01 : f32
    %148 = vector.broadcast %cst_69 : f32 to vector<3x512xf32>
    %149 = arith.maximumf %148, %147 : vector<3x512xf32>
    %150 = vector.broadcast %cst_70 : f32 to vector<3x512xf32>
    %151 = arith.minimumf %150, %149 : vector<3x512xf32>
    %cst_71 = arith.constant 0.000000e+00 : f32
    %152 = vector.broadcast %cst_71 : f32 to vector<3x512xf32>
    %153 = arith.addf %151, %152 : vector<3x512xf32>
    %154 = vector.extract_strided_slice %146 {offsets = [3, 0], sizes = [3, 512], strides = [1, 1]} : vector<6x512xf32> to vector<3x512xf32>
    %c1_72 = arith.constant 1 : index
    %c0_73 = arith.constant 0 : index
    %c0_74 = arith.constant 0 : index
    %155 = vector.load %arg3[%c1_72, %c0_73, %c0_74] : memref<4x3x1xf32, #tpu.memory_space<vmem>>, vector<1x3x1xf32>
    %156 = vector.shape_cast %155 : vector<1x3x1xf32> to vector<3x1xf32>
    %cst_75 = arith.constant 5.000000e-01 : f32
    %157 = vector.broadcast %cst_75 : f32 to vector<3x1xf32>
    %158 = arith.cmpf ogt, %156, %157 : vector<3x1xf32>
    %159 = arith.subf %83, %154 : vector<3x512xf32>
    %cst_76 = arith.constant 0.000000e+00 : f32
    %160 = vector.broadcast %cst_76 : f32 to vector<3x512xf32>
    %161 = arith.subf %160, %153 : vector<3x512xf32>
    %162 = math.exp %161 : vector<3x512xf32>
    %163 = arith.mulf %159, %162 : vector<3x512xf32>
    %164 = vector.shape_cast %158 : vector<3x1xi1> to vector<3x1xi1>
    %165 = vector.broadcast %164 : vector<3x1xi1> to vector<3x512xi1>
    %166 = arith.select %165, %83, %163 : vector<3x512xi1>, vector<3x512xf32>
    %c2 = arith.constant 2 : index
    %c0_77 = arith.constant 0 : index
    %c0_78 = arith.constant 0 : index
    %167 = vector.load %arg4[%c2, %c0_77, %c0_78] : memref<4x16x3xf32, #tpu.memory_space<vmem>>, vector<1x16x3xf32>
    %168 = vector.shape_cast %167 : vector<1x16x3xf32> to vector<16x3xf32>
    %cst_79 = arith.constant dense<0.000000e+00> : vector<16x512xf32>
    %169 = tpu.matmul %168, %166, %cst_79 {dimension_numbers = #tpu.dot_dimension_numbers<[1], [0], [0], [1], [0, 0, 1, 1], [], []>} : vector<16x3xf32>, vector<3x512xf32>, vector<16x512xf32> -> vector<16x512xf32>
    %c2_80 = arith.constant 2 : index
    %c0_81 = arith.constant 0 : index
    %c0_82 = arith.constant 0 : index
    %170 = vector.load %arg5[%c2_80, %c0_81, %c0_82] : memref<4x16x1xf32, #tpu.memory_space<vmem>>, vector<1x16x1xf32>
    %171 = vector.shape_cast %170 : vector<1x16x1xf32> to vector<16x1xf32>
    %172 = vector.broadcast %171 : vector<16x1xf32> to vector<16x512xf32>
    %173 = arith.addf %169, %172 : vector<16x512xf32>
    %cst_83 = arith.constant 0.000000e+00 : f32
    %174 = vector.broadcast %cst_83 : f32 to vector<16x512xf32>
    %175 = arith.maximumf %173, %174 : vector<16x512xf32>
    %c2_84 = arith.constant 2 : index
    %c0_85 = arith.constant 0 : index
    %c0_86 = arith.constant 0 : index
    %176 = vector.load %arg6[%c2_84, %c0_85, %c0_86] : memref<4x64x16xf32, #tpu.memory_space<vmem>>, vector<1x64x16xf32>
    %177 = vector.shape_cast %176 : vector<1x64x16xf32> to vector<64x16xf32>
    %cst_87 = arith.constant dense<0.000000e+00> : vector<64x512xf32>
    %178 = tpu.matmul %177, %175, %cst_87 {dimension_numbers = #tpu.dot_dimension_numbers<[1], [0], [0], [1], [0, 0, 1, 1], [], []>} : vector<64x16xf32>, vector<16x512xf32>, vector<64x512xf32> -> vector<64x512xf32>
    %179 = vector.extract_strided_slice %178 {offsets = [0, 0], sizes = [64, 256], strides = [1, 1]} : vector<64x512xf32> to vector<64x256xf32>
    %cst_88 = arith.constant dense<0.000000e+00> : vector<64xf32>
    %180 = vector.multi_reduction <add>, %179, %cst_88 [1] : vector<64x256xf32> to vector<64xf32>
    %181 = vector.shape_cast %180 : vector<64xf32> to vector<64x1xf32>
    %cst_89 = arith.constant 2.560000e+02 : f32
    %182 = vector.broadcast %cst_89 : f32 to vector<64x1xf32>
    %183 = arith.divf %181, %182 : vector<64x1xf32>
    %184 = arith.mulf %179, %179 : vector<64x256xf32>
    %cst_90 = arith.constant dense<0.000000e+00> : vector<64xf32>
    %185 = vector.multi_reduction <add>, %184, %cst_90 [1] : vector<64x256xf32> to vector<64xf32>
    %186 = vector.shape_cast %185 : vector<64xf32> to vector<64x1xf32>
    %cst_91 = arith.constant 2.560000e+02 : f32
    %187 = vector.broadcast %cst_91 : f32 to vector<64x1xf32>
    %188 = arith.divf %186, %187 : vector<64x1xf32>
    %189 = vector.broadcast %183 : vector<64x1xf32> to vector<64x256xf32>
    %190 = arith.subf %179, %189 : vector<64x256xf32>
    %191 = arith.mulf %183, %183 : vector<64x1xf32>
    %192 = arith.subf %188, %191 : vector<64x1xf32>
    %cst_92 = arith.constant 9.99999974E-6 : f32
    %193 = vector.broadcast %cst_92 : f32 to vector<64x1xf32>
    %194 = arith.addf %192, %193 : vector<64x1xf32>
    %195 = math.rsqrt %194 : vector<64x1xf32>
    %196 = vector.broadcast %195 : vector<64x1xf32> to vector<64x256xf32>
    %197 = arith.mulf %190, %196 : vector<64x256xf32>
    %198 = vector.extract_strided_slice %178 {offsets = [0, 256], sizes = [64, 256], strides = [1, 1]} : vector<64x512xf32> to vector<64x256xf32>
    %cst_93 = arith.constant dense<0.000000e+00> : vector<64xf32>
    %199 = vector.multi_reduction <add>, %198, %cst_93 [1] : vector<64x256xf32> to vector<64xf32>
    %200 = vector.shape_cast %199 : vector<64xf32> to vector<64x1xf32>
    %cst_94 = arith.constant 2.560000e+02 : f32
    %201 = vector.broadcast %cst_94 : f32 to vector<64x1xf32>
    %202 = arith.divf %200, %201 : vector<64x1xf32>
    %203 = arith.mulf %198, %198 : vector<64x256xf32>
    %cst_95 = arith.constant dense<0.000000e+00> : vector<64xf32>
    %204 = vector.multi_reduction <add>, %203, %cst_95 [1] : vector<64x256xf32> to vector<64xf32>
    %205 = vector.shape_cast %204 : vector<64xf32> to vector<64x1xf32>
    %cst_96 = arith.constant 2.560000e+02 : f32
    %206 = vector.broadcast %cst_96 : f32 to vector<64x1xf32>
    %207 = arith.divf %205, %206 : vector<64x1xf32>
    %208 = vector.broadcast %202 : vector<64x1xf32> to vector<64x256xf32>
    %209 = arith.subf %198, %208 : vector<64x256xf32>
    %210 = arith.mulf %202, %202 : vector<64x1xf32>
    %211 = arith.subf %207, %210 : vector<64x1xf32>
    %cst_97 = arith.constant 9.99999974E-6 : f32
    %212 = vector.broadcast %cst_97 : f32 to vector<64x1xf32>
    %213 = arith.addf %211, %212 : vector<64x1xf32>
    %214 = math.rsqrt %213 : vector<64x1xf32>
    %215 = vector.broadcast %214 : vector<64x1xf32> to vector<64x256xf32>
    %216 = arith.mulf %209, %215 : vector<64x256xf32>
    %217 = tpu.concatenate %197, %216 in 1 : vector<64x256xf32>, vector<64x256xf32> -> vector<64x512xf32>
    %cst_98 = arith.constant 0.000000e+00 : f32
    %218 = vector.broadcast %cst_98 : f32 to vector<64x512xf32>
    %219 = arith.cmpf oge, %217, %218 : vector<64x512xf32>
    %cst_99 = arith.constant 0.00999999977 : f32
    %220 = vector.broadcast %cst_99 : f32 to vector<64x512xf32>
    %221 = arith.mulf %220, %217 : vector<64x512xf32>
    %222 = arith.select %219, %217, %221 : vector<64x512xi1>, vector<64x512xf32>
    %c2_100 = arith.constant 2 : index
    %c0_101 = arith.constant 0 : index
    %c0_102 = arith.constant 0 : index
    %223 = vector.load %arg7[%c2_100, %c0_101, %c0_102] : memref<4x6x64xf32, #tpu.memory_space<vmem>>, vector<1x6x64xf32>
    %224 = vector.shape_cast %223 : vector<1x6x64xf32> to vector<6x64xf32>
    %cst_103 = arith.constant dense<0.000000e+00> : vector<6x512xf32>
    %225 = tpu.matmul %224, %222, %cst_103 {dimension_numbers = #tpu.dot_dimension_numbers<[1], [0], [0], [1], [0, 0, 1, 1], [], []>} : vector<6x64xf32>, vector<64x512xf32>, vector<6x512xf32> -> vector<6x512xf32>
    %c2_104 = arith.constant 2 : index
    %c0_105 = arith.constant 0 : index
    %c0_106 = arith.constant 0 : index
    %226 = vector.load %arg8[%c2_104, %c0_105, %c0_106] : memref<4x6x1xf32, #tpu.memory_space<vmem>>, vector<1x6x1xf32>
    %227 = vector.shape_cast %226 : vector<1x6x1xf32> to vector<6x1xf32>
    %228 = vector.broadcast %227 : vector<6x1xf32> to vector<6x512xf32>
    %229 = arith.addf %225, %228 : vector<6x512xf32>
    %230 = vector.extract_strided_slice %229 {offsets = [0, 0], sizes = [3, 512], strides = [1, 1]} : vector<6x512xf32> to vector<3x512xf32>
    %cst_107 = arith.constant -1.000000e+01 : f32
    %cst_108 = arith.constant 1.000000e+01 : f32
    %231 = vector.broadcast %cst_107 : f32 to vector<3x512xf32>
    %232 = arith.maximumf %231, %230 : vector<3x512xf32>
    %233 = vector.broadcast %cst_108 : f32 to vector<3x512xf32>
    %234 = arith.minimumf %233, %232 : vector<3x512xf32>
    %cst_109 = arith.constant 0.000000e+00 : f32
    %235 = vector.broadcast %cst_109 : f32 to vector<3x512xf32>
    %236 = arith.addf %234, %235 : vector<3x512xf32>
    %237 = vector.extract_strided_slice %229 {offsets = [3, 0], sizes = [3, 512], strides = [1, 1]} : vector<6x512xf32> to vector<3x512xf32>
    %c2_110 = arith.constant 2 : index
    %c0_111 = arith.constant 0 : index
    %c0_112 = arith.constant 0 : index
    %238 = vector.load %arg3[%c2_110, %c0_111, %c0_112] : memref<4x3x1xf32, #tpu.memory_space<vmem>>, vector<1x3x1xf32>
    %239 = vector.shape_cast %238 : vector<1x3x1xf32> to vector<3x1xf32>
    %cst_113 = arith.constant 5.000000e-01 : f32
    %240 = vector.broadcast %cst_113 : f32 to vector<3x1xf32>
    %241 = arith.cmpf ogt, %239, %240 : vector<3x1xf32>
    %242 = arith.subf %166, %237 : vector<3x512xf32>
    %cst_114 = arith.constant 0.000000e+00 : f32
    %243 = vector.broadcast %cst_114 : f32 to vector<3x512xf32>
    %244 = arith.subf %243, %236 : vector<3x512xf32>
    %245 = math.exp %244 : vector<3x512xf32>
    %246 = arith.mulf %242, %245 : vector<3x512xf32>
    %247 = vector.shape_cast %241 : vector<3x1xi1> to vector<3x1xi1>
    %248 = vector.broadcast %247 : vector<3x1xi1> to vector<3x512xi1>
    %249 = arith.select %248, %166, %246 : vector<3x512xi1>, vector<3x512xf32>
    %c3 = arith.constant 3 : index
    %c0_115 = arith.constant 0 : index
    %c0_116 = arith.constant 0 : index
    %250 = vector.load %arg4[%c3, %c0_115, %c0_116] : memref<4x16x3xf32, #tpu.memory_space<vmem>>, vector<1x16x3xf32>
    %251 = vector.shape_cast %250 : vector<1x16x3xf32> to vector<16x3xf32>
    %cst_117 = arith.constant dense<0.000000e+00> : vector<16x512xf32>
    %252 = tpu.matmul %251, %249, %cst_117 {dimension_numbers = #tpu.dot_dimension_numbers<[1], [0], [0], [1], [0, 0, 1, 1], [], []>} : vector<16x3xf32>, vector<3x512xf32>, vector<16x512xf32> -> vector<16x512xf32>
    %c3_118 = arith.constant 3 : index
    %c0_119 = arith.constant 0 : index
    %c0_120 = arith.constant 0 : index
    %253 = vector.load %arg5[%c3_118, %c0_119, %c0_120] : memref<4x16x1xf32, #tpu.memory_space<vmem>>, vector<1x16x1xf32>
    %254 = vector.shape_cast %253 : vector<1x16x1xf32> to vector<16x1xf32>
    %255 = vector.broadcast %254 : vector<16x1xf32> to vector<16x512xf32>
    %256 = arith.addf %252, %255 : vector<16x512xf32>
    %cst_121 = arith.constant 0.000000e+00 : f32
    %257 = vector.broadcast %cst_121 : f32 to vector<16x512xf32>
    %258 = arith.maximumf %256, %257 : vector<16x512xf32>
    %c3_122 = arith.constant 3 : index
    %c0_123 = arith.constant 0 : index
    %c0_124 = arith.constant 0 : index
    %259 = vector.load %arg6[%c3_122, %c0_123, %c0_124] : memref<4x64x16xf32, #tpu.memory_space<vmem>>, vector<1x64x16xf32>
    %260 = vector.shape_cast %259 : vector<1x64x16xf32> to vector<64x16xf32>
    %cst_125 = arith.constant dense<0.000000e+00> : vector<64x512xf32>
    %261 = tpu.matmul %260, %258, %cst_125 {dimension_numbers = #tpu.dot_dimension_numbers<[1], [0], [0], [1], [0, 0, 1, 1], [], []>} : vector<64x16xf32>, vector<16x512xf32>, vector<64x512xf32> -> vector<64x512xf32>
    %262 = vector.extract_strided_slice %261 {offsets = [0, 0], sizes = [64, 256], strides = [1, 1]} : vector<64x512xf32> to vector<64x256xf32>
    %cst_126 = arith.constant dense<0.000000e+00> : vector<64xf32>
    %263 = vector.multi_reduction <add>, %262, %cst_126 [1] : vector<64x256xf32> to vector<64xf32>
    %264 = vector.shape_cast %263 : vector<64xf32> to vector<64x1xf32>
    %cst_127 = arith.constant 2.560000e+02 : f32
    %265 = vector.broadcast %cst_127 : f32 to vector<64x1xf32>
    %266 = arith.divf %264, %265 : vector<64x1xf32>
    %267 = arith.mulf %262, %262 : vector<64x256xf32>
    %cst_128 = arith.constant dense<0.000000e+00> : vector<64xf32>
    %268 = vector.multi_reduction <add>, %267, %cst_128 [1] : vector<64x256xf32> to vector<64xf32>
    %269 = vector.shape_cast %268 : vector<64xf32> to vector<64x1xf32>
    %cst_129 = arith.constant 2.560000e+02 : f32
    %270 = vector.broadcast %cst_129 : f32 to vector<64x1xf32>
    %271 = arith.divf %269, %270 : vector<64x1xf32>
    %272 = vector.broadcast %266 : vector<64x1xf32> to vector<64x256xf32>
    %273 = arith.subf %262, %272 : vector<64x256xf32>
    %274 = arith.mulf %266, %266 : vector<64x1xf32>
    %275 = arith.subf %271, %274 : vector<64x1xf32>
    %cst_130 = arith.constant 9.99999974E-6 : f32
    %276 = vector.broadcast %cst_130 : f32 to vector<64x1xf32>
    %277 = arith.addf %275, %276 : vector<64x1xf32>
    %278 = math.rsqrt %277 : vector<64x1xf32>
    %279 = vector.broadcast %278 : vector<64x1xf32> to vector<64x256xf32>
    %280 = arith.mulf %273, %279 : vector<64x256xf32>
    %281 = vector.extract_strided_slice %261 {offsets = [0, 256], sizes = [64, 256], strides = [1, 1]} : vector<64x512xf32> to vector<64x256xf32>
    %cst_131 = arith.constant dense<0.000000e+00> : vector<64xf32>
    %282 = vector.multi_reduction <add>, %281, %cst_131 [1] : vector<64x256xf32> to vector<64xf32>
    %283 = vector.shape_cast %282 : vector<64xf32> to vector<64x1xf32>
    %cst_132 = arith.constant 2.560000e+02 : f32
    %284 = vector.broadcast %cst_132 : f32 to vector<64x1xf32>
    %285 = arith.divf %283, %284 : vector<64x1xf32>
    %286 = arith.mulf %281, %281 : vector<64x256xf32>
    %cst_133 = arith.constant dense<0.000000e+00> : vector<64xf32>
    %287 = vector.multi_reduction <add>, %286, %cst_133 [1] : vector<64x256xf32> to vector<64xf32>
    %288 = vector.shape_cast %287 : vector<64xf32> to vector<64x1xf32>
    %cst_134 = arith.constant 2.560000e+02 : f32
    %289 = vector.broadcast %cst_134 : f32 to vector<64x1xf32>
    %290 = arith.divf %288, %289 : vector<64x1xf32>
    %291 = vector.broadcast %285 : vector<64x1xf32> to vector<64x256xf32>
    %292 = arith.subf %281, %291 : vector<64x256xf32>
    %293 = arith.mulf %285, %285 : vector<64x1xf32>
    %294 = arith.subf %290, %293 : vector<64x1xf32>
    %cst_135 = arith.constant 9.99999974E-6 : f32
    %295 = vector.broadcast %cst_135 : f32 to vector<64x1xf32>
    %296 = arith.addf %294, %295 : vector<64x1xf32>
    %297 = math.rsqrt %296 : vector<64x1xf32>
    %298 = vector.broadcast %297 : vector<64x1xf32> to vector<64x256xf32>
    %299 = arith.mulf %292, %298 : vector<64x256xf32>
    %300 = tpu.concatenate %280, %299 in 1 : vector<64x256xf32>, vector<64x256xf32> -> vector<64x512xf32>
    %cst_136 = arith.constant 0.000000e+00 : f32
    %301 = vector.broadcast %cst_136 : f32 to vector<64x512xf32>
    %302 = arith.cmpf oge, %300, %301 : vector<64x512xf32>
    %cst_137 = arith.constant 0.00999999977 : f32
    %303 = vector.broadcast %cst_137 : f32 to vector<64x512xf32>
    %304 = arith.mulf %303, %300 : vector<64x512xf32>
    %305 = arith.select %302, %300, %304 : vector<64x512xi1>, vector<64x512xf32>
    %c3_138 = arith.constant 3 : index
    %c0_139 = arith.constant 0 : index
    %c0_140 = arith.constant 0 : index
    %306 = vector.load %arg7[%c3_138, %c0_139, %c0_140] : memref<4x6x64xf32, #tpu.memory_space<vmem>>, vector<1x6x64xf32>
    %307 = vector.shape_cast %306 : vector<1x6x64xf32> to vector<6x64xf32>
    %cst_141 = arith.constant dense<0.000000e+00> : vector<6x512xf32>
    %308 = tpu.matmul %307, %305, %cst_141 {dimension_numbers = #tpu.dot_dimension_numbers<[1], [0], [0], [1], [0, 0, 1, 1], [], []>} : vector<6x64xf32>, vector<64x512xf32>, vector<6x512xf32> -> vector<6x512xf32>
    %c3_142 = arith.constant 3 : index
    %c0_143 = arith.constant 0 : index
    %c0_144 = arith.constant 0 : index
    %309 = vector.load %arg8[%c3_142, %c0_143, %c0_144] : memref<4x6x1xf32, #tpu.memory_space<vmem>>, vector<1x6x1xf32>
    %310 = vector.shape_cast %309 : vector<1x6x1xf32> to vector<6x1xf32>
    %311 = vector.broadcast %310 : vector<6x1xf32> to vector<6x512xf32>
    %312 = arith.addf %308, %311 : vector<6x512xf32>
    %313 = vector.extract_strided_slice %312 {offsets = [0, 0], sizes = [3, 512], strides = [1, 1]} : vector<6x512xf32> to vector<3x512xf32>
    %cst_145 = arith.constant -1.000000e+01 : f32
    %cst_146 = arith.constant 1.000000e+01 : f32
    %314 = vector.broadcast %cst_145 : f32 to vector<3x512xf32>
    %315 = arith.maximumf %314, %313 : vector<3x512xf32>
    %316 = vector.broadcast %cst_146 : f32 to vector<3x512xf32>
    %317 = arith.minimumf %316, %315 : vector<3x512xf32>
    %cst_147 = arith.constant 0.000000e+00 : f32
    %318 = vector.broadcast %cst_147 : f32 to vector<3x512xf32>
    %319 = arith.addf %317, %318 : vector<3x512xf32>
    %320 = vector.extract_strided_slice %312 {offsets = [3, 0], sizes = [3, 512], strides = [1, 1]} : vector<6x512xf32> to vector<3x512xf32>
    %c3_148 = arith.constant 3 : index
    %c0_149 = arith.constant 0 : index
    %c0_150 = arith.constant 0 : index
    %321 = vector.load %arg3[%c3_148, %c0_149, %c0_150] : memref<4x3x1xf32, #tpu.memory_space<vmem>>, vector<1x3x1xf32>
    %322 = vector.shape_cast %321 : vector<1x3x1xf32> to vector<3x1xf32>
    %cst_151 = arith.constant 5.000000e-01 : f32
    %323 = vector.broadcast %cst_151 : f32 to vector<3x1xf32>
    %324 = arith.cmpf ogt, %322, %323 : vector<3x1xf32>
    %325 = arith.subf %249, %320 : vector<3x512xf32>
    %cst_152 = arith.constant 0.000000e+00 : f32
    %326 = vector.broadcast %cst_152 : f32 to vector<3x512xf32>
    %327 = arith.subf %326, %319 : vector<3x512xf32>
    %328 = math.exp %327 : vector<3x512xf32>
    %329 = arith.mulf %325, %328 : vector<3x512xf32>
    %330 = vector.shape_cast %324 : vector<3x1xi1> to vector<3x1xi1>
    %331 = vector.broadcast %330 : vector<3x1xi1> to vector<3x512xi1>
    %332 = arith.select %331, %249, %329 : vector<3x512xi1>, vector<3x512xf32>
    %c0_153 = arith.constant 0 : index
    %c0_154 = arith.constant 0 : index
    %333 = vector.load %arg2[%c0_153, %c0_154] : memref<3x512xf32, #tpu.memory_space<vmem>>, vector<3x512xf32>
    %334 = arith.mulf %332, %333 : vector<3x512xf32>
    %c0_155 = arith.constant 0 : index
    %c0_156 = arith.constant 0 : index
    %335 = vector.load %arg9[%c0_155, %c0_156] : memref<3x512xf32, #tpu.memory_space<vmem>>, vector<3x512xf32>
    tpu.vector_store %arg9[%c0_155, %c0_156], %334 {strides = array<i32>} : memref<3x512xf32, #tpu.memory_space<vmem>>, vector<3x512xf32>,
    return
  }
  func.func @transform_0(%arg0: i32) -> (i32, i32) {
    %c0_i32 = arith.constant 0 : i32
    %c0_i32_0 = arith.constant 0 : i32
    return %c0_i32, %arg0 : i32, i32
  }
  func.func @transform_1(%arg0: i32) -> (i32, i32) {
    %c0_i32 = arith.constant 0 : i32
    %c0_i32_0 = arith.constant 0 : i32
    return %c0_i32, %arg0 : i32, i32
  }
  func.func @transform_2(%arg0: i32) -> (i32, i32, i32) {
    %c0_i32 = arith.constant 0 : i32
    %c0_i32_0 = arith.constant 0 : i32
    %c0_i32_1 = arith.constant 0 : i32
    %c0_i32_2 = arith.constant 0 : i32
    return %c0_i32, %c0_i32_0, %c0_i32_1 : i32, i32, i32
  }
  func.func @transform_3(%arg0: i32) -> (i32, i32, i32) {
    %c0_i32 = arith.constant 0 : i32
    %c0_i32_0 = arith.constant 0 : i32
    %c0_i32_1 = arith.constant 0 : i32
    %c0_i32_2 = arith.constant 0 : i32
    return %c0_i32, %c0_i32_0, %c0_i32_1 : i32, i32, i32
  }
  func.func @transform_4(%arg0: i32) -> (i32, i32, i32) {
    %c0_i32 = arith.constant 0 : i32
    %c0_i32_0 = arith.constant 0 : i32
    %c0_i32_1 = arith.constant 0 : i32
    %c0_i32_2 = arith.constant 0 : i32
    return %c0_i32, %c0_i32_0, %c0_i32_1 : i32, i32, i32
  }
  func.func @transform_5(%arg0: i32) -> (i32, i32, i32) {
    %c0_i32 = arith.constant 0 : i32
    %c0_i32_0 = arith.constant 0 : i32
    %c0_i32_1 = arith.constant 0 : i32
    %c0_i32_2 = arith.constant 0 : i32
    return %c0_i32, %c0_i32_0, %c0_i32_1 : i32, i32, i32
  }
  func.func @transform_6(%arg0: i32) -> (i32, i32, i32) {
    %c0_i32 = arith.constant 0 : i32
    %c0_i32_0 = arith.constant 0 : i32
    %c0_i32_1 = arith.constant 0 : i32
    %c0_i32_2 = arith.constant 0 : i32
    return %c0_i32, %c0_i32_0, %c0_i32_1 : i32, i32, i32
  }
  func.func @transform_7(%arg0: i32) -> (i32, i32, i32) {
    %c0_i32 = arith.constant 0 : i32
    %c0_i32_0 = arith.constant 0 : i32
    %c0_i32_1 = arith.constant 0 : i32
    %c0_i32_2 = arith.constant 0 : i32
    return %c0_i32, %c0_i32_0, %c0_i32_1 : i32, i32, i32
  }
  func.func @transform_8(%arg0: i32) -> (i32, i32) {
    %c0_i32 = arith.constant 0 : i32
    %c0_i32_0 = arith.constant 0 : i32
    return %c0_i32, %arg0 : i32, i32
  }
}

</mosaic_0001>

<llo_original>
// kernel: nvp_forward_pallas.1
$region0: #{nvp_forward_pallas.1}
  #allocation0 [shape = 'u32[]', space=smem, size = 0x4, offset = 0x4, fixed_abs, tag = 'smem constant byte address 0x4 - core index']
  #allocation1 [shape = 'u32[72,128]{1,0:T(1,128)}', space=vmem, size = 0x9000, scoped, tag = 'internal scratch']
  %s0 = inlined_call_operand.vmem [shape: f32[3,1024], index: 0, kind: input, shape index: {}]
  %s1 = inlined_call_operand.vmem [shape: f32[3,1024], index: 1, kind: input, shape index: {}]
  %s2 = inlined_call_operand.vmem [shape: f32[4,3,1], index: 2, kind: input, shape index: {}]
  %s3 = inlined_call_operand.vmem [shape: f32[4,16,3], index: 3, kind: input, shape index: {}]
  %s4 = inlined_call_operand.vmem [shape: f32[4,16,1], index: 4, kind: input, shape index: {}]
  %s5 = inlined_call_operand.vmem [shape: f32[4,64,16], index: 5, kind: input, shape index: {}]
  %s6 = inlined_call_operand.vmem [shape: f32[4,6,64], index: 6, kind: input, shape index: {}]
  %s7 = inlined_call_operand.vmem [shape: f32[4,6,1], index: 7, kind: input, shape index: {}]
  %s8 = inlined_call_operand.vmem [shape: f32[3,1024], index: 8, kind: output, shape index: {}]
  %s9 = sld [smem:[#allocation0]]
  $region65: #{nvp_forward_pallas.1} parent=0
    _
  %s11 = ssub.s32 1, %s9
  %s12 = scalar_select 0, %s11, %s9
  loop: start=0, step=1, limit=4
  $region2: #{nvp_forward_pallas.1} parent=0 // loop_pre_header
    _
  $region3: #{nvp_forward_pallas.1} parent=0 // loop_header
    %s14 = sphi 0, %s18
    %p15 = scmp.ge.s32.totalorder %s14, 4
    %s24 = sphi 0, %s26
    %s27 = sphi 0, %s24
    %s28 = sphi 0, %s27
    %s44 = sphi 0, %s28
    %s50 = sphi 0, %s52
    %s53 = sphi 0, %s50
    %s54 = sphi 0, %s53
    %s70 = sphi 0, %s54
    %s74 = sphi 0, %s74
    %s76 = sphi 0, %s74
    %s77 = sphi 0, %s76
    %s91 = sphi 0, %s77
    %s95 = sphi 0, %s95
    %s97 = sphi 0, %s95
    %s98 = sphi 0, %s97
    %s112 = sphi 0, %s98
    %s116 = sphi 0, %s116
    %s118 = sphi 0, %s116
    %s119 = sphi 0, %s118
    %s133 = sphi 0, %s119
    %s137 = sphi 0, %s137
    %s139 = sphi 0, %s137
    %s140 = sphi 0, %s139
    %s154 = sphi 0, %s140
    %s158 = sphi 0, %s158
    %s160 = sphi 0, %s158
    %s161 = sphi 0, %s160
    %s175 = sphi 0, %s161
    %s179 = sphi 0, %s179
    %s181 = sphi 0, %s179
    %s182 = sphi 0, %s181
    %s196 = sphi 0, %s182
    %s202 = sphi 0, %s204
    %s205 = sphi 0, %s202
    %s206 = sphi 0, %s205
    %s222 = sphi 0, %s206
  $region4: #{nvp_forward_pallas.1} parent=0 // loop_header_branch
    %17 = sbr.rel (%p15) target = $region8
  $region5: #{nvp_forward_pallas.1} parent=0 // loop_body
    %s19 = ssub.s32 %s14, 1
    %s20 = ssub.s32 %s14, 2
    %s21 = sadd.s32 %s14, 1
    %s22 = ssub.s32 %s14, %s21
    %p23 = scmp.eq.s32.totalorder %s22, 0
    %s25 = sadd.s32 %s24, 1
    %s26 = scalar_select %p23, %s24, %s25
    %p29 = pneg %p23
    %p30 = scmp.eq.s32.totalorder %s14, 1
    %p31 = por %p29, %p30
    %p32 = scmp.ne.s32.totalorder %s24, %s27
    %p33 = scmp.eq.s32.totalorder %s14, 0
    %p34 = por %p32, %p33
    %p35 = scmp.ne.s32.totalorder %s24, %s27
    %p36 = scmp.eq.s32.totalorder %s19, 1
    %p37 = por %p35, %p36
    %p38 = scmp.ne.s32.totalorder %s27, %s28
    %p39 = scmp.eq.s32.totalorder %s19, 0
    %p40 = por %p38, %p39
    %p41 = scmp.ne.s32.totalorder %s27, %s28
    %p42 = scmp.eq.s32.totalorder %s20, 1
    %p43 = por %p41, %p42
    %p45 = scmp.ne.s32.totalorder %s28, %s44
    %p46 = scmp.eq.s32.totalorder %s20, 0
    %p47 = por %p45, %p46
    %s48 = ssub.s32 %s14, %s21
    %p49 = scmp.eq.s32.totalorder %s48, 0
    %s51 = sadd.s32 %s50, 1
    %s52 = scalar_select %p49, %s50, %s51
    %p55 = pneg %p49
    %p56 = scmp.eq.s32.totalorder %s14, 1
    %p57 = por %p55, %p56
    %p58 = scmp.ne.s32.totalorder %s50, %s53
    %p59 = scmp.eq.s32.totalorder %s14, 0
    %p60 = por %p58, %p59
    %p61 = scmp.ne.s32.totalorder %s50, %s53
    %p62 = scmp.eq.s32.totalorder %s19, 1
    %p63 = por %p61, %p62
    %p64 = scmp.ne.s32.totalorder %s53, %s54
    %p65 = scmp.eq.s32.totalorder %s19, 0
    %p66 = por %p64, %p65
    %p67 = scmp.ne.s32.totalorder %s53, %s54
    %p68 = scmp.eq.s32.totalorder %s20, 1
    %p69 = por %p67, %p68
    %p71 = scmp.ne.s32.totalorder %s54, %s70
    %p72 = scmp.eq.s32.totalorder %s20, 0
    %p73 = por %p71, %p72
    %s75 = sadd.s32 %s74, 1
    %p78 = scmp.eq.s32.totalorder %s14, 1
    %p79 = scmp.ne.s32.totalorder %s74, %s76
    %p80 = scmp.eq.s32.totalorder %s14, 0
    %p81 = por %p79, %p80
    %p82 = scmp.ne.s32.totalorder %s74, %s76
    %p83 = scmp.eq.s32.totalorder %s19, 1
    %p84 = por %p82, %p83
    %p85 = scmp.ne.s32.totalorder %s76, %s77
    %p86 = scmp.eq.s32.totalorder %s19, 0
    %p87 = por %p85, %p86
    %p88 = scmp.ne.s32.totalorder %s76, %s77
    %p89 = scmp.eq.s32.totalorder %s20, 1
    %p90 = por %p88, %p89
    %p92 = scmp.ne.s32.totalorder %s77, %s91
    %p93 = scmp.eq.s32.totalorder %s20, 0
    %p94 = por %p92, %p93
    %s96 = sadd.s32 %s95, 1
    %p99 = scmp.eq.s32.totalorder %s14, 1
    %p100 = scmp.ne.s32.totalorder %s95, %s97
    %p101 = scmp.eq.s32.totalorder %s14, 0
    %p102 = por %p100, %p101
    %p103 = scmp.ne.s32.totalorder %s95, %s97
    %p104 = scmp.eq.s32.totalorder %s19, 1
    %p105 = por %p103, %p104
    %p106 = scmp.ne.s32.totalorder %s97, %s98
    %p107 = scmp.eq.s32.totalorder %s19, 0
    %p108 = por %p106, %p107
    %p109 = scmp.ne.s32.totalorder %s97, %s98
    %p110 = scmp.eq.s32.totalorder %s20, 1
    %p111 = por %p109, %p110
    %p113 = scmp.ne.s32.totalorder %s98, %s112
    %p114 = scmp.eq.s32.totalorder %s20, 0
    %p115 = por %p113, %p114
    %s117 = sadd.s32 %s116, 1
    %p120 = scmp.eq.s32.totalorder %s14, 1
    %p121 = scmp.ne.s32.totalorder %s116, %s118
    %p122 = scmp.eq.s32.totalorder %s14, 0
    %p123 = por %p121, %p122
    %p124 = scmp.ne.s32.totalorder %s116, %s118
    %p125 = scmp.eq.s32.totalorder %s19, 1
    %p126 = por %p124, %p125
    %p127 = scmp.ne.s32.totalorder %s118, %s119
    %p128 = scmp.eq.s32.totalorder %s19, 0
    %p129 = por %p127, %p128
    %p130 = scmp.ne.s32.totalorder %s118, %s119
    %p131 = scmp.eq.s32.totalorder %s20, 1
    %p132 = por %p130, %p131
    %p134 = scmp.ne.s32.totalorder %s119, %s133
    %p135 = scmp.eq.s32.totalorder %s20, 0
    %p136 = por %p134, %p135
    %s138 = sadd.s32 %s137, 1
    %p141 = scmp.eq.s32.totalorder %s14, 1
    %p142 = scmp.ne.s32.totalorder %s137, %s139
    %p143 = scmp.eq.s32.totalorder %s14, 0
    %p144 = por %p142, %p143
    %p145 = scmp.ne.s32.totalorder %s137, %s139
    %p146 = scmp.eq.s32.totalorder %s19, 1
    %p147 = por %p145, %p146
    %p148 = scmp.ne.s32.totalorder %s139, %s140
    %p149 = scmp.eq.s32.totalorder %s19, 0
    %p150 = por %p148, %p149
    %p151 = scmp.ne.s32.totalorder %s139, %s140
    %p152 = scmp.eq.s32.totalorder %s20, 1
    %p153 = por %p151, %p152
    %p155 = scmp.ne.s32.totalorder %s140, %s154
    %p156 = scmp.eq.s32.totalorder %s20, 0
    %p157 = por %p155, %p156
    %s159 = sadd.s32 %s158, 1
    %p162 = scmp.eq.s32.totalorder %s14, 1
    %p163 = scmp.ne.s32.totalorder %s158, %s160
    %p164 = scmp.eq.s32.totalorder %s14, 0
    %p165 = por %p163, %p164
    %p166 = scmp.ne.s32.totalorder %s158, %s160
    %p167 = scmp.eq.s32.totalorder %s19, 1
    %p168 = por %p166, %p167
    %p169 = scmp.ne.s32.totalorder %s160, %s161
    %p170 = scmp.eq.s32.totalorder %s19, 0
    %p171 = por %p169, %p170
    %p172 = scmp.ne.s32.totalorder %s160, %s161
    %p173 = scmp.eq.s32.totalorder %s20, 1
    %p174 = por %p172, %p173
    %p176 = scmp.ne.s32.totalorder %s161, %s175
    %p177 = scmp.eq.s32.totalorder %s20, 0
    %p178 = por %p176, %p177
    %s180 = sadd.s32 %s179, 1
    %p183 = scmp.eq.s32.totalorder %s14, 1
    %p184 = scmp.ne.s32.totalorder %s179, %s181
    %p185 = scmp.eq.s32.totalorder %s14, 0
    %p186 = por %p184, %p185
    %p187 = scmp.ne.s32.totalorder %s179, %s181
    %p188 = scmp.eq.s32.totalorder %s19, 1
    %p189 = por %p187, %p188
    %p190 = scmp.ne.s32.totalorder %s181, %s182
    %p191 = scmp.eq.s32.totalorder %s19, 0
    %p192 = por %p190, %p191
    %p193 = scmp.ne.s32.totalorder %s181, %s182
    %p194 = scmp.eq.s32.totalorder %s20, 1
    %p195 = por %p193, %p194
    %p197 = scmp.ne.s32.totalorder %s182, %s196
    %p198 = scmp.eq.s32.totalorder %s20, 0
    %p199 = por %p197, %p198
    %s200 = ssub.s32 %s14, %s21
    %p201 = scmp.eq.s32.totalorder %s200, 0
    %s203 = sadd.s32 %s202, 1
    %s204 = scalar_select %p201, %s202, %s203
    %p207 = pneg %p201
    %p208 = scmp.eq.s32.totalorder %s14, 1
    %p209 = por %p207, %p208
    %p210 = scmp.ne.s32.totalorder %s202, %s205
    %p211 = scmp.eq.s32.totalorder %s14, 0
    %p212 = por %p210, %p211
    %p213 = scmp.ne.s32.totalorder %s202, %s205
    %p214 = scmp.eq.s32.totalorder %s19, 1
    %p215 = por %p213, %p214
    %p216 = scmp.ne.s32.totalorder %s205, %s206
    %p217 = scmp.eq.s32.totalorder %s19, 0
    %p218 = por %p216, %p217
    %p219 = scmp.ne.s32.totalorder %s205, %s206
    %p220 = scmp.eq.s32.totalorder %s20, 1
    %p221 = por %p219, %p220
    %p223 = scmp.ne.s32.totalorder %s206, %s222
    %p224 = scmp.eq.s32.totalorder %s20, 0
    %p225 = por %p223, %p224
    %p226 = scmp.le.s32.totalorder 1, %s14
    %p227 = scmp.lt.s32.totalorder %s14, 3
    %p228 = pnand %p226, %p227
    %p229 = pneg %p228
    // Predicated region
    $region9: #{nvp_forward_pallas.1} parent=5 // pred_check
      _
    $region10: #{nvp_forward_pallas.1} parent=5 // pred_check_branch
      %231 = sbr.rel (%p228) target = $region12
    $region11: #{nvp_forward_pallas.1} parent=5 // pred_region
      %s232 = ssub.s32 %s14, 1
      // Predicated region
      $region13: #{nvp_forward_pallas.1} parent=11 // pred_check
        %p233 = pneg %p87
      $region14: #{nvp_forward_pallas.1} parent=11 // pred_check_branch
        %235 = sbr.rel (%p233) target = $region16
      $region15: #{nvp_forward_pallas.1} parent=11 // pred_region
        _
      $region16: #{nvp_forward_pallas.1} parent=11 // pred_fallthru
        _
      // Predicated region
      $region17: #{nvp_forward_pallas.1} parent=11 // pred_check
        %p236 = pneg %p108
      $region18: #{nvp_forward_pallas.1} parent=11 // pred_check_branch
        %238 = sbr.rel (%p236) target = $region20
      $region19: #{nvp_forward_pallas.1} parent=11 // pred_region
        _
      $region20: #{nvp_forward_pallas.1} parent=11 // pred_fallthru
        _
      // Predicated region
      $region21: #{nvp_forward_pallas.1} parent=11 // pred_check
        %p239 = pneg %p129
      $region22: #{nvp_forward_pallas.1} parent=11 // pred_check_branch
        %241 = sbr.rel (%p239) target = $region24
      $region23: #{nvp_forward_pallas.1} parent=11 // pred_region
        _
      $region24: #{nvp_forward_pallas.1} parent=11 // pred_fallthru
        _
      // Predicated region
      $region25: #{nvp_forward_pallas.1} parent=11 // pred_check
        %p242 = pneg %p150
      $region26: #{nvp_forward_pallas.1} parent=11 // pred_check_branch
        %244 = sbr.rel (%p242) target = $region28
      $region27: #{nvp_forward_pallas.1} parent=11 // pred_region
        _
      $region28: #{nvp_forward_pallas.1} parent=11 // pred_fallthru
        _
      // Predicated region
      $region29: #{nvp_forward_pallas.1} parent=11 // pred_check
        %p245 = pneg %p171
      $region30: #{nvp_forward_pallas.1} parent=11 // pred_check_branch
        %247 = sbr.rel (%p245) target = $region32
      $region31: #{nvp_forward_pallas.1} parent=11 // pred_region
        _
      $region32: #{nvp_forward_pallas.1} parent=11 // pred_fallthru
        _
      // Predicated region
      $region33: #{nvp_forward_pallas.1} parent=11 // pred_check
        %p248 = pneg %p192
      $region34: #{nvp_forward_pallas.1} parent=11 // pred_check_branch
        %250 = sbr.rel (%p248) target = $region36
      $region35: #{nvp_forward_pallas.1} parent=11 // pred_region
        _
      $region36: #{nvp_forward_pallas.1} parent=11 // pred_fallthru
        _
    $region12: #{nvp_forward_pallas.1} parent=5 // pred_fallthru
      _
    %p251 = scmp.lt.s32.totalorder %s14, 2
    // Predicated region
    $region37: #{nvp_forward_pallas.1} parent=5 // pred_check
      %p252 = pneg %p251
    $region38: #{nvp_forward_pallas.1} parent=5 // pred_check_branch
      %254 = sbr.rel (%p252) target = $region40
    $region39: #{nvp_forward_pallas.1} parent=5 // pred_region
      // Predicated region
      $region41: #{nvp_forward_pallas.1} parent=39 // pred_check
        %p255 = pneg %p34
      $region42: #{nvp_forward_pallas.1} parent=39 // pred_check_branch
        %257 = sbr.rel (%p255) target = $region44
      $region43: #{nvp_forward_pallas.1} parent=39 // pred_region
        %s258 = smul.u32 4, %s14
        %p259 = scmp.lt.s32.totalorder %s258, 7
        %s260 = scalar_select %p259, %s258, 7
        %s261 = smul.addr %s260, 4
        %s262 = scalar_lea.vmem %s0, %s261
        %s263 = smul.u32 4, %s14
      $region44: #{nvp_forward_pallas.1} parent=39 // pred_fallthru
        _
      // Predicated region
      $region45: #{nvp_forward_pallas.1} parent=39 // pred_check
        %p264 = pneg %p60
      $region46: #{nvp_forward_pallas.1} parent=39 // pred_check_branch
        %266 = sbr.rel (%p264) target = $region48
      $region47: #{nvp_forward_pallas.1} parent=39 // pred_region
        %s267 = smul.u32 4, %s14
        %p268 = scmp.lt.s32.totalorder %s267, 7
        %s269 = scalar_select %p268, %s267, 7
        %s270 = smul.addr %s269, 4
        %s271 = scalar_lea.vmem %s1, %s270
        %s272 = smul.u32 4, %s14
      $region48: #{nvp_forward_pallas.1} parent=39 // pred_fallthru
        _
    $region40: #{nvp_forward_pallas.1} parent=5 // pred_fallthru
      _
    %p273 = scmp.le.s32.totalorder 1, %s14
    %p274 = scmp.lt.s32.totalorder %s14, 3
    %p275 = pnand %p273, %p274
    %p276 = pneg %p275
    // Predicated region
    $region49: #{nvp_forward_pallas.1} parent=5 // pred_check
      _
    $region50: #{nvp_forward_pallas.1} parent=5 // pred_check_branch
      %278 = sbr.rel (%p275) target = $region52
    $region51: #{nvp_forward_pallas.1} parent=5 // pred_region
      %s279 = ssub.s32 %s14, 1
      %s280 = smul.u32 4, %s19
      %p281 = scmp.lt.s32.totalorder %s280, 7
      %s282 = scalar_select %p281, %s280, 7
      %s283 = smul.addr %s282, 4
      %s284 = scalar_lea.vmem %s0, %s283
      %p285 = pneg %p40
      %p286 = pneg %p37
      %s287 = smul.u32 4, %s19
      %p288 = scmp.lt.s32.totalorder %s287, 7
      %s289 = scalar_select %p288, %s287, 7
      %s290 = smul.addr %s289, 4
      %s291 = scalar_lea.vmem %s1, %s290
      %p292 = pneg %p66
      %p293 = pneg %p63
      %p294 = pneg %p87
      %p295 = pneg %p84
      %p296 = pneg %p108
      %p297 = pneg %p105
      %p298 = pneg %p129
      %p299 = pneg %p126
      %p300 = pneg %p150
      %p301 = pneg %p147
      %p302 = pneg %p171
      %p303 = pneg %p168
      %p304 = pneg %p192
      %p305 = pneg %p189
      %p306 = pneg %p218
      %p307 = pneg %p215
      %s308 = smul.u32 4, %s19
      %p309 = scmp.lt.s32.totalorder %s308, 7
      %s310 = scalar_select %p309, %s308, 7
      %s311 = smul.addr %s310, 4
      %s312 = scalar_lea.vmem %s8, %s311
      %s313 = smul.u32 4, %s19
      %p314 = scmp.lt.s32.totalorder %s313, 7
      %s315 = scalar_select %p314, %s313, 7
      %s316 = smul.addr %s315, 4
      %s317 = scalar_lea.vmem %s0, %s316
      %s318 = smul.u32 4, %s19
      %s319 = smul.u32 4, %s19
      %p320 = scmp.lt.s32.totalorder %s319, 7
      %s321 = scalar_select %p320, %s319, 7
      %s322 = smul.addr %s321, 4
      %s323 = scalar_lea.vmem %s1, %s322
      %s324 = smul.u32 4, %s19
      %s325 = smul.u32 4, %s19
      %p326 = scmp.lt.s32.totalorder %s325, 7
      %s327 = scalar_select %p326, %s325, 7
      %s328 = smul.addr %s327, 4
      %s329 = scalar_lea.vmem %s8, %s328
      %s330 = smul.u32 4, %s19
      %v331 = vld [vmem:[%s317] sm:$0x77]
      %v332 = vld [vmem:[%s317 + $0x8] sm:$0x77]
      %v333 = vld [vmem:[%s3] sm:$0xff]
      %v334 = vld [vmem:[%s3 + $0x8] sm:$0xff]
      %v335 = vld [vmem:[%s4] sm:$0xff]
      %v336 = vld [vmem:[%s4 + $0x8] sm:$0xff]
      %338 = vset.pattern.permute.xlu0 0
      %339 = vperm.xlu0 %338, %v335
      %v340 = vpop.permute.xlu0 %339
      %343 = vset.pattern.permute.xlu0 0
      %344 = vperm.xlu0 %343, %v336
      %v345 = vpop.permute.xlu0 %344
      %349 = vst [vmem:[#allocation1] ss:$2 sm:$0xff] %v331
      %s350 = scalar_lea.vmem [#allocation1], 16
      %351 = vst [vmem:[%s350] ss:$2 sm:$0xff] %v332
      %v352 = vld.sshfl [vmem:[#allocation1] sm:$0xff pattern:$0x75316420]
      %v353 = vld.sshfl [vmem:[#allocation1 + $0x8] sm:$0xff pattern:$0x75316420]
      %v354 = vld.sshfl [vmem:[#allocation1 + $0x10] sm:$0xff pattern:$0x75316420]
      %v355 = vld.sshfl [vmem:[#allocation1 + $0x18] sm:$0xff pattern:$0x75316420]
      %vm356 = vcmask 23552
      %v358 = vsel %vm356, %v333, 0
      %v361 = vsel %vm356, %v334, 0
      %vm363 = vcmask 1042432
      %v364 = vsel %vm363, %v352, 0
      %v366 = vsel %vm363, %v353, 0
      %v368 = vsel %vm363, %v354, 0
      %v370 = vsel %vm363, %v355, 0
      %372 = vmatpush.msra.mxu0 0.0
      %373 = vmatpush.msra.mxu0 0.0
      %374 = vmatpush.msra.mxu0 0.0
      %375 = vmatpush.msra.mxu0 0.0
      %376 = vmatpush.msra.mxu0 0.0
      %377 = vmatpush.msra.mxu0 0.0
      %378 = vmatpush.msra.mxu0 0.0
      %379 = vmatpush.msra.mxu0 0.0
      %380 = vmatpush.msra.mxu0 0.0
      %381 = vmatpush.msra.mxu0 0.0
      %382 = vmatpush.msra.mxu0 0.0
      %383 = vmatpush.msra.mxu0 0.0
      %384 = vmatpush.msra.mxu0 0.0
      %385 = vmatpush.msra.mxu0 0.0
      %386 = vmatpush.msra.mxu0 0.0
      %387 = vmatpush.msra.mxu0 %v364
      %388 = vmatmul.f32.gmra.mxu0 %v358
      %v389 = vpop.f32.mrf.mxu0
      %v390 = vadd.f32 %v340, %v389
      %391 = vmatmul.f32.gmra.mxu0 %v361
      %v392 = vpop.f32.mrf.mxu0
      %v393 = vadd.f32 %v345, %v392
      %394 = vdwg.mxu0
      %395 = vmatpush.msra.mxu0 0.0
      %396 = vmatpush.msra.mxu0 0.0
      %397 = vmatpush.msra.mxu0 0.0
      %398 = vmatpush.msra.mxu0 0.0
      %399 = vmatpush.msra.mxu0 0.0
      %400 = vmatpush.msra.mxu0 0.0
      %401 = vmatpush.msra.mxu0 0.0
      %402 = vmatpush.msra.mxu0 0.0
      %403 = vmatpush.msra.mxu0 0.0
      %404 = vmatpush.msra.mxu0 0.0
      %405 = vmatpush.msra.mxu0 0.0
      %406 = vmatpush.msra.mxu0 0.0
      %407 = vmatpush.msra.mxu0 0.0
      %408 = vmatpush.msra.mxu0 0.0
      %409 = vmatpush.msra.mxu0 0.0
      %410 = vmatpush.msra.mxu0 %v366
      %411 = vmatmul.f32.gmra.mxu0 %v358
      %v412 = vpop.f32.mrf.mxu0
      %v413 = vadd.f32 %v340, %v412
      %414 = vmatmul.f32.gmra.mxu0 %v361
      %v415 = vpop.f32.mrf.mxu0
      %v416 = vadd.f32 %v345, %v415
      %417 = vdwg.mxu0
      %418 = vmatpush.msra.mxu0 0.0
      %419 = vmatpush.msra.mxu0 0.0
      %420 = vmatpush.msra.mxu0 0.0
      %421 = vmatpush.msra.mxu0 0.0
      %422 = vmatpush.msra.mxu0 0.0
      %423 = vmatpush.msra.mxu0 0.0
      %424 = vmatpush.msra.mxu0 0.0
      %425 = vmatpush.msra.mxu0 0.0
      %426 = vmatpush.msra.mxu0 0.0
      %427 = vmatpush.msra.mxu0 0.0
      %428 = vmatpush.msra.mxu0 0.0
      %429 = vmatpush.msra.mxu0 0.0
      %430 = vmatpush.msra.mxu0 0.0
      %431 = vmatpush.msra.mxu0 0.0
      %432 = vmatpush.msra.mxu0 0.0
      %433 = vmatpush.msra.mxu0 %v368
      %434 = vmatmul.f32.gmra.mxu0 %v358
      %v435 = vpop.f32.mrf.mxu0
      %v436 = vadd.f32 %v340, %v435
      %437 = vmatmul.f32.gmra.mxu0 %v361
      %v438 = vpop.f32.mrf.mxu0
      %v439 = vadd.f32 %v345, %v438
      %440 = vdwg.mxu0
      %441 = vmatpush.msra.mxu0 0.0
      %442 = vmatpush.msra.mxu0 0.0
      %443 = vmatpush.msra.mxu0 0.0
      %444 = vmatpush.msra.mxu0 0.0
      %445 = vmatpush.msra.mxu0 0.0
      %446 = vmatpush.msra.mxu0 0.0
      %447 = vmatpush.msra.mxu0 0.0
      %448 = vmatpush.msra.mxu0 0.0
      %449 = vmatpush.msra.mxu0 0.0
      %450 = vmatpush.msra.mxu0 0.0
      %451 = vmatpush.msra.mxu0 0.0
      %452 = vmatpush.msra.mxu0 0.0
      %453 = vmatpush.msra.mxu0 0.0
      %454 = vmatpush.msra.mxu0 0.0
      %455 = vmatpush.msra.mxu0 0.0
      %456 = vmatpush.msra.mxu0 %v370
      %457 = vmatmul.f32.gmra.mxu0 %v358
      %v458 = vpop.f32.mrf.mxu0
      %v459 = vadd.f32 %v340, %v458
      %460 = vmatmul.f32.gmra.mxu0 %v361
      %v461 = vpop.f32.mrf.mxu0
      %v462 = vadd.f32 %v345, %v461
      %463 = vdwg.mxu0
      %v464 = vmax.f32 %v390, 0.0
      %v465 = vmax.f32 %v413, 0.0
      %v466 = vmax.f32 %v436, 0.0
      %v467 = vmax.f32 %v459, 0.0
      %v468 = vmax.f32 %v393, 0.0
      %v469 = vmax.f32 %v416, 0.0
      %v470 = vmax.f32 %v439, 0.0
      %v471 = vmax.f32 %v462, 0.0
      %v472 = vld [vmem:[%s5] sm:$0xff]
      %v473 = vld [vmem:[%s5 + $0x8] sm:$0xff]
      %v474 = vld [vmem:[%s5 + $0x10] sm:$0xff]
      %v475 = vld [vmem:[%s5 + $0x18] sm:$0xff]
      %v476 = vld [vmem:[%s5 + $0x20] sm:$0xff]
      %v477 = vld [vmem:[%s5 + $0x28] sm:$0xff]
      %v478 = vld [vmem:[%s5 + $0x30] sm:$0xff]
      %v479 = vld [vmem:[%s5 + $0x38] sm:$0xff]
      %vm480 = vcmask 130048
      %v482 = vsel %vm480, %v472, 0
      %v485 = vsel %vm480, %v473, 0
      %v488 = vsel %vm480, %v474, 0
      %v491 = vsel %vm480, %v475, 0
      %v494 = vsel %vm480, %v476, 0
      %v497 = vsel %vm480, %v477, 0
      %v500 = vsel %vm480, %v478, 0
      %v503 = vsel %vm480, %v479, 0
      %505 = vmatpush.msra.mxu0 0.0
      %506 = vmatpush.msra.mxu0 0.0
      %507 = vmatpush.msra.mxu0 0.0
      %508 = vmatpush.msra.mxu0 0.0
      %509 = vmatpush.msra.mxu0 0.0
      %510 = vmatpush.msra.mxu0 0.0
      %511 = vmatpush.msra.mxu0 0.0
      %512 = vmatpush.msra.mxu0 0.0
      %513 = vmatpush.msra.mxu0 0.0
      %514 = vmatpush.msra.mxu0 0.0
      %515 = vmatpush.msra.mxu0 0.0
      %516 = vmatpush.msra.mxu0 0.0
      %517 = vmatpush.msra.mxu0 0.0
      %518 = vmatpush.msra.mxu0 0.0
      %519 = vmatpush.msra.mxu0 %v468
      %520 = vmatpush.msra.mxu0 %v464
      %521 = vmatmul.f32.gmra.mxu0 %v482
      %v522 = vpop.f32.mrf.mxu0
      %v523 = vadd.f32 0.0, %v522
      %524 = vmatmul.f32.gmra.mxu0 %v485
      %v525 = vpop.f32.mrf.mxu0
      %v526 = vadd.f32 0.0, %v525
      %527 = vmatmul.f32.gmra.mxu0 %v488
      %v528 = vpop.f32.mrf.mxu0
      %v529 = vadd.f32 0.0, %v528
      %530 = vmatmul.f32.gmra.mxu0 %v491
      %v531 = vpop.f32.mrf.mxu0
      %v532 = vadd.f32 0.0, %v531
      %533 = vmatmul.f32.gmra.mxu0 %v494
      %v534 = vpop.f32.mrf.mxu0
      %v535 = vadd.f32 0.0, %v534
      %536 = vmatmul.f32.gmra.mxu0 %v497
      %v537 = vpop.f32.mrf.mxu0
      %v538 = vadd.f32 0.0, %v537
      %539 = vmatmul.f32.gmra.mxu0 %v500
      %v540 = vpop.f32.mrf.mxu0
      %v541 = vadd.f32 0.0, %v540
      %542 = vmatmul.f32.gmra.mxu0 %v503
      %v543 = vpop.f32.mrf.mxu0
      %v544 = vadd.f32 0.0, %v543
      %545 = vdwg.mxu0
      %546 = vmatpush.msra.mxu0 0.0
      %547 = vmatpush.msra.mxu0 0.0
      %548 = vmatpush.msra.mxu0 0.0
      %549 = vmatpush.msra.mxu0 0.0
      %550 = vmatpush.msra.mxu0 0.0
      %551 = vmatpush.msra.mxu0 0.0
      %552 = vmatpush.msra.mxu0 0.0
      %553 = vmatpush.msra.mxu0 0.0
      %554 = vmatpush.msra.mxu0 0.0
      %555 = vmatpush.msra.mxu0 0.0
      %556 = vmatpush.msra.mxu0 0.0
      %557 = vmatpush.msra.mxu0 0.0
      %558 = vmatpush.msra.mxu0 0.0
      %559 = vmatpush.msra.mxu0 0.0
      %560 = vmatpush.msra.mxu0 %v469
      %561 = vmatpush.msra.mxu0 %v465
      %562 = vmatmul.f32.gmra.mxu0 %v482
      %v563 = vpop.f32.mrf.mxu0
      %v564 = vadd.f32 0.0, %v563
      %565 = vmatmul.f32.gmra.mxu0 %v485
      %v566 = vpop.f32.mrf.mxu0
      %v567 = vadd.f32 0.0, %v566
      %568 = vmatmul.f32.gmra.mxu0 %v488
      %v569 = vpop.f32.mrf.mxu0
      %v570 = vadd.f32 0.0, %v569
      %571 = vmatmul.f32.gmra.mxu0 %v491
      %v572 = vpop.f32.mrf.mxu0
      %v573 = vadd.f32 0.0, %v572
      %574 = vmatmul.f32.gmra.mxu0 %v494
      %v575 = vpop.f32.mrf.mxu0
      %v576 = vadd.f32 0.0, %v575
      %577 = vmatmul.f32.gmra.mxu0 %v497
      %v578 = vpop.f32.mrf.mxu0
      %v579 = vadd.f32 0.0, %v578
      %580 = vmatmul.f32.gmra.mxu0 %v500
      %v581 = vpop.f32.mrf.mxu0
      %v582 = vadd.f32 0.0, %v581
      %583 = vmatmul.f32.gmra.mxu0 %v503
      %v584 = vpop.f32.mrf.mxu0
      %v585 = vadd.f32 0.0, %v584
      %586 = vdwg.mxu0
      %587 = vmatpush.msra.mxu0 0.0
      %588 = vmatpush.msra.mxu0 0.0
      %589 = vmatpush.msra.mxu0 0.0
      %590 = vmatpush.msra.mxu0 0.0
      %591 = vmatpush.msra.mxu0 0.0
      %592 = vmatpush.msra.mxu0 0.0
      %593 = vmatpush.msra.mxu0 0.0
      %594 = vmatpush.msra.mxu0 0.0
      %595 = vmatpush.msra.mxu0 0.0
      %596 = vmatpush.msra.mxu0 0.0
      %597 = vmatpush.msra.mxu0 0.0
      %598 = vmatpush.msra.mxu0 0.0
      %599 = vmatpush.msra.mxu0 0.0
      %600 = vmatpush.msra.mxu0 0.0
      %601 = vmatpush.msra.mxu0 %v470
      %602 = vmatpush.msra.mxu0 %v466
      %603 = vmatmul.f32.gmra.mxu0 %v482
      %v604 = vpop.f32.mrf.mxu0
      %v605 = vadd.f32 0.0, %v604
      %606 = vmatmul.f32.gmra.mxu0 %v485
      %v607 = vpop.f32.mrf.mxu0
      %v608 = vadd.f32 0.0, %v607
      %609 = vmatmul.f32.gmra.mxu0 %v488
      %v610 = vpop.f32.mrf.mxu0
      %v611 = vadd.f32 0.0, %v610
      %612 = vmatmul.f32.gmra.mxu0 %v491
      %v613 = vpop.f32.mrf.mxu0
      %v614 = vadd.f32 0.0, %v613
      %615 = vmatmul.f32.gmra.mxu0 %v494
      %v616 = vpop.f32.mrf.mxu0
      %v617 = vadd.f32 0.0, %v616
      %618 = vmatmul.f32.gmra.mxu0 %v497
      %v619 = vpop.f32.mrf.mxu0
      %v620 = vadd.f32 0.0, %v619
      %621 = vmatmul.f32.gmra.mxu0 %v500
      %v622 = vpop.f32.mrf.mxu0
      %v623 = vadd.f32 0.0, %v622
      %624 = vmatmul.f32.gmra.mxu0 %v503
      %v625 = vpop.f32.mrf.mxu0
      %v626 = vadd.f32 0.0, %v625
      %627 = vdwg.mxu0
      %628 = vmatpush.msra.mxu0 0.0
      %629 = vmatpush.msra.mxu0 0.0
      %630 = vmatpush.msra.mxu0 0.0
      %631 = vmatpush.msra.mxu0 0.0
      %632 = vmatpush.msra.mxu0 0.0
      %633 = vmatpush.msra.mxu0 0.0
      %634 = vmatpush.msra.mxu0 0.0
      %635 = vmatpush.msra.mxu0 0.0
      %636 = vmatpush.msra.mxu0 0.0
      %637 = vmatpush.msra.mxu0 0.0
      %638 = vmatpush.msra.mxu0 0.0
      %639 = vmatpush.msra.mxu0 0.0
      %640 = vmatpush.msra.mxu0 0.0
      %641 = vmatpush.msra.mxu0 0.0
      %642 = vmatpush.msra.mxu0 %v471
      %643 = vmatpush.msra.mxu0 %v467
      %644 = vmatmul.f32.gmra.mxu0 %v482
      %v645 = vpop.f32.mrf.mxu0
      %v646 = vadd.f32 0.0, %v645
      %647 = vmatmul.f32.gmra.mxu0 %v485
      %v648 = vpop.f32.mrf.mxu0
      %v649 = vadd.f32 0.0, %v648
      %650 = vmatmul.f32.gmra.mxu0 %v488
      %v651 = vpop.f32.mrf.mxu0
      %v652 = vadd.f32 0.0, %v651
      %653 = vmatmul.f32.gmra.mxu0 %v491
      %v654 = vpop.f32.mrf.mxu0
      %v655 = vadd.f32 0.0, %v654
      %656 = vmatmul.f32.gmra.mxu0 %v494
      %v657 = vpop.f32.mrf.mxu0
      %v658 = vadd.f32 0.0, %v657
      %659 = vmatmul.f32.gmra.mxu0 %v497
      %v660 = vpop.f32.mrf.mxu0
      %v661 = vadd.f32 0.0, %v660
      %662 = vmatmul.f32.gmra.mxu0 %v500
      %v663 = vpop.f32.mrf.mxu0
      %v664 = vadd.f32 0.0, %v663
      %665 = vmatmul.f32.gmra.mxu0 %v503
      %v666 = vpop.f32.mrf.mxu0
      %v667 = vadd.f32 0.0, %v666
      %668 = vdwg.mxu0
      %v669 = vadd.f32 %v523, %v564
      %670 = vadd.xlane.f32.xlu0 %v669
      %v671 = vpop.xlane.xlu0 %670
      %v672 = vadd.f32 %v526, %v567
      %673 = vadd.xlane.f32.xlu0 %v672
      %v674 = vpop.xlane.xlu0 %673
      %v675 = vadd.f32 %v529, %v570
      %676 = vadd.xlane.f32.xlu0 %v675
      %v677 = vpop.xlane.xlu0 %676
      %v678 = vadd.f32 %v532, %v573
      %679 = vadd.xlane.f32.xlu0 %v678
      %v680 = vpop.xlane.xlu0 %679
      %v681 = vadd.f32 %v535, %v576
      %682 = vadd.xlane.f32.xlu0 %v681
      %v683 = vpop.xlane.xlu0 %682
      %v684 = vadd.f32 %v538, %v579
      %685 = vadd.xlane.f32.xlu0 %v684
      %v686 = vpop.xlane.xlu0 %685
      %v687 = vadd.f32 %v541, %v582
      %688 = vadd.xlane.f32.xlu0 %v687
      %v689 = vpop.xlane.xlu0 %688
      %v690 = vadd.f32 %v544, %v585
      %691 = vadd.xlane.f32.xlu0 %v690
      %v692 = vpop.xlane.xlu0 %691
      %v693 = vrcp.pop 256.0
      %v694 = vmul.f32 256.0, %v693
      %v695 = vsub.f32 1.0, %v694
      %v696 = vmul.f32 %v693, %v695
      %v697 = vadd.f32 %v693, %v696
      %vm698 = vweird.f32 %v693
      %v699 = vsel %vm698, %v693, %v697
      %v700 = vmul.f32 %v671, %v699
      %v701 = vmul.f32 %v674, %v699
      %v702 = vmul.f32 %v677, %v699
      %v703 = vmul.f32 %v680, %v699
      %v704 = vmul.f32 %v683, %v699
      %v705 = vmul.f32 %v686, %v699
      %v706 = vmul.f32 %v689, %v699
      %v707 = vmul.f32 %v692, %v699
      %v708 = vmul.f32 %v523, %v523
      %v709 = vmul.f32 %v564, %v564
      %v710 = vmul.f32 %v526, %v526
      %v711 = vmul.f32 %v567, %v567
      %v712 = vmul.f32 %v529, %v529
      %v713 = vmul.f32 %v570, %v570
      %v714 = vmul.f32 %v532, %v532
      %v715 = vmul.f32 %v573, %v573
      %v716 = vmul.f32 %v535, %v535
      %v717 = vmul.f32 %v576, %v576
      %v718 = vmul.f32 %v538, %v538
      %v719 = vmul.f32 %v579, %v579
      %v720 = vmul.f32 %v541, %v541
      %v721 = vmul.f32 %v582, %v582
      %v722 = vmul.f32 %v544, %v544
      %v723 = vmul.f32 %v585, %v585
      %v724 = vadd.f32 %v708, %v709
      %725 = vadd.xlane.f32.xlu0 %v724
      %v726 = vpop.xlane.xlu0 %725
      %v727 = vadd.f32 %v710, %v711
      %728 = vadd.xlane.f32.xlu0 %v727
      %v729 = vpop.xlane.xlu0 %728
      %v730 = vadd.f32 %v712, %v713
      %731 = vadd.xlane.f32.xlu0 %v730
      %v732 = vpop.xlane.xlu0 %731
      %v733 = vadd.f32 %v714, %v715
      %734 = vadd.xlane.f32.xlu0 %v733
      %v735 = vpop.xlane.xlu0 %734
      %v736 = vadd.f32 %v716, %v717
      %737 = vadd.xlane.f32.xlu0 %v736
      %v738 = vpop.xlane.xlu0 %737
      %v739 = vadd.f32 %v718, %v719
      %740 = vadd.xlane.f32.xlu0 %v739
      %v741 = vpop.xlane.xlu0 %740
      %v742 = vadd.f32 %v720, %v721
      %743 = vadd.xlane.f32.xlu0 %v742
      %v744 = vpop.xlane.xlu0 %743
      %v745 = vadd.f32 %v722, %v723
      %746 = vadd.xlane.f32.xlu0 %v745
      %v747 = vpop.xlane.xlu0 %746
      %v748 = vmul.f32 %v726, %v699
      %v749 = vmul.f32 %v729, %v699
      %v750 = vmul.f32 %v732, %v699
      %v751 = vmul.f32 %v735, %v699
      %v752 = vmul.f32 %v738, %v699
      %v753 = vmul.f32 %v741, %v699
      %v754 = vmul.f32 %v744, %v699
      %v755 = vmul.f32 %v747, %v699
      %v756 = vsub.f32 %v523, %v700
      %v757 = vsub.f32 %v564, %v700
      %v758 = vsub.f32 %v526, %v701
      %v759 = vsub.f32 %v567, %v701
      %v760 = vsub.f32 %v529, %v702
      %v761 = vsub.f32 %v570, %v702
      %v762 = vsub.f32 %v532, %v703
      %v763 = vsub.f32 %v573, %v703
      %v764 = vsub.f32 %v535, %v704
      %v765 = vsub.f32 %v576, %v704
      %v766 = vsub.f32 %v538, %v705
      %v767 = vsub.f32 %v579, %v705
      %v768 = vsub.f32 %v541, %v706
      %v769 = vsub.f32 %v582, %v706
      %v770 = vsub.f32 %v544, %v707
      %v771 = vsub.f32 %v585, %v707
      %v772 = vmul.f32 %v700, %v700
      %v773 = vmul.f32 %v701, %v701
      %v774 = vmul.f32 %v702, %v702
      %v775 = vmul.f32 %v703, %v703
      %v776 = vmul.f32 %v704, %v704
      %v777 = vmul.f32 %v705, %v705
      %v778 = vmul.f32 %v706, %v706
      %v779 = vmul.f32 %v707, %v707
      %v780 = vsub.f32 %v748, %v772
      %v781 = vsub.f32 %v749, %v773
      %v782 = vsub.f32 %v750, %v774
      %v783 = vsub.f32 %v751, %v775
      %v784 = vsub.f32 %v752, %v776
      %v785 = vsub.f32 %v753, %v777
      %v786 = vsub.f32 %v754, %v778
      %v787 = vsub.f32 %v755, %v779
      %v788 = vadd.f32 %v780, 1e-05
      %v789 = vadd.f32 %v781, 1e-05
      %v790 = vadd.f32 %v782, 1e-05
      %v791 = vadd.f32 %v783, 1e-05
      %v792 = vadd.f32 %v784, 1e-05
      %v793 = vadd.f32 %v785, 1e-05
      %v794 = vadd.f32 %v786, 1e-05
      %v795 = vadd.f32 %v787, 1e-05
      %v796 = vrsqrt.pop %v788
      %v797 = vmul.f32 %v796, %v788
      %v798 = vmul.f32 %v797, %v796
      %v799 = vmul.f32 0.5, %v798
      %v800 = vsub.f32 1.5, %v799
      %v801 = vmul.f32 %v796, %v800
      %vm802 = vweird.f32 %v788
      %vm803 = vweird.f32 %v796
      %vm804 = vmor %vm802, %vm803
      %v805 = vsel %vm804, %v796, %v801
      %v806 = vrsqrt.pop %v789
      %v807 = vmul.f32 %v806, %v789
      %v808 = vmul.f32 %v807, %v806
      %v809 = vmul.f32 0.5, %v808
      %v810 = vsub.f32 1.5, %v809
      %v811 = vmul.f32 %v806, %v810
      %vm812 = vweird.f32 %v789
      %vm813 = vweird.f32 %v806
      %vm814 = vmor %vm812, %vm813
      %v815 = vsel %vm814, %v806, %v811
      %v816 = vrsqrt.pop %v790
      %v817 = vmul.f32 %v816, %v790
      %v818 = vmul.f32 %v817, %v816
      %v819 = vmul.f32 0.5, %v818
      %v820 = vsub.f32 1.5, %v819
      %v821 = vmul.f32 %v816, %v820
      %vm822 = vweird.f32 %v790
      %vm823 = vweird.f32 %v816
      %vm824 = vmor %vm822, %vm823
      %v825 = vsel %vm824, %v816, %v821
      %v826 = vrsqrt.pop %v791
      %v827 = vmul.f32 %v826, %v791
      %v828 = vmul.f32 %v827, %v826
      %v829 = vmul.f32 0.5, %v828
      %v830 = vsub.f32 1.5, %v829
      %v831 = vmul.f32 %v826, %v830
      %vm832 = vweird.f32 %v791
      %vm833 = vweird.f32 %v826
      %vm834 = vmor %vm832, %vm833
      %v835 = vsel %vm834, %v826, %v831
      %v836 = vrsqrt.pop %v792
      %v837 = vmul.f32 %v836, %v792
      %v838 = vmul.f32 %v837, %v836
      %v839 = vmul.f32 0.5, %v838
      %v840 = vsub.f32 1.5, %v839
      %v841 = vmul.f32 %v836, %v840
      %vm842 = vweird.f32 %v792
      %vm843 = vweird.f32 %v836
      %vm844 = vmor %vm842, %vm843
      %v845 = vsel %vm844, %v836, %v841
      %v846 = vrsqrt.pop %v793
      %v847 = vmul.f32 %v846, %v793
      %v848 = vmul.f32 %v847, %v846
      %v849 = vmul.f32 0.5, %v848
      %v850 = vsub.f32 1.5, %v849
      %v851 = vmul.f32 %v846, %v850
      %vm852 = vweird.f32 %v793
      %vm853 = vweird.f32 %v846
      %vm854 = vmor %vm852, %vm853
      %v855 = vsel %vm854, %v846, %v851
      %v856 = vrsqrt.pop %v794
      %v857 = vmul.f32 %v856, %v794
      %v858 = vmul.f32 %v857, %v856
      %v859 = vmul.f32 0.5, %v858
      %v860 = vsub.f32 1.5, %v859
      %v861 = vmul.f32 %v856, %v860
      %vm862 = vweird.f32 %v794
      %vm863 = vweird.f32 %v856
      %vm864 = vmor %vm862, %vm863
      %v865 = vsel %vm864, %v856, %v861
      %v866 = vrsqrt.pop %v795
      %v867 = vmul.f32 %v866, %v795
      %v868 = vmul.f32 %v867, %v866
      %v869 = vmul.f32 0.5, %v868
      %v870 = vsub.f32 1.5, %v869
      %v871 = vmul.f32 %v866, %v870
      %vm872 = vweird.f32 %v795
      %vm873 = vweird.f32 %v866
      %vm874 = vmor %vm872, %vm873
      %v875 = vsel %vm874, %v866, %v871
      %v876 = vmul.f32 %v756, %v805
      %v877 = vmul.f32 %v757, %v805
      %v878 = vmul.f32 %v758, %v815
      %v879 = vmul.f32 %v759, %v815
      %v880 = vmul.f32 %v760, %v825
      %v881 = vmul.f32 %v761, %v825
      %v882 = vmul.f32 %v762, %v835
      %v883 = vmul.f32 %v763, %v835
      %v884 = vmul.f32 %v764, %v845
      %v885 = vmul.f32 %v765, %v845
      %v886 = vmul.f32 %v766, %v855
      %v887 = vmul.f32 %v767, %v855
      %v888 = vmul.f32 %v768, %v865
      %v889 = vmul.f32 %v769, %v865
      %v890 = vmul.f32 %v770, %v875
      %v891 = vmul.f32 %v771, %v875
      %v892 = vadd.f32 %v605, %v646
      %893 = vadd.xlane.f32.xlu0 %v892
      %v894 = vpop.xlane.xlu0 %893
      %v895 = vadd.f32 %v608, %v649
      %896 = vadd.xlane.f32.xlu0 %v895
      %v897 = vpop.xlane.xlu0 %896
      %v898 = vadd.f32 %v611, %v652
      %899 = vadd.xlane.f32.xlu0 %v898
      %v900 = vpop.xlane.xlu0 %899
      %v901 = vadd.f32 %v614, %v655
      %902 = vadd.xlane.f32.xlu0 %v901
      %v903 = vpop.xlane.xlu0 %902
      %v904 = vadd.f32 %v617, %v658
      %905 = vadd.xlane.f32.xlu0 %v904
      %v906 = vpop.xlane.xlu0 %905
      %v907 = vadd.f32 %v620, %v661
      %908 = vadd.xlane.f32.xlu0 %v907
      %v909 = vpop.xlane.xlu0 %908
      %v910 = vadd.f32 %v623, %v664
      %911 = vadd.xlane.f32.xlu0 %v910
      %v912 = vpop.xlane.xlu0 %911
      %v913 = vadd.f32 %v626, %v667
      %914 = vadd.xlane.f32.xlu0 %v913
      %v915 = vpop.xlane.xlu0 %914
      %v916 = vmul.f32 %v894, %v699
      %v917 = vmul.f32 %v897, %v699
      %v918 = vmul.f32 %v900, %v699
      %v919 = vmul.f32 %v903, %v699
      %v920 = vmul.f32 %v906, %v699
      %v921 = vmul.f32 %v909, %v699
      %v922 = vmul.f32 %v912, %v699
      %v923 = vmul.f32 %v915, %v699
      %v924 = vmul.f32 %v605, %v605
      %v925 = vmul.f32 %v646, %v646
      %v926 = vmul.f32 %v608, %v608
      %v927 = vmul.f32 %v649, %v649
      %v928 = vmul.f32 %v611, %v611
      %v929 = vmul.f32 %v652, %v652
      %v930 = vmul.f32 %v614, %v614
      %v931 = vmul.f32 %v655, %v655
      %v932 = vmul.f32 %v617, %v617
      %v933 = vmul.f32 %v658, %v658
      %v934 = vmul.f32 %v620, %v620
      %v935 = vmul.f32 %v661, %v661
      %v936 = vmul.f32 %v623, %v623
      %v937 = vmul.f32 %v664, %v664
      %v938 = vmul.f32 %v626, %v626
      %v939 = vmul.f32 %v667, %v667
      %v940 = vadd.f32 %v924, %v925
      %941 = vadd.xlane.f32.xlu0 %v940
      %v942 = vpop.xlane.xlu0 %941
      %v943 = vadd.f32 %v926, %v927
      %944 = vadd.xlane.f32.xlu0 %v943
      %v945 = vpop.xlane.xlu0 %944
      %v946 = vadd.f32 %v928, %v929
      %947 = vadd.xlane.f32.xlu0 %v946
      %v948 = vpop.xlane.xlu0 %947
      %v949 = vadd.f32 %v930, %v931
      %950 = vadd.xlane.f32.xlu0 %v949
      %v951 = vpop.xlane.xlu0 %950
      %v952 = vadd.f32 %v932, %v933
      %953 = vadd.xlane.f32.xlu0 %v952
      %v954 = vpop.xlane.xlu0 %953
      %v955 = vadd.f32 %v934, %v935
      %956 = vadd.xlane.f32.xlu0 %v955
      %v957 = vpop.xlane.xlu0 %956
      %v958 = vadd.f32 %v936, %v937
      %959 = vadd.xlane.f32.xlu0 %v958
      %v960 = vpop.xlane.xlu0 %959
      %v961 = vadd.f32 %v938, %v939
      %962 = vadd.xlane.f32.xlu0 %v961
      %v963 = vpop.xlane.xlu0 %962
      %v964 = vmul.f32 %v942, %v699
      %v965 = vmul.f32 %v945, %v699
      %v966 = vmul.f32 %v948, %v699
      %v967 = vmul.f32 %v951, %v699
      %v968 = vmul.f32 %v954, %v699
      %v969 = vmul.f32 %v957, %v699
      %v970 = vmul.f32 %v960, %v699
      %v971 = vmul.f32 %v963, %v699
      %v972 = vsub.f32 %v605, %v916
      %v973 = vsub.f32 %v646, %v916
      %v974 = vsub.f32 %v608, %v917
      %v975 = vsub.f32 %v649, %v917
      %v976 = vsub.f32 %v611, %v918
      %v977 = vsub.f32 %v652, %v918
      %v978 = vsub.f32 %v614, %v919
      %v979 = vsub.f32 %v655, %v919
      %v980 = vsub.f32 %v617, %v920
      %v981 = vsub.f32 %v658, %v920
      %v982 = vsub.f32 %v620, %v921
      %v983 = vsub.f32 %v661, %v921
      %v984 = vsub.f32 %v623, %v922
      %v985 = vsub.f32 %v664, %v922
      %v986 = vsub.f32 %v626, %v923
      %v987 = vsub.f32 %v667, %v923
      %v988 = vmul.f32 %v916, %v916
      %v989 = vmul.f32 %v917, %v917
      %v990 = vmul.f32 %v918, %v918
      %v991 = vmul.f32 %v919, %v919
      %v992 = vmul.f32 %v920, %v920
      %v993 = vmul.f32 %v921, %v921
      %v994 = vmul.f32 %v922, %v922
      %v995 = vmul.f32 %v923, %v923
      %v996 = vsub.f32 %v964, %v988
      %v997 = vsub.f32 %v965, %v989
      %v998 = vsub.f32 %v966, %v990
      %v999 = vsub.f32 %v967, %v991
      %v1000 = vsub.f32 %v968, %v992
      %v1001 = vsub.f32 %v969, %v993
      %v1002 = vsub.f32 %v970, %v994
      %v1003 = vsub.f32 %v971, %v995
      %v1004 = vadd.f32 %v996, 1e-05
      %v1005 = vadd.f32 %v997, 1e-05
      %v1006 = vadd.f32 %v998, 1e-05
      %v1007 = vadd.f32 %v999, 1e-05
      %v1008 = vadd.f32 %v1000, 1e-05
      %v1009 = vadd.f32 %v1001, 1e-05
      %v1010 = vadd.f32 %v1002, 1e-05
      %v1011 = vadd.f32 %v1003, 1e-05
      %v1012 = vrsqrt.pop %v1004
      %v1013 = vmul.f32 %v1012, %v1004
      %v1014 = vmul.f32 %v1013, %v1012
      %v1015 = vmul.f32 0.5, %v1014
      %v1016 = vsub.f32 1.5, %v1015
      %v1017 = vmul.f32 %v1012, %v1016
      %vm1018 = vweird.f32 %v1004
      %vm1019 = vweird.f32 %v1012
      %vm1020 = vmor %vm1018, %vm1019
      %v1021 = vsel %vm1020, %v1012, %v1017
      %v1022 = vrsqrt.pop %v1005
      %v1023 = vmul.f32 %v1022, %v1005
      %v1024 = vmul.f32 %v1023, %v1022
      %v1025 = vmul.f32 0.5, %v1024
      %v1026 = vsub.f32 1.5, %v1025
      %v1027 = vmul.f32 %v1022, %v1026
      %vm1028 = vweird.f32 %v1005
      %vm1029 = vweird.f32 %v1022
      %vm1030 = vmor %vm1028, %vm1029
      %v1031 = vsel %vm1030, %v1022, %v1027
      %v1032 = vrsqrt.pop %v1006
      %v1033 = vmul.f32 %v1032, %v1006
      %v1034 = vmul.f32 %v1033, %v1032
      %v1035 = vmul.f32 0.5, %v1034
      %v1036 = vsub.f32 1.5, %v1035
      %v1037 = vmul.f32 %v1032, %v1036
      %vm1038 = vweird.f32 %v1006
      %vm1039 = vweird.f32 %v1032
      %vm1040 = vmor %vm1038, %vm1039
      %v1041 = vsel %vm1040, %v1032, %v1037
      %v1042 = vrsqrt.pop %v1007
      %v1043 = vmul.f32 %v1042, %v1007
      %v1044 = vmul.f32 %v1043, %v1042
      %v1045 = vmul.f32 0.5, %v1044
      %v1046 = vsub.f32 1.5, %v1045
      %v1047 = vmul.f32 %v1042, %v1046
      %vm1048 = vweird.f32 %v1007
      %vm1049 = vweird.f32 %v1042
      %vm1050 = vmor %vm1048, %vm1049
      %v1051 = vsel %vm1050, %v1042, %v1047
      %v1052 = vrsqrt.pop %v1008
      %v1053 = vmul.f32 %v1052, %v1008
      %v1054 = vmul.f32 %v1053, %v1052
      %v1055 = vmul.f32 0.5, %v1054
      %v1056 = vsub.f32 1.5, %v1055
      %v1057 = vmul.f32 %v1052, %v1056
      %vm1058 = vweird.f32 %v1008
      %vm1059 = vweird.f32 %v1052
      %vm1060 = vmor %vm1058, %vm1059
      %v1061 = vsel %vm1060, %v1052, %v1057
      %v1062 = vrsqrt.pop %v1009
      %v1063 = vmul.f32 %v1062, %v1009
      %v1064 = vmul.f32 %v1063, %v1062
      %v1065 = vmul.f32 0.5, %v1064
      %v1066 = vsub.f32 1.5, %v1065
      %v1067 = vmul.f32 %v1062, %v1066
      %vm1068 = vweird.f32 %v1009
      %vm1069 = vweird.f32 %v1062
      %vm1070 = vmor %vm1068, %vm1069
      %v1071 = vsel %vm1070, %v1062, %v1067
      %v1072 = vrsqrt.pop %v1010
      %v1073 = vmul.f32 %v1072, %v1010
      %v1074 = vmul.f32 %v1073, %v1072
      %v1075 = vmul.f32 0.5, %v1074
      %v1076 = vsub.f32 1.5, %v1075
      %v1077 = vmul.f32 %v1072, %v1076
      %vm1078 = vweird.f32 %v1010
      %vm1079 = vweird.f32 %v1072
      %vm1080 = vmor %vm1078, %vm1079
      %v1081 = vsel %vm1080, %v1072, %v1077
      %v1082 = vrsqrt.pop %v1011
      %v1083 = vmul.f32 %v1082, %v1011
      %v1084 = vmul.f32 %v1083, %v1082
      %v1085 = vmul.f32 0.5, %v1084
      %v1086 = vsub.f32 1.5, %v1085
      %v1087 = vmul.f32 %v1082, %v1086
      %vm1088 = vweird.f32 %v1011
      %vm1089 = vweird.f32 %v1082
      %vm1090 = vmor %vm1088, %vm1089
      %v1091 = vsel %vm1090, %v1082, %v1087
      %v1092 = vmul.f32 %v972, %v1021
      %v1093 = vmul.f32 %v973, %v1021
      %v1094 = vmul.f32 %v974, %v1031
      %v1095 = vmul.f32 %v975, %v1031
      %v1096 = vmul.f32 %v976, %v1041
      %v1097 = vmul.f32 %v977, %v1041
      %v1098 = vmul.f32 %v978, %v1051
      %v1099 = vmul.f32 %v979, %v1051
      %v1100 = vmul.f32 %v980, %v1061
      %v1101 = vmul.f32 %v981, %v1061
      %v1102 = vmul.f32 %v982, %v1071
      %v1103 = vmul.f32 %v983, %v1071
      %v1104 = vmul.f32 %v984, %v1081
      %v1105 = vmul.f32 %v985, %v1081
      %v1106 = vmul.f32 %v986, %v1091
      %v1107 = vmul.f32 %v987, %v1091
      %vm1108 = vcmp.ge.f32.partialorder %v876, 0.0
      %vm1109 = vcmp.ge.f32.partialorder %v877, 0.0
      %vm1110 = vcmp.ge.f32.partialorder %v1092, 0.0
      %vm1111 = vcmp.ge.f32.partialorder %v1093, 0.0
      %vm1112 = vcmp.ge.f32.partialorder %v878, 0.0
      %vm1113 = vcmp.ge.f32.partialorder %v879, 0.0
      %vm1114 = vcmp.ge.f32.partialorder %v1094, 0.0
      %vm1115 = vcmp.ge.f32.partialorder %v1095, 0.0
      %vm1116 = vcmp.ge.f32.partialorder %v880, 0.0
      %vm1117 = vcmp.ge.f32.partialorder %v881, 0.0
      %vm1118 = vcmp.ge.f32.partialorder %v1096, 0.0
      %vm1119 = vcmp.ge.f32.partialorder %v1097, 0.0
      %vm1120 = vcmp.ge.f32.partialorder %v882, 0.0
      %vm1121 = vcmp.ge.f32.partialorder %v883, 0.0
      %vm1122 = vcmp.ge.f32.partialorder %v1098, 0.0
      %vm1123 = vcmp.ge.f32.partialorder %v1099, 0.0
      %vm1124 = vcmp.ge.f32.partialorder %v884, 0.0
      %vm1125 = vcmp.ge.f32.partialorder %v885, 0.0
      %vm1126 = vcmp.ge.f32.partialorder %v1100, 0.0
      %vm1127 = vcmp.ge.f32.partialorder %v1101, 0.0
      %vm1128 = vcmp.ge.f32.partialorder %v886, 0.0
      %vm1129 = vcmp.ge.f32.partialorder %v887, 0.0
      %vm1130 = vcmp.ge.f32.partialorder %v1102, 0.0
      %vm1131 = vcmp.ge.f32.partialorder %v1103, 0.0
      %vm1132 = vcmp.ge.f32.partialorder %v888, 0.0
      %vm1133 = vcmp.ge.f32.partialorder %v889, 0.0
      %vm1134 = vcmp.ge.f32.partialorder %v1104, 0.0
      %vm1135 = vcmp.ge.f32.partialorder %v1105, 0.0
      %vm1136 = vcmp.ge.f32.partialorder %v890, 0.0
      %vm1137 = vcmp.ge.f32.partialorder %v891, 0.0
      %vm1138 = vcmp.ge.f32.partialorder %v1106, 0.0
      %vm1139 = vcmp.ge.f32.partialorder %v1107, 0.0
      %v1140 = vmul.f32 %v876, 0.01
      %v1141 = vmul.f32 %v877, 0.01
      %v1142 = vmul.f32 %v1092, 0.01
      %v1143 = vmul.f32 %v1093, 0.01
      %v1144 = vmul.f32 %v878, 0.01
      %v1145 = vmul.f32 %v879, 0.01
      %v1146 = vmul.f32 %v1094, 0.01
      %v1147 = vmul.f32 %v1095, 0.01
      %v1148 = vmul.f32 %v880, 0.01
      %v1149 = vmul.f32 %v881, 0.01
      %v1150 = vmul.f32 %v1096, 0.01
      %v1151 = vmul.f32 %v1097, 0.01
      %v1152 = vmul.f32 %v882, 0.01
      %v1153 = vmul.f32 %v883, 0.01
      %v1154 = vmul.f32 %v1098, 0.01
      %v1155 = vmul.f32 %v1099, 0.01
      %v1156 = vmul.f32 %v884, 0.01
      %v1157 = vmul.f32 %v885, 0.01
      %v1158 = vmul.f32 %v1100, 0.01
      %v1159 = vmul.f32 %v1101, 0.01
      %v1160 = vmul.f32 %v886, 0.01
      %v1161 = vmul.f32 %v887, 0.01
      %v1162 = vmul.f32 %v1102, 0.01
      %v1163 = vmul.f32 %v1103, 0.01
      %v1164 = vmul.f32 %v888, 0.01
      %v1165 = vmul.f32 %v889, 0.01
      %v1166 = vmul.f32 %v1104, 0.01
      %v1167 = vmul.f32 %v1105, 0.01
      %v1168 = vmul.f32 %v890, 0.01
      %v1169 = vmul.f32 %v891, 0.01
      %v1170 = vmul.f32 %v1106, 0.01
      %v1171 = vmul.f32 %v1107, 0.01
      %v1172 = vsel %vm1108, %v876, %v1140
      %v1173 = vsel %vm1109, %v877, %v1141
      %v1174 = vsel %vm1110, %v1092, %v1142
      %v1175 = vsel %vm1111, %v1093, %v1143
      %v1176 = vsel %vm1112, %v878, %v1144
      %v1177 = vsel %vm1113, %v879, %v1145
      %v1178 = vsel %vm1114, %v1094, %v1146
      %v1179 = vsel %vm1115, %v1095, %v1147
      %v1180 = vsel %vm1116, %v880, %v1148
      %v1181 = vsel %vm1117, %v881, %v1149
      %v1182 = vsel %vm1118, %v1096, %v1150
      %v1183 = vsel %vm1119, %v1097, %v1151
      %v1184 = vsel %vm1120, %v882, %v1152
      %v1185 = vsel %vm1121, %v883, %v1153
      %v1186 = vsel %vm1122, %v1098, %v1154
      %v1187 = vsel %vm1123, %v1099, %v1155
      %v1188 = vsel %vm1124, %v884, %v1156
      %v1189 = vsel %vm1125, %v885, %v1157
      %v1190 = vsel %vm1126, %v1100, %v1158
      %v1191 = vsel %vm1127, %v1101, %v1159
      %v1192 = vsel %vm1128, %v886, %v1160
      %v1193 = vsel %vm1129, %v887, %v1161
      %v1194 = vsel %vm1130, %v1102, %v1162
      %v1195 = vsel %vm1131, %v1103, %v1163
      %v1196 = vsel %vm1132, %v888, %v1164
      %v1197 = vsel %vm1133, %v889, %v1165
      %v1198 = vsel %vm1134, %v1104, %v1166
      %v1199 = vsel %vm1135, %v1105, %v1167
      %v1200 = vsel %vm1136, %v890, %v1168
      %v1201 = vsel %vm1137, %v891, %v1169
      %v1202 = vsel %vm1138, %v1106, %v1170
      %v1203 = vsel %vm1139, %v1107, %v1171
      %v1204 = vld [vmem:[%s6] sm:$0x3f]
      %v1205 = vld [vmem:[%s7] sm:$0x3f]
      %1207 = vset.pattern.permute.xlu0 0
      %1208 = vperm.xlu0 %1207, %v1205
      %v1209 = vpop.permute.xlu0 %1208
      %vm1211 = vcmask 523264
      %v1213 = vsel %vm1211, %v1204, 0
      %1215 = vmatpush.msra.mxu0 0.0
      %1216 = vmatpush.msra.mxu0 0.0
      %1217 = vmatpush.msra.mxu0 0.0
      %1218 = vmatpush.msra.mxu0 0.0
      %1219 = vmatpush.msra.mxu0 0.0
      %1220 = vmatpush.msra.mxu0 0.0
      %1221 = vmatpush.msra.mxu0 0.0
      %1222 = vmatpush.msra.mxu0 0.0
      %1223 = vmatpush.msra.mxu0 %v1200
      %1224 = vmatpush.msra.mxu0 %v1196
      %1225 = vmatpush.msra.mxu0 %v1192
      %1226 = vmatpush.msra.mxu0 %v1188
      %1227 = vmatpush.msra.mxu0 %v1184
      %1228 = vmatpush.msra.mxu0 %v1180
      %1229 = vmatpush.msra.mxu0 %v1176
      %1230 = vmatpush.msra.mxu0 %v1172
      %1231 = vmatmul.f32.gmra.mxu0 %v1213
      %v1232 = vpop.f32.mrf.mxu0
      %v1233 = vadd.f32 %v1209, %v1232
      %1234 = vdwg.mxu0
      %1235 = vmatpush.msra.mxu0 0.0
      %1236 = vmatpush.msra.mxu0 0.0
      %1237 = vmatpush.msra.mxu0 0.0
      %1238 = vmatpush.msra.mxu0 0.0
      %1239 = vmatpush.msra.mxu0 0.0
      %1240 = vmatpush.msra.mxu0 0.0
      %1241 = vmatpush.msra.mxu0 0.0
      %1242 = vmatpush.msra.mxu0 0.0
      %1243 = vmatpush.msra.mxu0 %v1201
      %1244 = vmatpush.msra.mxu0 %v1197
      %1245 = vmatpush.msra.mxu0 %v1193
      %1246 = vmatpush.msra.mxu0 %v1189
      %1247 = vmatpush.msra.mxu0 %v1185
      %1248 = vmatpush.msra.mxu0 %v1181
      %1249 = vmatpush.msra.mxu0 %v1177
      %1250 = vmatpush.msra.mxu0 %v1173
      %1251 = vmatmul.f32.gmra.mxu0 %v1213
      %v1252 = vpop.f32.mrf.mxu0
      %v1253 = vadd.f32 %v1209, %v1252
      %1254 = vdwg.mxu0
      %1255 = vmatpush.msra.mxu0 0.0
      %1256 = vmatpush.msra.mxu0 0.0
      %1257 = vmatpush.msra.mxu0 0.0
      %1258 = vmatpush.msra.mxu0 0.0
      %1259 = vmatpush.msra.mxu0 0.0
      %1260 = vmatpush.msra.mxu0 0.0
      %1261 = vmatpush.msra.mxu0 0.0
      %1262 = vmatpush.msra.mxu0 0.0
      %1263 = vmatpush.msra.mxu0 %v1202
      %1264 = vmatpush.msra.mxu0 %v1198
      %1265 = vmatpush.msra.mxu0 %v1194
      %1266 = vmatpush.msra.mxu0 %v1190
      %1267 = vmatpush.msra.mxu0 %v1186
      %1268 = vmatpush.msra.mxu0 %v1182
      %1269 = vmatpush.msra.mxu0 %v1178
      %1270 = vmatpush.msra.mxu0 %v1174
      %1271 = vmatmul.f32.gmra.mxu0 %v1213
      %v1272 = vpop.f32.mrf.mxu0
      %v1273 = vadd.f32 %v1209, %v1272
      %1274 = vdwg.mxu0
      %1275 = vmatpush.msra.mxu0 0.0
      %1276 = vmatpush.msra.mxu0 0.0
      %1277 = vmatpush.msra.mxu0 0.0
      %1278 = vmatpush.msra.mxu0 0.0
      %1279 = vmatpush.msra.mxu0 0.0
      %1280 = vmatpush.msra.mxu0 0.0
      %1281 = vmatpush.msra.mxu0 0.0
      %1282 = vmatpush.msra.mxu0 0.0
      %1283 = vmatpush.msra.mxu0 %v1203
      %1284 = vmatpush.msra.mxu0 %v1199
      %1285 = vmatpush.msra.mxu0 %v1195
      %1286 = vmatpush.msra.mxu0 %v1191
      %1287 = vmatpush.msra.mxu0 %v1187
      %1288 = vmatpush.msra.mxu0 %v1183
      %1289 = vmatpush.msra.mxu0 %v1179
      %1290 = vmatpush.msra.mxu0 %v1175
      %1291 = vmatmul.f32.gmra.mxu0 %v1213
      %v1292 = vpop.f32.mrf.mxu0
      %v1293 = vadd.f32 %v1209, %v1292
      %1294 = vdwg.mxu0
      %v1295 = vmax.f32 %v1233, -10.0
      %v1296 = vmax.f32 %v1253, -10.0
      %v1297 = vmax.f32 %v1273, -10.0
      %v1298 = vmax.f32 %v1293, -10.0
      %v1299 = vmin.f32 %v1295, 10.0
      %v1300 = vmin.f32 %v1296, 10.0
      %v1301 = vmin.f32 %v1297, 10.0
      %v1302 = vmin.f32 %v1298, 10.0
      %v1303 = vadd.f32 %v1299, 0.0
      %v1304 = vadd.f32 %v1300, 0.0
      %v1305 = vadd.f32 %v1301, 0.0
      %v1306 = vadd.f32 %v1302, 0.0
      %v1307 = vld [vmem:[%s2] sm:$0x7]
      %vm1308 = vcmp.gt.f32.partialorder %v1307, 0.5
      %v1313 = vrot.slane %v1253, 4
      %v1314 = vrot.slane %v1293, 4
      %vm1315 = vcmask 1043456
      %v1316 = vsel %vm1315, %v1233, %v1313
      %v1317 = vsel %vm1315, %v1273, %v1314
      %v1318 = vsel %vm1315, %v1313, %v1233
      %v1319 = vrot.slane %v1318, 4
      %v1320 = vsel %vm1315, %v1314, %v1273
      %v1321 = vrot.slane %v1320, 4
      %vm1322 = vcmask 1040384
      %vm1323 = vcmask 1044484
      %vm1324 = vmor %vm1322, %vm1323
      %v1325 = vrot.slane %v1316, 7
      %v1326 = vrot.slane %v1325, 4
      %v1327 = vrot.slane %v1319, 7
      %v1328 = vsel %vm1324, %v1326, %v1327
      %v1329 = vrot.slane %v1317, 7
      %v1330 = vrot.slane %v1329, 4
      %v1331 = vrot.slane %v1321, 7
      %v1332 = vsel %vm1324, %v1330, %v1331
      %v1335 = vsub.f32 %v331, %v1328
      %v1336 = vsub.f32 %v332, %v1332
      %v1337 = vsub.f32 0.0, %v1303
      %v1338 = vsub.f32 0.0, %v1304
      %v1339 = vsub.f32 0.0, %v1305
      %v1340 = vsub.f32 0.0, %v1306
      %v1341 = vmul.f32 %v1337, 1.442695
      %v1342 = vpow.pop %v1341
      %v1343 = vmul.f32 %v1338, 1.442695
      %v1344 = vpow.pop %v1343
      %v1345 = vmul.f32 %v1339, 1.442695
      %v1346 = vpow.pop %v1345
      %v1347 = vmul.f32 %v1340, 1.442695
      %v1348 = vpow.pop %v1347
      %v1353 = vrot.slane %v1344, 4
      %v1354 = vrot.slane %v1348, 4
      %v1355 = vsel %vm1315, %v1342, %v1353
      %v1356 = vsel %vm1315, %v1346, %v1354
      %v1359 = vmul.f32 %v1335, %v1355
      %v1360 = vmul.f32 %v1336, %v1356
      %v1361 = vsel %vm1308, 1, 0
      %1362 = vset.pattern.permute.xlu0 0
      %1363 = vperm.xlu0 %1362, %v1361
      %v1364 = vpop.permute.xlu0 %1363
      %vm1365 = vcmp.eq.s32.totalorder %v1364, 1
      %1366 = vst [vmem:[#allocation1] ss:$2 sm:$0xff] %v331
      %s1367 = scalar_lea.vmem [#allocation1], 16
      %1368 = vst [vmem:[%s1367] ss:$2 sm:$0xff] %v332
      %v1369 = vld.sshfl [vmem:[#allocation1] sm:$0xff pattern:$0x75316420]
      %v1370 = vld.sshfl [vmem:[#allocation1 + $0x8] sm:$0xff pattern:$0x75316420]
      %v1371 = vld.sshfl [vmem:[#allocation1 + $0x10] sm:$0xff pattern:$0x75316420]
      %v1372 = vld.sshfl [vmem:[#allocation1 + $0x18] sm:$0xff pattern:$0x75316420]
      %1379 = vst [vmem:[#allocation1] ss:$2 sm:$0xff] %v1359
      %s1380 = scalar_lea.vmem [#allocation1], 16
      %1381 = vst [vmem:[%s1380] ss:$2 sm:$0xff] %v1360
      %v1382 = vld.sshfl [vmem:[#allocation1] sm:$0xff pattern:$0x75316420]
      %v1383 = vld.sshfl [vmem:[#allocation1 + $0x8] sm:$0xff pattern:$0x75316420]
      %v1384 = vld.sshfl [vmem:[#allocation1 + $0x10] sm:$0xff pattern:$0x75316420]
      %v1385 = vld.sshfl [vmem:[#allocation1 + $0x18] sm:$0xff pattern:$0x75316420]
      %v1390 = vsel %vm1365, %v1369, %v1382
      %v1391 = vsel %vm1365, %v1370, %v1383
      %v1392 = vsel %vm1365, %v1371, %v1384
      %v1393 = vsel %vm1365, %v1372, %v1385
      %s1394 = scalar_lea.vmem %s3, 16
      %v1395 = vld [vmem:[%s1394] sm:$0xff]
      %v1396 = vld [vmem:[%s1394 + $0x8] sm:$0xff]
      %s1397 = scalar_lea.vmem %s4, 16
      %v1398 = vld [vmem:[%s1397] sm:$0xff]
      %v1399 = vld [vmem:[%s1397 + $0x8] sm:$0xff]
      %1401 = vset.pattern.permute.xlu0 0
      %1402 = vperm.xlu0 %1401, %v1398
      %v1403 = vpop.permute.xlu0 %1402
      %1406 = vset.pattern.permute.xlu0 0
      %1407 = vperm.xlu0 %1406, %v1399
      %v1408 = vpop.permute.xlu0 %1407
      %v1411 = vsel %vm356, %v1395, 0
      %v1414 = vsel %vm356, %v1396, 0
      %v1417 = vsel %vm363, %v1390, 0
      %v1420 = vsel %vm363, %v1391, 0
      %v1423 = vsel %vm363, %v1392, 0
      %v1426 = vsel %vm363, %v1393, 0
      %1428 = vmatpush.msra.mxu0 0.0
      %1429 = vmatpush.msra.mxu0 0.0
      %1430 = vmatpush.msra.mxu0 0.0
      %1431 = vmatpush.msra.mxu0 0.0
      %1432 = vmatpush.msra.mxu0 0.0
      %1433 = vmatpush.msra.mxu0 0.0
      %1434 = vmatpush.msra.mxu0 0.0
      %1435 = vmatpush.msra.mxu0 0.0
      %1436 = vmatpush.msra.mxu0 0.0
      %1437 = vmatpush.msra.mxu0 0.0
      %1438 = vmatpush.msra.mxu0 0.0
      %1439 = vmatpush.msra.mxu0 0.0
      %1440 = vmatpush.msra.mxu0 0.0
      %1441 = vmatpush.msra.mxu0 0.0
      %1442 = vmatpush.msra.mxu0 0.0
      %1443 = vmatpush.msra.mxu0 %v1417
      %1444 = vmatmul.f32.gmra.mxu0 %v1411
      %v1445 = vpop.f32.mrf.mxu0
      %v1446 = vadd.f32 %v1403, %v1445
      %1447 = vmatmul.f32.gmra.mxu0 %v1414
      %v1448 = vpop.f32.mrf.mxu0
      %v1449 = vadd.f32 %v1408, %v1448
      %1450 = vdwg.mxu0
      %1451 = vmatpush.msra.mxu0 0.0
      %1452 = vmatpush.msra.mxu0 0.0
      %1453 = vmatpush.msra.mxu0 0.0
      %1454 = vmatpush.msra.mxu0 0.0
      %1455 = vmatpush.msra.mxu0 0.0
      %1456 = vmatpush.msra.mxu0 0.0
      %1457 = vmatpush.msra.mxu0 0.0
      %1458 = vmatpush.msra.mxu0 0.0
      %1459 = vmatpush.msra.mxu0 0.0
      %1460 = vmatpush.msra.mxu0 0.0
      %1461 = vmatpush.msra.mxu0 0.0
      %1462 = vmatpush.msra.mxu0 0.0
      %1463 = vmatpush.msra.mxu0 0.0
      %1464 = vmatpush.msra.mxu0 0.0
      %1465 = vmatpush.msra.mxu0 0.0
      %1466 = vmatpush.msra.mxu0 %v1420
      %1467 = vmatmul.f32.gmra.mxu0 %v1411
      %v1468 = vpop.f32.mrf.mxu0
      %v1469 = vadd.f32 %v1403, %v1468
      %1470 = vmatmul.f32.gmra.mxu0 %v1414
      %v1471 = vpop.f32.mrf.mxu0
      %v1472 = vadd.f32 %v1408, %v1471
      %1473 = vdwg.mxu0
      %1474 = vmatpush.msra.mxu0 0.0
      %1475 = vmatpush.msra.mxu0 0.0
      %1476 = vmatpush.msra.mxu0 0.0
      %1477 = vmatpush.msra.mxu0 0.0
      %1478 = vmatpush.msra.mxu0 0.0
      %1479 = vmatpush.msra.mxu0 0.0
      %1480 = vmatpush.msra.mxu0 0.0
      %1481 = vmatpush.msra.mxu0 0.0
      %1482 = vmatpush.msra.mxu0 0.0
      %1483 = vmatpush.msra.mxu0 0.0
      %1484 = vmatpush.msra.mxu0 0.0
      %1485 = vmatpush.msra.mxu0 0.0
      %1486 = vmatpush.msra.mxu0 0.0
      %1487 = vmatpush.msra.mxu0 0.0
      %1488 = vmatpush.msra.mxu0 0.0
      %1489 = vmatpush.msra.mxu0 %v1423
      %1490 = vmatmul.f32.gmra.mxu0 %v1411
      %v1491 = vpop.f32.mrf.mxu0
      %v1492 = vadd.f32 %v1403, %v1491
      %1493 = vmatmul.f32.gmra.mxu0 %v1414
      %v1494 = vpop.f32.mrf.mxu0
      %v1495 = vadd.f32 %v1408, %v1494
      %1496 = vdwg.mxu0
      %1497 = vmatpush.msra.mxu0 0.0
      %1498 = vmatpush.msra.mxu0 0.0
      %1499 = vmatpush.msra.mxu0 0.0
      %1500 = vmatpush.msra.mxu0 0.0
      %1501 = vmatpush.msra.mxu0 0.0
      %1502 = vmatpush.msra.mxu0 0.0
      %1503 = vmatpush.msra.mxu0 0.0
      %1504 = vmatpush.msra.mxu0 0.0
      %1505 = vmatpush.msra.mxu0 0.0
      %1506 = vmatpush.msra.mxu0 0.0
      %1507 = vmatpush.msra.mxu0 0.0
      %1508 = vmatpush.msra.mxu0 0.0
      %1509 = vmatpush.msra.mxu0 0.0
      %1510 = vmatpush.msra.mxu0 0.0
      %1511 = vmatpush.msra.mxu0 0.0
      %1512 = vmatpush.msra.mxu0 %v1426
      %1513 = vmatmul.f32.gmra.mxu0 %v1411
      %v1514 = vpop.f32.mrf.mxu0
      %v1515 = vadd.f32 %v1403, %v1514
      %1516 = vmatmul.f32.gmra.mxu0 %v1414
      %v1517 = vpop.f32.mrf.mxu0
      %v1518 = vadd.f32 %v1408, %v1517
      %1519 = vdwg.mxu0
      %v1520 = vmax.f32 %v1446, 0.0
      %v1521 = vmax.f32 %v1469, 0.0
      %v1522 = vmax.f32 %v1492, 0.0
      %v1523 = vmax.f32 %v1515, 0.0
      %v1524 = vmax.f32 %v1449, 0.0
      %v1525 = vmax.f32 %v1472, 0.0
      %v1526 = vmax.f32 %v1495, 0.0
      %v1527 = vmax.f32 %v1518, 0.0
      %s1528 = scalar_lea.vmem %s5, 64
      %v1529 = vld [vmem:[%s1528] sm:$0xff]
      %v1530 = vld [vmem:[%s1528 + $0x8] sm:$0xff]
      %v1531 = vld [vmem:[%s1528 + $0x10] sm:$0xff]
      %v1532 = vld [vmem:[%s1528 + $0x18] sm:$0xff]
      %v1533 = vld [vmem:[%s1528 + $0x20] sm:$0xff]
      %v1534 = vld [vmem:[%s1528 + $0x28] sm:$0xff]
      %v1535 = vld [vmem:[%s1528 + $0x30] sm:$0xff]
      %v1536 = vld [vmem:[%s1528 + $0x38] sm:$0xff]
      %v1538 = vsel %vm480, %v1529, 0
      %v1541 = vsel %vm480, %v1530, 0
      %v1544 = vsel %vm480, %v1531, 0
      %v1547 = vsel %vm480, %v1532, 0
      %v1550 = vsel %vm480, %v1533, 0
      %v1553 = vsel %vm480, %v1534, 0
      %v1556 = vsel %vm480, %v1535, 0
      %v1559 = vsel %vm480, %v1536, 0
      %1561 = vmatpush.msra.mxu0 0.0
      %1562 = vmatpush.msra.mxu0 0.0
      %1563 = vmatpush.msra.mxu0 0.0
      %1564 = vmatpush.msra.mxu0 0.0
      %1565 = vmatpush.msra.mxu0 0.0
      %1566 = vmatpush.msra.mxu0 0.0
      %1567 = vmatpush.msra.mxu0 0.0
      %1568 = vmatpush.msra.mxu0 0.0
      %1569 = vmatpush.msra.mxu0 0.0
      %1570 = vmatpush.msra.mxu0 0.0
      %1571 = vmatpush.msra.mxu0 0.0
      %1572 = vmatpush.msra.mxu0 0.0
      %1573 = vmatpush.msra.mxu0 0.0
      %1574 = vmatpush.msra.mxu0 0.0
      %1575 = vmatpush.msra.mxu0 %v1524
      %1576 = vmatpush.msra.mxu0 %v1520
      %1577 = vmatmul.f32.gmra.mxu0 %v1538
      %v1578 = vpop.f32.mrf.mxu0
      %v1579 = vadd.f32 0.0, %v1578
      %1580 = vmatmul.f32.gmra.mxu0 %v1541
      %v1581 = vpop.f32.mrf.mxu0
      %v1582 = vadd.f32 0.0, %v1581
      %1583 = vmatmul.f32.gmra.mxu0 %v1544
      %v1584 = vpop.f32.mrf.mxu0
      %v1585 = vadd.f32 0.0, %v1584
      %1586 = vmatmul.f32.gmra.mxu0 %v1547
      %v1587 = vpop.f32.mrf.mxu0
      %v1588 = vadd.f32 0.0, %v1587
      %1589 = vmatmul.f32.gmra.mxu0 %v1550
      %v1590 = vpop.f32.mrf.mxu0
      %v1591 = vadd.f32 0.0, %v1590
      %1592 = vmatmul.f32.gmra.mxu0 %v1553
      %v1593 = vpop.f32.mrf.mxu0
      %v1594 = vadd.f32 0.0, %v1593
      %1595 = vmatmul.f32.gmra.mxu0 %v1556
      %v1596 = vpop.f32.mrf.mxu0
      %v1597 = vadd.f32 0.0, %v1596
      %1598 = vmatmul.f32.gmra.mxu0 %v1559
      %v1599 = vpop.f32.mrf.mxu0
      %v1600 = vadd.f32 0.0, %v1599
      %1601 = vdwg.mxu0
      %1602 = vmatpush.msra.mxu0 0.0
      %1603 = vmatpush.msra.mxu0 0.0
      %1604 = vmatpush.msra.mxu0 0.0
      %1605 = vmatpush.msra.mxu0 0.0
      %1606 = vmatpush.msra.mxu0 0.0
      %1607 = vmatpush.msra.mxu0 0.0
      %1608 = vmatpush.msra.mxu0 0.0
      %1609 = vmatpush.msra.mxu0 0.0
      %1610 = vmatpush.msra.mxu0 0.0
      %1611 = vmatpush.msra.mxu0 0.0
      %1612 = vmatpush.msra.mxu0 0.0
      %1613 = vmatpush.msra.mxu0 0.0
      %1614 = vmatpush.msra.mxu0 0.0
      %1615 = vmatpush.msra.mxu0 0.0
      %1616 = vmatpush.msra.mxu0 %v1525
      %1617 = vmatpush.msra.mxu0 %v1521
      %1618 = vmatmul.f32.gmra.mxu0 %v1538
      %v1619 = vpop.f32.mrf.mxu0
      %v1620 = vadd.f32 0.0, %v1619
      %1621 = vmatmul.f32.gmra.mxu0 %v1541
      %v1622 = vpop.f32.mrf.mxu0
      %v1623 = vadd.f32 0.0, %v1622
      %1624 = vmatmul.f32.gmra.mxu0 %v1544
      %v1625 = vpop.f32.mrf.mxu0
      %v1626 = vadd.f32 0.0, %v1625
      %1627 = vmatmul.f32.gmra.mxu0 %v1547
      %v1628 = vpop.f32.mrf.mxu0
      %v1629 = vadd.f32 0.0, %v1628
      %1630 = vmatmul.f32.gmra.mxu0 %v1550
      %v1631 = vpop.f32.mrf.mxu0
      %v1632 = vadd.f32 0.0, %v1631
      %1633 = vmatmul.f32.gmra.mxu0 %v1553
      %v1634 = vpop.f32.mrf.mxu0
      %v1635 = vadd.f32 0.0, %v1634
      %1636 = vmatmul.f32.gmra.mxu0 %v1556
      %v1637 = vpop.f32.mrf.mxu0
      %v1638 = vadd.f32 0.0, %v1637
      %1639 = vmatmul.f32.gmra.mxu0 %v1559
      %v1640 = vpop.f32.mrf.mxu0
      %v1641 = vadd.f32 0.0, %v1640
      %1642 = vdwg.mxu0
      %1643 = vmatpush.msra.mxu0 0.0
      %1644 = vmatpush.msra.mxu0 0.0
      %1645 = vmatpush.msra.mxu0 0.0
      %1646 = vmatpush.msra.mxu0 0.0
      %1647 = vmatpush.msra.mxu0 0.0
      %1648 = vmatpush.msra.mxu0 0.0
      %1649 = vmatpush.msra.mxu0 0.0
      %1650 = vmatpush.msra.mxu0 0.0
      %1651 = vmatpush.msra.mxu0 0.0
      %1652 = vmatpush.msra.mxu0 0.0
      %1653 = vmatpush.msra.mxu0 0.0
      %1654 = vmatpush.msra.mxu0 0.0
      %1655 = vmatpush.msra.mxu0 0.0
      %1656 = vmatpush.msra.mxu0 0.0
      %1657 = vmatpush.msra.mxu0 %v1526
      %1658 = vmatpush.msra.mxu0 %v1522
      %1659 = vmatmul.f32.gmra.mxu0 %v1538
      %v1660 = vpop.f32.mrf.mxu0
      %v1661 = vadd.f32 0.0, %v1660
      %1662 = vmatmul.f32.gmra.mxu0 %v1541
      %v1663 = vpop.f32.mrf.mxu0
      %v1664 = vadd.f32 0.0, %v1663
      %1665 = vmatmul.f32.gmra.mxu0 %v1544
      %v1666 = vpop.f32.mrf.mxu0
      %v1667 = vadd.f32 0.0, %v1666
      %1668 = vmatmul.f32.gmra.mxu0 %v1547
      %v1669 = vpop.f32.mrf.mxu0
      %v1670 = vadd.f32 0.0, %v1669
      %1671 = vmatmul.f32.gmra.mxu0 %v1550
      %v1672 = vpop.f32.mrf.mxu0
      %v1673 = vadd.f32 0.0, %v1672
      %1674 = vmatmul.f32.gmra.mxu0 %v1553
      %v1675 = vpop.f32.mrf.mxu0
      %v1676 = vadd.f32 0.0, %v1675
      %1677 = vmatmul.f32.gmra.mxu0 %v1556
      %v1678 = vpop.f32.mrf.mxu0
      %v1679 = vadd.f32 0.0, %v1678
      %1680 = vmatmul.f32.gmra.mxu0 %v1559
      %v1681 = vpop.f32.mrf.mxu0
      %v1682 = vadd.f32 0.0, %v1681
      %1683 = vdwg.mxu0
      %1684 = vmatpush.msra.mxu0 0.0
      %1685 = vmatpush.msra.mxu0 0.0
      %1686 = vmatpush.msra.mxu0 0.0
      %1687 = vmatpush.msra.mxu0 0.0
      %1688 = vmatpush.msra.mxu0 0.0
      %1689 = vmatpush.msra.mxu0 0.0
      %1690 = vmatpush.msra.mxu0 0.0
      %1691 = vmatpush.msra.mxu0 0.0
      %1692 = vmatpush.msra.mxu0 0.0
      %1693 = vmatpush.msra.mxu0 0.0
      %1694 = vmatpush.msra.mxu0 0.0
      %1695 = vmatpush.msra.mxu0 0.0
      %1696 = vmatpush.msra.mxu0 0.0
      %1697 = vmatpush.msra.mxu0 0.0
      %1698 = vmatpush.msra.mxu0 %v1527
      %1699 = vmatpush.msra.mxu0 %v1523
      %1700 = vmatmul.f32.gmra.mxu0 %v1538
      %v1701 = vpop.f32.mrf.mxu0
      %v1702 = vadd.f32 0.0, %v1701
      %1703 = vmatmul.f32.gmra.mxu0 %v1541
      %v1704 = vpop.f32.mrf.mxu0
      %v1705 = vadd.f32 0.0, %v1704
      %1706 = vmatmul.f32.gmra.mxu0 %v1544
      %v1707 = vpop.f32.mrf.mxu0
      %v1708 = vadd.f32 0.0, %v1707
      %1709 = vmatmul.f32.gmra.mxu0 %v1547
      %v1710 = vpop.f32.mrf.mxu0
      %v1711 = vadd.f32 0.0, %v1710
      %1712 = vmatmul.f32.gmra.mxu0 %v1550
      %v1713 = vpop.f32.mrf.mxu0
      %v1714 = vadd.f32 0.0, %v1713
      %1715 = vmatmul.f32.gmra.mxu0 %v1553
      %v1716 = vpop.f32.mrf.mxu0
      %v1717 = vadd.f32 0.0, %v1716
      %1718 = vmatmul.f32.gmra.mxu0 %v1556
      %v1719 = vpop.f32.mrf.mxu0
      %v1720 = vadd.f32 0.0, %v1719
      %1721 = vmatmul.f32.gmra.mxu0 %v1559
      %v1722 = vpop.f32.mrf.mxu0
      %v1723 = vadd.f32 0.0, %v1722
      %1724 = vdwg.mxu0
      %v1725 = vadd.f32 %v1579, %v1620
      %1726 = vadd.xlane.f32.xlu0 %v1725
      %v1727 = vpop.xlane.xlu0 %1726
      %v1728 = vadd.f32 %v1582, %v1623
      %1729 = vadd.xlane.f32.xlu0 %v1728
      %v1730 = vpop.xlane.xlu0 %1729
      %v1731 = vadd.f32 %v1585, %v1626
      %1732 = vadd.xlane.f32.xlu0 %v1731
      %v1733 = vpop.xlane.xlu0 %1732
      %v1734 = vadd.f32 %v1588, %v1629
      %1735 = vadd.xlane.f32.xlu0 %v1734
      %v1736 = vpop.xlane.xlu0 %1735
      %v1737 = vadd.f32 %v1591, %v1632
      %1738 = vadd.xlane.f32.xlu0 %v1737
      %v1739 = vpop.xlane.xlu0 %1738
      %v1740 = vadd.f32 %v1594, %v1635
      %1741 = vadd.xlane.f32.xlu0 %v1740
      %v1742 = vpop.xlane.xlu0 %1741
      %v1743 = vadd.f32 %v1597, %v1638
      %1744 = vadd.xlane.f32.xlu0 %v1743
      %v1745 = vpop.xlane.xlu0 %1744
      %v1746 = vadd.f32 %v1600, %v1641
      %1747 = vadd.xlane.f32.xlu0 %v1746
      %v1748 = vpop.xlane.xlu0 %1747
      %v1749 = vmul.f32 %v1727, %v699
      %v1750 = vmul.f32 %v1730, %v699
      %v1751 = vmul.f32 %v1733, %v699
      %v1752 = vmul.f32 %v1736, %v699
      %v1753 = vmul.f32 %v1739, %v699
      %v1754 = vmul.f32 %v1742, %v699
      %v1755 = vmul.f32 %v1745, %v699
      %v1756 = vmul.f32 %v1748, %v699
      %v1757 = vmul.f32 %v1579, %v1579
      %v1758 = vmul.f32 %v1620, %v1620
      %v1759 = vmul.f32 %v1582, %v1582
      %v1760 = vmul.f32 %v1623, %v1623
      %v1761 = vmul.f32 %v1585, %v1585
      %v1762 = vmul.f32 %v1626, %v1626
      %v1763 = vmul.f32 %v1588, %v1588
      %v1764 = vmul.f32 %v1629, %v1629
      %v1765 = vmul.f32 %v1591, %v1591
      %v1766 = vmul.f32 %v1632, %v1632
      %v1767 = vmul.f32 %v1594, %v1594
      %v1768 = vmul.f32 %v1635, %v1635
      %v1769 = vmul.f32 %v1597, %v1597
      %v1770 = vmul.f32 %v1638, %v1638
      %v1771 = vmul.f32 %v1600, %v1600
      %v1772 = vmul.f32 %v1641, %v1641
      %v1773 = vadd.f32 %v1757, %v1758
      %1774 = vadd.xlane.f32.xlu0 %v1773
      %v1775 = vpop.xlane.xlu0 %1774
      %v1776 = vadd.f32 %v1759, %v1760
      %1777 = vadd.xlane.f32.xlu0 %v1776
      %v1778 = vpop.xlane.xlu0 %1777
      %v1779 = vadd.f32 %v1761, %v1762
      %1780 = vadd.xlane.f32.xlu0 %v1779
      %v1781 = vpop.xlane.xlu0 %1780
      %v1782 = vadd.f32 %v1763, %v1764
      %1783 = vadd.xlane.f32.xlu0 %v1782
      %v1784 = vpop.xlane.xlu0 %1783
      %v1785 = vadd.f32 %v1765, %v1766
      %1786 = vadd.xlane.f32.xlu0 %v1785
      %v1787 = vpop.xlane.xlu0 %1786
      %v1788 = vadd.f32 %v1767, %v1768
      %1789 = vadd.xlane.f32.xlu0 %v1788
      %v1790 = vpop.xlane.xlu0 %1789
      %v1791 = vadd.f32 %v1769, %v1770
      %1792 = vadd.xlane.f32.xlu0 %v1791
      %v1793 = vpop.xlane.xlu0 %1792
      %v1794 = vadd.f32 %v1771, %v1772
      %1795 = vadd.xlane.f32.xlu0 %v1794
      %v1796 = vpop.xlane.xlu0 %1795
      %v1797 = vmul.f32 %v1775, %v699
      %v1798 = vmul.f32 %v1778, %v699
      %v1799 = vmul.f32 %v1781, %v699
      %v1800 = vmul.f32 %v1784, %v699
      %v1801 = vmul.f32 %v1787, %v699
      %v1802 = vmul.f32 %v1790, %v699
      %v1803 = vmul.f32 %v1793, %v699
      %v1804 = vmul.f32 %v1796, %v699
      %v1805 = vsub.f32 %v1579, %v1749
      %v1806 = vsub.f32 %v1620, %v1749
      %v1807 = vsub.f32 %v1582, %v1750
      %v1808 = vsub.f32 %v1623, %v1750
      %v1809 = vsub.f32 %v1585, %v1751
      %v1810 = vsub.f32 %v1626, %v1751
      %v1811 = vsub.f32 %v1588, %v1752
      %v1812 = vsub.f32 %v1629, %v1752
      %v1813 = vsub.f32 %v1591, %v1753
      %v1814 = vsub.f32 %v1632, %v1753
      %v1815 = vsub.f32 %v1594, %v1754
      %v1816 = vsub.f32 %v1635, %v1754
      %v1817 = vsub.f32 %v1597, %v1755
      %v1818 = vsub.f32 %v1638, %v1755
      %v1819 = vsub.f32 %v1600, %v1756
      %v1820 = vsub.f32 %v1641, %v1756
      %v1821 = vmul.f32 %v1749, %v1749
      %v1822 = vmul.f32 %v1750, %v1750
      %v1823 = vmul.f32 %v1751, %v1751
      %v1824 = vmul.f32 %v1752, %v1752
      %v1825 = vmul.f32 %v1753, %v1753
      %v1826 = vmul.f32 %v1754, %v1754
      %v1827 = vmul.f32 %v1755, %v1755
      %v1828 = vmul.f32 %v1756, %v1756
      %v1829 = vsub.f32 %v1797, %v1821
      %v1830 = vsub.f32 %v1798, %v1822
      %v1831 = vsub.f32 %v1799, %v1823
      %v1832 = vsub.f32 %v1800, %v1824
      %v1833 = vsub.f32 %v1801, %v1825
      %v1834 = vsub.f32 %v1802, %v1826
      %v1835 = vsub.f32 %v1803, %v1827
      %v1836 = vsub.f32 %v1804, %v1828
      %v1837 = vadd.f32 %v1829, 1e-05
      %v1838 = vadd.f32 %v1830, 1e-05
      %v1839 = vadd.f32 %v1831, 1e-05
      %v1840 = vadd.f32 %v1832, 1e-05
      %v1841 = vadd.f32 %v1833, 1e-05
      %v1842 = vadd.f32 %v1834, 1e-05
      %v1843 = vadd.f32 %v1835, 1e-05
      %v1844 = vadd.f32 %v1836, 1e-05
      %v1845 = vrsqrt.pop %v1837
      %v1846 = vmul.f32 %v1845, %v1837
      %v1847 = vmul.f32 %v1846, %v1845
      %v1848 = vmul.f32 0.5, %v1847
      %v1849 = vsub.f32 1.5, %v1848
      %v1850 = vmul.f32 %v1845, %v1849
      %vm1851 = vweird.f32 %v1837
      %vm1852 = vweird.f32 %v1845
      %vm1853 = vmor %vm1851, %vm1852
      %v1854 = vsel %vm1853, %v1845, %v1850
      %v1855 = vrsqrt.pop %v1838
      %v1856 = vmul.f32 %v1855, %v1838
      %v1857 = vmul.f32 %v1856, %v1855
      %v1858 = vmul.f32 0.5, %v1857
      %v1859 = vsub.f32 1.5, %v1858
      %v1860 = vmul.f32 %v1855, %v1859
      %vm1861 = vweird.f32 %v1838
      %vm1862 = vweird.f32 %v1855
      %vm1863 = vmor %vm1861, %vm1862
      %v1864 = vsel %vm1863, %v1855, %v1860
      %v1865 = vrsqrt.pop %v1839
      %v1866 = vmul.f32 %v1865, %v1839
      %v1867 = vmul.f32 %v1866, %v1865
      %v1868 = vmul.f32 0.5, %v1867
      %v1869 = vsub.f32 1.5, %v1868
      %v1870 = vmul.f32 %v1865, %v1869
      %vm1871 = vweird.f32 %v1839
      %vm1872 = vweird.f32 %v1865
      %vm1873 = vmor %vm1871, %vm1872
      %v1874 = vsel %vm1873, %v1865, %v1870
      %v1875 = vrsqrt.pop %v1840
      %v1876 = vmul.f32 %v1875, %v1840
      %v1877 = vmul.f32 %v1876, %v1875
      %v1878 = vmul.f32 0.5, %v1877
      %v1879 = vsub.f32 1.5, %v1878
      %v1880 = vmul.f32 %v1875, %v1879
      %vm1881 = vweird.f32 %v1840
      %vm1882 = vweird.f32 %v1875
      %vm1883 = vmor %vm1881, %vm1882
      %v1884 = vsel %vm1883, %v1875, %v1880
      %v1885 = vrsqrt.pop %v1841
      %v1886 = vmul.f32 %v1885, %v1841
      %v1887 = vmul.f32 %v1886, %v1885
      %v1888 = vmul.f32 0.5, %v1887
      %v1889 = vsub.f32 1.5, %v1888
      %v1890 = vmul.f32 %v1885, %v1889
      %vm1891 = vweird.f32 %v1841
      %vm1892 = vweird.f32 %v1885
      %vm1893 = vmor %vm1891, %vm1892
      %v1894 = vsel %vm1893, %v1885, %v1890
      %v1895 = vrsqrt.pop %v1842
      %v1896 = vmul.f32 %v1895, %v1842
      %v1897 = vmul.f32 %v1896, %v1895
      %v1898 = vmul.f32 0.5, %v1897
      %v1899 = vsub.f32 1.5, %v1898
      %v1900 = vmul.f32 %v1895, %v1899
      %vm1901 = vweird.f32 %v1842
      %vm1902 = vweird.f32 %v1895
      %vm1903 = vmor %vm1901, %vm1902
      %v1904 = vsel %vm1903, %v1895, %v1900
      %v1905 = vrsqrt.pop %v1843
      %v1906 = vmul.f32 %v1905, %v1843
      %v1907 = vmul.f32 %v1906, %v1905
      %v1908 = vmul.f32 0.5, %v1907
      %v1909 = vsub.f32 1.5, %v1908
      %v1910 = vmul.f32 %v1905, %v1909
      %vm1911 = vweird.f32 %v1843
      %vm1912 = vweird.f32 %v1905
      %vm1913 = vmor %vm1911, %vm1912
      %v1914 = vsel %vm1913, %v1905, %v1910
      %v1915 = vrsqrt.pop %v1844
      %v1916 = vmul.f32 %v1915, %v1844
      %v1917 = vmul.f32 %v1916, %v1915
      %v1918 = vmul.f32 0.5, %v1917
      %v1919 = vsub.f32 1.5, %v1918
      %v1920 = vmul.f32 %v1915, %v1919
      %vm1921 = vweird.f32 %v1844
      %vm1922 = vweird.f32 %v1915
      %vm1923 = vmor %vm1921, %vm1922
      %v1924 = vsel %vm1923, %v1915, %v1920
      %v1925 = vmul.f32 %v1805, %v1854
      %v1926 = vmul.f32 %v1806, %v1854
      %v1927 = vmul.f32 %v1807, %v1864
      %v1928 = vmul.f32 %v1808, %v1864
      %v1929 = vmul.f32 %v1809, %v1874
      %v1930 = vmul.f32 %v1810, %v1874
      %v1931 = vmul.f32 %v1811, %v1884
      %v1932 = vmul.f32 %v1812, %v1884
      %v1933 = vmul.f32 %v1813, %v1894
      %v1934 = vmul.f32 %v1814, %v1894
      %v1935 = vmul.f32 %v1815, %v1904
      %v1936 = vmul.f32 %v1816, %v1904
      %v1937 = vmul.f32 %v1817, %v1914
      %v1938 = vmul.f32 %v1818, %v1914
      %v1939 = vmul.f32 %v1819, %v1924
      %v1940 = vmul.f32 %v1820, %v1924
      %v1941 = vadd.f32 %v1661, %v1702
      %1942 = vadd.xlane.f32.xlu0 %v1941
      %v1943 = vpop.xlane.xlu0 %1942
      %v1944 = vadd.f32 %v1664, %v1705
      %1945 = vadd.xlane.f32.xlu0 %v1944
      %v1946 = vpop.xlane.xlu0 %1945
      %v1947 = vadd.f32 %v1667, %v1708
      %1948 = vadd.xlane.f32.xlu0 %v1947
      %v1949 = vpop.xlane.xlu0 %1948
      %v1950 = vadd.f32 %v1670, %v1711
      %1951 = vadd.xlane.f32.xlu0 %v1950
      %v1952 = vpop.xlane.xlu0 %1951
      %v1953 = vadd.f32 %v1673, %v1714
      %1954 = vadd.xlane.f32.xlu0 %v1953
      %v1955 = vpop.xlane.xlu0 %1954
      %v1956 = vadd.f32 %v1676, %v1717
      %1957 = vadd.xlane.f32.xlu0 %v1956
      %v1958 = vpop.xlane.xlu0 %1957
      %v1959 = vadd.f32 %v1679, %v1720
      %1960 = vadd.xlane.f32.xlu0 %v1959
      %v1961 = vpop.xlane.xlu0 %1960
      %v1962 = vadd.f32 %v1682, %v1723
      %1963 = vadd.xlane.f32.xlu0 %v1962
      %v1964 = vpop.xlane.xlu0 %1963
      %v1965 = vmul.f32 %v1943, %v699
      %v1966 = vmul.f32 %v1946, %v699
      %v1967 = vmul.f32 %v1949, %v699
      %v1968 = vmul.f32 %v1952, %v699
      %v1969 = vmul.f32 %v1955, %v699
      %v1970 = vmul.f32 %v1958, %v699
      %v1971 = vmul.f32 %v1961, %v699
      %v1972 = vmul.f32 %v1964, %v699
      %v1973 = vmul.f32 %v1661, %v1661
      %v1974 = vmul.f32 %v1702, %v1702
      %v1975 = vmul.f32 %v1664, %v1664
      %v1976 = vmul.f32 %v1705, %v1705
      %v1977 = vmul.f32 %v1667, %v1667
      %v1978 = vmul.f32 %v1708, %v1708
      %v1979 = vmul.f32 %v1670, %v1670
      %v1980 = vmul.f32 %v1711, %v1711
      %v1981 = vmul.f32 %v1673, %v1673
      %v1982 = vmul.f32 %v1714, %v1714
      %v1983 = vmul.f32 %v1676, %v1676
      %v1984 = vmul.f32 %v1717, %v1717
      %v1985 = vmul.f32 %v1679, %v1679
      %v1986 = vmul.f32 %v1720, %v1720
      %v1987 = vmul.f32 %v1682, %v1682
      %v1988 = vmul.f32 %v1723, %v1723
      %v1989 = vadd.f32 %v1973, %v1974
      %1990 = vadd.xlane.f32.xlu0 %v1989
      %v1991 = vpop.xlane.xlu0 %1990
      %v1992 = vadd.f32 %v1975, %v1976
      %1993 = vadd.xlane.f32.xlu0 %v1992
      %v1994 = vpop.xlane.xlu0 %1993
      %v1995 = vadd.f32 %v1977, %v1978
      %1996 = vadd.xlane.f32.xlu0 %v1995
      %v1997 = vpop.xlane.xlu0 %1996
      %v1998 = vadd.f32 %v1979, %v1980
      %1999 = vadd.xlane.f32.xlu0 %v1998
      %v2000 = vpop.xlane.xlu0 %1999
      %v2001 = vadd.f32 %v1981, %v1982
      %2002 = vadd.xlane.f32.xlu0 %v2001
      %v2003 = vpop.xlane.xlu0 %2002
      %v2004 = vadd.f32 %v1983, %v1984
      %2005 = vadd.xlane.f32.xlu0 %v2004
      %v2006 = vpop.xlane.xlu0 %2005
      %v2007 = vadd.f32 %v1985, %v1986
      %2008 = vadd.xlane.f32.xlu0 %v2007
      %v2009 = vpop.xlane.xlu0 %2008
      %v2010 = vadd.f32 %v1987, %v1988
      %2011 = vadd.xlane.f32.xlu0 %v2010
      %v2012 = vpop.xlane.xlu0 %2011
      %v2013 = vmul.f32 %v1991, %v699
      %v2014 = vmul.f32 %v1994, %v699
      %v2015 = vmul.f32 %v1997, %v699
      %v2016 = vmul.f32 %v2000, %v699
      %v2017 = vmul.f32 %v2003, %v699
      %v2018 = vmul.f32 %v2006, %v699
      %v2019 = vmul.f32 %v2009, %v699
      %v2020 = vmul.f32 %v2012, %v699
      %v2021 = vsub.f32 %v1661, %v1965
      %v2022 = vsub.f32 %v1702, %v1965
      %v2023 = vsub.f32 %v1664, %v1966
      %v2024 = vsub.f32 %v1705, %v1966
      %v2025 = vsub.f32 %v1667, %v1967
      %v2026 = vsub.f32 %v1708, %v1967
      %v2027 = vsub.f32 %v1670, %v1968
      %v2028 = vsub.f32 %v1711, %v1968
      %v2029 = vsub.f32 %v1673, %v1969
      %v2030 = vsub.f32 %v1714, %v1969
      %v2031 = vsub.f32 %v1676, %v1970
      %v2032 = vsub.f32 %v1717, %v1970
      %v2033 = vsub.f32 %v1679, %v1971
      %v2034 = vsub.f32 %v1720, %v1971
      %v2035 = vsub.f32 %v1682, %v1972
      %v2036 = vsub.f32 %v1723, %v1972
      %v2037 = vmul.f32 %v1965, %v1965
      %v2038 = vmul.f32 %v1966, %v1966
      %v2039 = vmul.f32 %v1967, %v1967
      %v2040 = vmul.f32 %v1968, %v1968
      %v2041 = vmul.f32 %v1969, %v1969
      %v2042 = vmul.f32 %v1970, %v1970
      %v2043 = vmul.f32 %v1971, %v1971
      %v2044 = vmul.f32 %v1972, %v1972
      %v2045 = vsub.f32 %v2013, %v2037
      %v2046 = vsub.f32 %v2014, %v2038
      %v2047 = vsub.f32 %v2015, %v2039
      %v2048 = vsub.f32 %v2016, %v2040
      %v2049 = vsub.f32 %v2017, %v2041
      %v2050 = vsub.f32 %v2018, %v2042
      %v2051 = vsub.f32 %v2019, %v2043
      %v2052 = vsub.f32 %v2020, %v2044
      %v2053 = vadd.f32 %v2045, 1e-05
      %v2054 = vadd.f32 %v2046, 1e-05
      %v2055 = vadd.f32 %v2047, 1e-05
      %v2056 = vadd.f32 %v2048, 1e-05
      %v2057 = vadd.f32 %v2049, 1e-05
      %v2058 = vadd.f32 %v2050, 1e-05
      %v2059 = vadd.f32 %v2051, 1e-05
      %v2060 = vadd.f32 %v2052, 1e-05
      %v2061 = vrsqrt.pop %v2053
      %v2062 = vmul.f32 %v2061, %v2053
      %v2063 = vmul.f32 %v2062, %v2061
      %v2064 = vmul.f32 0.5, %v2063
      %v2065 = vsub.f32 1.5, %v2064
      %v2066 = vmul.f32 %v2061, %v2065
      %vm2067 = vweird.f32 %v2053
      %vm2068 = vweird.f32 %v2061
      %vm2069 = vmor %vm2067, %vm2068
      %v2070 = vsel %vm2069, %v2061, %v2066
      %v2071 = vrsqrt.pop %v2054
      %v2072 = vmul.f32 %v2071, %v2054
      %v2073 = vmul.f32 %v2072, %v2071
      %v2074 = vmul.f32 0.5, %v2073
      %v2075 = vsub.f32 1.5, %v2074
      %v2076 = vmul.f32 %v2071, %v2075
      %vm2077 = vweird.f32 %v2054
      %vm2078 = vweird.f32 %v2071
      %vm2079 = vmor %vm2077, %vm2078
      %v2080 = vsel %vm2079, %v2071, %v2076
      %v2081 = vrsqrt.pop %v2055
      %v2082 = vmul.f32 %v2081, %v2055
      %v2083 = vmul.f32 %v2082, %v2081
      %v2084 = vmul.f32 0.5, %v2083
      %v2085 = vsub.f32 1.5, %v2084
      %v2086 = vmul.f32 %v2081, %v2085
      %vm2087 = vweird.f32 %v2055
      %vm2088 = vweird.f32 %v2081
      %vm2089 = vmor %vm2087, %vm2088
      %v2090 = vsel %vm2089, %v2081, %v2086
      %v2091 = vrsqrt.pop %v2056
      %v2092 = vmul.f32 %v2091, %v2056
      %v2093 = vmul.f32 %v2092, %v2091
      %v2094 = vmul.f32 0.5, %v2093
      %v2095 = vsub.f32 1.5, %v2094
      %v2096 = vmul.f32 %v2091, %v2095
      %vm2097 = vweird.f32 %v2056
      %vm2098 = vweird.f32 %v2091
      %vm2099 = vmor %vm2097, %vm2098
      %v2100 = vsel %vm2099, %v2091, %v2096
      %v2101 = vrsqrt.pop %v2057
      %v2102 = vmul.f32 %v2101, %v2057
      %v2103 = vmul.f32 %v2102, %v2101
      %v2104 = vmul.f32 0.5, %v2103
      %v2105 = vsub.f32 1.5, %v2104
      %v2106 = vmul.f32 %v2101, %v2105
      %vm2107 = vweird.f32 %v2057
      %vm2108 = vweird.f32 %v2101
      %vm2109 = vmor %vm2107, %vm2108
      %v2110 = vsel %vm2109, %v2101, %v2106
      %v2111 = vrsqrt.pop %v2058
      %v2112 = vmul.f32 %v2111, %v2058
      %v2113 = vmul.f32 %v2112, %v2111
      %v2114 = vmul.f32 0.5, %v2113
      %v2115 = vsub.f32 1.5, %v2114
      %v2116 = vmul.f32 %v2111, %v2115
      %vm2117 = vweird.f32 %v2058
      %vm2118 = vweird.f32 %v2111
      %vm2119 = vmor %vm2117, %vm2118
      %v2120 = vsel %vm2119, %v2111, %v2116
      %v2121 = vrsqrt.pop %v2059
      %v2122 = vmul.f32 %v2121, %v2059
      %v2123 = vmul.f32 %v2122, %v2121
      %v2124 = vmul.f32 0.5, %v2123
      %v2125 = vsub.f32 1.5, %v2124
      %v2126 = vmul.f32 %v2121, %v2125
      %vm2127 = vweird.f32 %v2059
      %vm2128 = vweird.f32 %v2121
      %vm2129 = vmor %vm2127, %vm2128
      %v2130 = vsel %vm2129, %v2121, %v2126
      %v2131 = vrsqrt.pop %v2060
      %v2132 = vmul.f32 %v2131, %v2060
      %v2133 = vmul.f32 %v2132, %v2131
      %v2134 = vmul.f32 0.5, %v2133
      %v2135 = vsub.f32 1.5, %v2134
      %v2136 = vmul.f32 %v2131, %v2135
      %vm2137 = vweird.f32 %v2060
      %vm2138 = vweird.f32 %v2131
      %vm2139 = vmor %vm2137, %vm2138
      %v2140 = vsel %vm2139, %v2131, %v2136
      %v2141 = vmul.f32 %v2021, %v2070
      %v2142 = vmul.f32 %v2022, %v2070
      %v2143 = vmul.f32 %v2023, %v2080
      %v2144 = vmul.f32 %v2024, %v2080
      %v2145 = vmul.f32 %v2025, %v2090
      %v2146 = vmul.f32 %v2026, %v2090
      %v2147 = vmul.f32 %v2027, %v2100
      %v2148 = vmul.f32 %v2028, %v2100
      %v2149 = vmul.f32 %v2029, %v2110
      %v2150 = vmul.f32 %v2030, %v2110
      %v2151 = vmul.f32 %v2031, %v2120
      %v2152 = vmul.f32 %v2032, %v2120
      %v2153 = vmul.f32 %v2033, %v2130
      %v2154 = vmul.f32 %v2034, %v2130
      %v2155 = vmul.f32 %v2035, %v2140
      %v2156 = vmul.f32 %v2036, %v2140
      %vm2157 = vcmp.ge.f32.partialorder %v1925, 0.0
      %vm2158 = vcmp.ge.f32.partialorder %v1926, 0.0
      %vm2159 = vcmp.ge.f32.partialorder %v2141, 0.0
      %vm2160 = vcmp.ge.f32.partialorder %v2142, 0.0
      %vm2161 = vcmp.ge.f32.partialorder %v1927, 0.0
      %vm2162 = vcmp.ge.f32.partialorder %v1928, 0.0
      %vm2163 = vcmp.ge.f32.partialorder %v2143, 0.0
      %vm2164 = vcmp.ge.f32.partialorder %v2144, 0.0
      %vm2165 = vcmp.ge.f32.partialorder %v1929, 0.0
      %vm2166 = vcmp.ge.f32.partialorder %v1930, 0.0
      %vm2167 = vcmp.ge.f32.partialorder %v2145, 0.0
      %vm2168 = vcmp.ge.f32.partialorder %v2146, 0.0
      %vm2169 = vcmp.ge.f32.partialorder %v1931, 0.0
      %vm2170 = vcmp.ge.f32.partialorder %v1932, 0.0
      %vm2171 = vcmp.ge.f32.partialorder %v2147, 0.0
      %vm2172 = vcmp.ge.f32.partialorder %v2148, 0.0
      %vm2173 = vcmp.ge.f32.partialorder %v1933, 0.0
      %vm2174 = vcmp.ge.f32.partialorder %v1934, 0.0
      %vm2175 = vcmp.ge.f32.partialorder %v2149, 0.0
      %vm2176 = vcmp.ge.f32.partialorder %v2150, 0.0
      %vm2177 = vcmp.ge.f32.partialorder %v1935, 0.0
      %vm2178 = vcmp.ge.f32.partialorder %v1936, 0.0
      %vm2179 = vcmp.ge.f32.partialorder %v2151, 0.0
      %vm2180 = vcmp.ge.f32.partialorder %v2152, 0.0
      %vm2181 = vcmp.ge.f32.partialorder %v1937, 0.0
      %vm2182 = vcmp.ge.f32.partialorder %v1938, 0.0
      %vm2183 = vcmp.ge.f32.partialorder %v2153, 0.0
      %vm2184 = vcmp.ge.f32.partialorder %v2154, 0.0
      %vm2185 = vcmp.ge.f32.partialorder %v1939, 0.0
      %vm2186 = vcmp.ge.f32.partialorder %v1940, 0.0
      %vm2187 = vcmp.ge.f32.partialorder %v2155, 0.0
      %vm2188 = vcmp.ge.f32.partialorder %v2156, 0.0
      %v2189 = vmul.f32 %v1925, 0.01
      %v2190 = vmul.f32 %v1926, 0.01
      %v2191 = vmul.f32 %v2141, 0.01
      %v2192 = vmul.f32 %v2142, 0.01
      %v2193 = vmul.f32 %v1927, 0.01
      %v2194 = vmul.f32 %v1928, 0.01
      %v2195 = vmul.f32 %v2143, 0.01
      %v2196 = vmul.f32 %v2144, 0.01
      %v2197 = vmul.f32 %v1929, 0.01
      %v2198 = vmul.f32 %v1930, 0.01
      %v2199 = vmul.f32 %v2145, 0.01
      %v2200 = vmul.f32 %v2146, 0.01
      %v2201 = vmul.f32 %v1931, 0.01
      %v2202 = vmul.f32 %v1932, 0.01
      %v2203 = vmul.f32 %v2147, 0.01
      %v2204 = vmul.f32 %v2148, 0.01
      %v2205 = vmul.f32 %v1933, 0.01
      %v2206 = vmul.f32 %v1934, 0.01
      %v2207 = vmul.f32 %v2149, 0.01
      %v2208 = vmul.f32 %v2150, 0.01
      %v2209 = vmul.f32 %v1935, 0.01
      %v2210 = vmul.f32 %v1936, 0.01
      %v2211 = vmul.f32 %v2151, 0.01
      %v2212 = vmul.f32 %v2152, 0.01
      %v2213 = vmul.f32 %v1937, 0.01
      %v2214 = vmul.f32 %v1938, 0.01
      %v2215 = vmul.f32 %v2153, 0.01
      %v2216 = vmul.f32 %v2154, 0.01
      %v2217 = vmul.f32 %v1939, 0.01
      %v2218 = vmul.f32 %v1940, 0.01
      %v2219 = vmul.f32 %v2155, 0.01
      %v2220 = vmul.f32 %v2156, 0.01
      %v2221 = vsel %vm2157, %v1925, %v2189
      %v2222 = vsel %vm2158, %v1926, %v2190
      %v2223 = vsel %vm2159, %v2141, %v2191
      %v2224 = vsel %vm2160, %v2142, %v2192
      %v2225 = vsel %vm2161, %v1927, %v2193
      %v2226 = vsel %vm2162, %v1928, %v2194
      %v2227 = vsel %vm2163, %v2143, %v2195
      %v2228 = vsel %vm2164, %v2144, %v2196
      %v2229 = vsel %vm2165, %v1929, %v2197
      %v2230 = vsel %vm2166, %v1930, %v2198
      %v2231 = vsel %vm2167, %v2145, %v2199
      %v2232 = vsel %vm2168, %v2146, %v2200
      %v2233 = vsel %vm2169, %v1931, %v2201
      %v2234 = vsel %vm2170, %v1932, %v2202
      %v2235 = vsel %vm2171, %v2147, %v2203
      %v2236 = vsel %vm2172, %v2148, %v2204
      %v2237 = vsel %vm2173, %v1933, %v2205
      %v2238 = vsel %vm2174, %v1934, %v2206
      %v2239 = vsel %vm2175, %v2149, %v2207
      %v2240 = vsel %vm2176, %v2150, %v2208
      %v2241 = vsel %vm2177, %v1935, %v2209
      %v2242 = vsel %vm2178, %v1936, %v2210
      %v2243 = vsel %vm2179, %v2151, %v2211
      %v2244 = vsel %vm2180, %v2152, %v2212
      %v2245 = vsel %vm2181, %v1937, %v2213
      %v2246 = vsel %vm2182, %v1938, %v2214
      %v2247 = vsel %vm2183, %v2153, %v2215
      %v2248 = vsel %vm2184, %v2154, %v2216
      %v2249 = vsel %vm2185, %v1939, %v2217
      %v2250 = vsel %vm2186, %v1940, %v2218
      %v2251 = vsel %vm2187, %v2155, %v2219
      %v2252 = vsel %vm2188, %v2156, %v2220
      %s2253 = scalar_lea.vmem %s6, 8
      %v2254 = vld [vmem:[%s2253] sm:$0x3f]
      %s2255 = scalar_lea.vmem %s7, 8
      %v2256 = vld [vmem:[%s2255] sm:$0x3f]
      %2258 = vset.pattern.permute.xlu0 0
      %2259 = vperm.xlu0 %2258, %v2256
      %v2260 = vpop.permute.xlu0 %2259
      %v2263 = vsel %vm1211, %v2254, 0
      %2265 = vmatpush.msra.mxu0 0.0
      %2266 = vmatpush.msra.mxu0 0.0
      %2267 = vmatpush.msra.mxu0 0.0
      %2268 = vmatpush.msra.mxu0 0.0
      %2269 = vmatpush.msra.mxu0 0.0
      %2270 = vmatpush.msra.mxu0 0.0
      %2271 = vmatpush.msra.mxu0 0.0
      %2272 = vmatpush.msra.mxu0 0.0
      %2273 = vmatpush.msra.mxu0 %v2249
      %2274 = vmatpush.msra.mxu0 %v2245
      %2275 = vmatpush.msra.mxu0 %v2241
      %2276 = vmatpush.msra.mxu0 %v2237
      %2277 = vmatpush.msra.mxu0 %v2233
      %2278 = vmatpush.msra.mxu0 %v2229
      %2279 = vmatpush.msra.mxu0 %v2225
      %2280 = vmatpush.msra.mxu0 %v2221
      %2281 = vmatmul.f32.gmra.mxu0 %v2263
      %v2282 = vpop.f32.mrf.mxu0
      %v2283 = vadd.f32 %v2260, %v2282
      %2284 = vdwg.mxu0
      %2285 = vmatpush.msra.mxu0 0.0
      %2286 = vmatpush.msra.mxu0 0.0
      %2287 = vmatpush.msra.mxu0 0.0
      %2288 = vmatpush.msra.mxu0 0.0
      %2289 = vmatpush.msra.mxu0 0.0
      %2290 = vmatpush.msra.mxu0 0.0
      %2291 = vmatpush.msra.mxu0 0.0
      %2292 = vmatpush.msra.mxu0 0.0
      %2293 = vmatpush.msra.mxu0 %v2250
      %2294 = vmatpush.msra.mxu0 %v2246
      %2295 = vmatpush.msra.mxu0 %v2242
      %2296 = vmatpush.msra.mxu0 %v2238
      %2297 = vmatpush.msra.mxu0 %v2234
      %2298 = vmatpush.msra.mxu0 %v2230
      %2299 = vmatpush.msra.mxu0 %v2226
      %2300 = vmatpush.msra.mxu0 %v2222
      %2301 = vmatmul.f32.gmra.mxu0 %v2263
      %v2302 = vpop.f32.mrf.mxu0
      %v2303 = vadd.f32 %v2260, %v2302
      %2304 = vdwg.mxu0
      %2305 = vmatpush.msra.mxu0 0.0
      %2306 = vmatpush.msra.mxu0 0.0
      %2307 = vmatpush.msra.mxu0 0.0
      %2308 = vmatpush.msra.mxu0 0.0
      %2309 = vmatpush.msra.mxu0 0.0
      %2310 = vmatpush.msra.mxu0 0.0
      %2311 = vmatpush.msra.mxu0 0.0
      %2312 = vmatpush.msra.mxu0 0.0
      %2313 = vmatpush.msra.mxu0 %v2251
      %2314 = vmatpush.msra.mxu0 %v2247
      %2315 = vmatpush.msra.mxu0 %v2243
      %2316 = vmatpush.msra.mxu0 %v2239
      %2317 = vmatpush.msra.mxu0 %v2235
      %2318 = vmatpush.msra.mxu0 %v2231
      %2319 = vmatpush.msra.mxu0 %v2227
      %2320 = vmatpush.msra.mxu0 %v2223
      %2321 = vmatmul.f32.gmra.mxu0 %v2263
      %v2322 = vpop.f32.mrf.mxu0
      %v2323 = vadd.f32 %v2260, %v2322
      %2324 = vdwg.mxu0
      %2325 = vmatpush.msra.mxu0 0.0
      %2326 = vmatpush.msra.mxu0 0.0
      %2327 = vmatpush.msra.mxu0 0.0
      %2328 = vmatpush.msra.mxu0 0.0
      %2329 = vmatpush.msra.mxu0 0.0
      %2330 = vmatpush.msra.mxu0 0.0
      %2331 = vmatpush.msra.mxu0 0.0
      %2332 = vmatpush.msra.mxu0 0.0
      %2333 = vmatpush.msra.mxu0 %v2252
      %2334 = vmatpush.msra.mxu0 %v2248
      %2335 = vmatpush.msra.mxu0 %v2244
      %2336 = vmatpush.msra.mxu0 %v2240
      %2337 = vmatpush.msra.mxu0 %v2236
      %2338 = vmatpush.msra.mxu0 %v2232
      %2339 = vmatpush.msra.mxu0 %v2228
      %2340 = vmatpush.msra.mxu0 %v2224
      %2341 = vmatmul.f32.gmra.mxu0 %v2263
      %v2342 = vpop.f32.mrf.mxu0
      %v2343 = vadd.f32 %v2260, %v2342
      %2344 = vdwg.mxu0
      %v2345 = vmax.f32 %v2283, -10.0
      %v2346 = vmax.f32 %v2303, -10.0
      %v2347 = vmax.f32 %v2323, -10.0
      %v2348 = vmax.f32 %v2343, -10.0
      %v2349 = vmin.f32 %v2345, 10.0
      %v2350 = vmin.f32 %v2346, 10.0
      %v2351 = vmin.f32 %v2347, 10.0
      %v2352 = vmin.f32 %v2348, 10.0
      %v2353 = vadd.f32 %v2349, 0.0
      %v2354 = vadd.f32 %v2350, 0.0
      %v2355 = vadd.f32 %v2351, 0.0
      %v2356 = vadd.f32 %v2352, 0.0
      %s2357 = scalar_lea.vmem %s2, 4
      %v2358 = vld [vmem:[%s2357] sm:$0x7]
      %vm2359 = vcmp.gt.f32.partialorder %v2358, 0.5
      %v2364 = vrot.slane %v2283, 3
      %v2365 = vrot.slane %v2303, 3
      %v2366 = vrot.slane %v2323, 3
      %v2367 = vrot.slane %v2343, 3
      %v2372 = vsub.f32 %v1390, %v2364
      %v2373 = vsub.f32 %v1391, %v2365
      %v2374 = vsub.f32 %v1392, %v2366
      %v2375 = vsub.f32 %v1393, %v2367
      %v2376 = vsub.f32 0.0, %v2353
      %v2377 = vsub.f32 0.0, %v2354
      %v2378 = vsub.f32 0.0, %v2355
      %v2379 = vsub.f32 0.0, %v2356
      %v2380 = vmul.f32 %v2376, 1.442695
      %v2381 = vpow.pop %v2380
      %v2382 = vmul.f32 %v2377, 1.442695
      %v2383 = vpow.pop %v2382
      %v2384 = vmul.f32 %v2378, 1.442695
      %v2385 = vpow.pop %v2384
      %v2386 = vmul.f32 %v2379, 1.442695
      %v2387 = vpow.pop %v2386
      %v2388 = vmul.f32 %v2372, %v2381
      %v2389 = vmul.f32 %v2373, %v2383
      %v2390 = vmul.f32 %v2374, %v2385
      %v2391 = vmul.f32 %v2375, %v2387
      %v2392 = vsel %vm2359, 1, 0
      %2393 = vset.pattern.permute.xlu0 0
      %2394 = vperm.xlu0 %2393, %v2392
      %v2395 = vpop.permute.xlu0 %2394
      %vm2396 = vcmp.eq.s32.totalorder %v2395, 1
      %v2397 = vsel %vm2396, %v1390, %v2388
      %v2398 = vsel %vm2396, %v1391, %v2389
      %v2399 = vsel %vm2396, %v1392, %v2390
      %v2400 = vsel %vm2396, %v1393, %v2391
      %s2401 = scalar_lea.vmem %s3, 32
      %v2402 = vld [vmem:[%s2401] sm:$0xff]
      %v2403 = vld [vmem:[%s2401 + $0x8] sm:$0xff]
      %s2404 = scalar_lea.vmem %s4, 32
      %v2405 = vld [vmem:[%s2404] sm:$0xff]
      %v2406 = vld [vmem:[%s2404 + $0x8] sm:$0xff]
      %2408 = vset.pattern.permute.xlu0 0
      %2409 = vperm.xlu0 %2408, %v2405
      %v2410 = vpop.permute.xlu0 %2409
      %2413 = vset.pattern.permute.xlu0 0
      %2414 = vperm.xlu0 %2413, %v2406
      %v2415 = vpop.permute.xlu0 %2414
      %v2418 = vsel %vm356, %v2402, 0
      %v2421 = vsel %vm356, %v2403, 0
      %v2424 = vsel %vm363, %v2397, 0
      %v2427 = vsel %vm363, %v2398, 0
      %v2430 = vsel %vm363, %v2399, 0
      %v2433 = vsel %vm363, %v2400, 0
      %2435 = vmatpush.msra.mxu0 0.0
      %2436 = vmatpush.msra.mxu0 0.0
      %2437 = vmatpush.msra.mxu0 0.0
      %2438 = vmatpush.msra.mxu0 0.0
      %2439 = vmatpush.msra.mxu0 0.0
      %2440 = vmatpush.msra.mxu0 0.0
      %2441 = vmatpush.msra.mxu0 0.0
      %2442 = vmatpush.msra.mxu0 0.0
      %2443 = vmatpush.msra.mxu0 0.0
      %2444 = vmatpush.msra.mxu0 0.0
      %2445 = vmatpush.msra.mxu0 0.0
      %2446 = vmatpush.msra.mxu0 0.0
      %2447 = vmatpush.msra.mxu0 0.0
      %2448 = vmatpush.msra.mxu0 0.0
      %2449 = vmatpush.msra.mxu0 0.0
      %2450 = vmatpush.msra.mxu0 %v2424
      %2451 = vmatmul.f32.gmra.mxu0 %v2418
      %v2452 = vpop.f32.mrf.mxu0
      %v2453 = vadd.f32 %v2410, %v2452
      %2454 = vmatmul.f32.gmra.mxu0 %v2421
      %v2455 = vpop.f32.mrf.mxu0
      %v2456 = vadd.f32 %v2415, %v2455
      %2457 = vdwg.mxu0
      %2458 = vmatpush.msra.mxu0 0.0
      %2459 = vmatpush.msra.mxu0 0.0
      %2460 = vmatpush.msra.mxu0 0.0
      %2461 = vmatpush.msra.mxu0 0.0
      %2462 = vmatpush.msra.mxu0 0.0
      %2463 = vmatpush.msra.mxu0 0.0
      %2464 = vmatpush.msra.mxu0 0.0
      %2465 = vmatpush.msra.mxu0 0.0
      %2466 = vmatpush.msra.mxu0 0.0
      %2467 = vmatpush.msra.mxu0 0.0
      %2468 = vmatpush.msra.mxu0 0.0
      %2469 = vmatpush.msra.mxu0 0.0
      %2470 = vmatpush.msra.mxu0 0.0
      %2471 = vmatpush.msra.mxu0 0.0
      %2472 = vmatpush.msra.mxu0 0.0
      %2473 = vmatpush.msra.mxu0 %v2427
      %2474 = vmatmul.f32.gmra.mxu0 %v2418
      %v2475 = vpop.f32.mrf.mxu0
      %v2476 = vadd.f32 %v2410, %v2475
      %2477 = vmatmul.f32.gmra.mxu0 %v2421
      %v2478 = vpop.f32.mrf.mxu0
      %v2479 = vadd.f32 %v2415, %v2478
      %2480 = vdwg.mxu0
      %2481 = vmatpush.msra.mxu0 0.0
      %2482 = vmatpush.msra.mxu0 0.0
      %2483 = vmatpush.msra.mxu0 0.0
      %2484 = vmatpush.msra.mxu0 0.0
      %2485 = vmatpush.msra.mxu0 0.0
      %2486 = vmatpush.msra.mxu0 0.0
      %2487 = vmatpush.msra.mxu0 0.0
      %2488 = vmatpush.msra.mxu0 0.0
      %2489 = vmatpush.msra.mxu0 0.0
      %2490 = vmatpush.msra.mxu0 0.0
      %2491 = vmatpush.msra.mxu0 0.0
      %2492 = vmatpush.msra.mxu0 0.0
      %2493 = vmatpush.msra.mxu0 0.0
      %2494 = vmatpush.msra.mxu0 0.0
      %2495 = vmatpush.msra.mxu0 0.0
      %2496 = vmatpush.msra.mxu0 %v2430
      %2497 = vmatmul.f32.gmra.mxu0 %v2418
      %v2498 = vpop.f32.mrf.mxu0
      %v2499 = vadd.f32 %v2410, %v2498
      %2500 = vmatmul.f32.gmra.mxu0 %v2421
      %v2501 = vpop.f32.mrf.mxu0
      %v2502 = vadd.f32 %v2415, %v2501
      %2503 = vdwg.mxu0
      %2504 = vmatpush.msra.mxu0 0.0
      %2505 = vmatpush.msra.mxu0 0.0
      %2506 = vmatpush.msra.mxu0 0.0
      %2507 = vmatpush.msra.mxu0 0.0
      %2508 = vmatpush.msra.mxu0 0.0
      %2509 = vmatpush.msra.mxu0 0.0
      %2510 = vmatpush.msra.mxu0 0.0
      %2511 = vmatpush.msra.mxu0 0.0
      %2512 = vmatpush.msra.mxu0 0.0
      %2513 = vmatpush.msra.mxu0 0.0
      %2514 = vmatpush.msra.mxu0 0.0
      %2515 = vmatpush.msra.mxu0 0.0
      %2516 = vmatpush.msra.mxu0 0.0
      %2517 = vmatpush.msra.mxu0 0.0
      %2518 = vmatpush.msra.mxu0 0.0
      %2519 = vmatpush.msra.mxu0 %v2433
      %2520 = vmatmul.f32.gmra.mxu0 %v2418
      %v2521 = vpop.f32.mrf.mxu0
      %v2522 = vadd.f32 %v2410, %v2521
      %2523 = vmatmul.f32.gmra.mxu0 %v2421
      %v2524 = vpop.f32.mrf.mxu0
      %v2525 = vadd.f32 %v2415, %v2524
      %2526 = vdwg.mxu0
      %v2527 = vmax.f32 %v2453, 0.0
      %v2528 = vmax.f32 %v2476, 0.0
      %v2529 = vmax.f32 %v2499, 0.0
      %v2530 = vmax.f32 %v2522, 0.0
      %v2531 = vmax.f32 %v2456, 0.0
      %v2532 = vmax.f32 %v2479, 0.0
      %v2533 = vmax.f32 %v2502, 0.0
      %v2534 = vmax.f32 %v2525, 0.0
      %s2535 = scalar_lea.vmem %s5, 128
      %v2536 = vld [vmem:[%s2535] sm:$0xff]
      %v2537 = vld [vmem:[%s2535 + $0x8] sm:$0xff]
      %v2538 = vld [vmem:[%s2535 + $0x10] sm:$0xff]
      %v2539 = vld [vmem:[%s2535 + $0x18] sm:$0xff]
      %v2540 = vld [vmem:[%s2535 + $0x20] sm:$0xff]
      %v2541 = vld [vmem:[%s2535 + $0x28] sm:$0xff]
      %v2542 = vld [vmem:[%s2535 + $0x30] sm:$0xff]
      %v2543 = vld [vmem:[%s2535 + $0x38] sm:$0xff]
      %v2545 = vsel %vm480, %v2536, 0
      %v2548 = vsel %vm480, %v2537, 0
      %v2551 = vsel %vm480, %v2538, 0
      %v2554 = vsel %vm480, %v2539, 0
      %v2557 = vsel %vm480, %v2540, 0
      %v2560 = vsel %vm480, %v2541, 0
      %v2563 = vsel %vm480, %v2542, 0
      %v2566 = vsel %vm480, %v2543, 0
      %2568 = vmatpush.msra.mxu0 0.0
      %2569 = vmatpush.msra.mxu0 0.0
      %2570 = vmatpush.msra.mxu0 0.0
      %2571 = vmatpush.msra.mxu0 0.0
      %2572 = vmatpush.msra.mxu0 0.0
      %2573 = vmatpush.msra.mxu0 0.0
      %2574 = vmatpush.msra.mxu0 0.0
      %2575 = vmatpush.msra.mxu0 0.0
      %2576 = vmatpush.msra.mxu0 0.0
      %2577 = vmatpush.msra.mxu0 0.0
      %2578 = vmatpush.msra.mxu0 0.0
      %2579 = vmatpush.msra.mxu0 0.0
      %2580 = vmatpush.msra.mxu0 0.0
      %2581 = vmatpush.msra.mxu0 0.0
      %2582 = vmatpush.msra.mxu0 %v2531
      %2583 = vmatpush.msra.mxu0 %v2527
      %2584 = vmatmul.f32.gmra.mxu0 %v2545
      %v2585 = vpop.f32.mrf.mxu0
      %v2586 = vadd.f32 0.0, %v2585
      %2587 = vmatmul.f32.gmra.mxu0 %v2548
      %v2588 = vpop.f32.mrf.mxu0
      %v2589 = vadd.f32 0.0, %v2588
      %2590 = vmatmul.f32.gmra.mxu0 %v2551
      %v2591 = vpop.f32.mrf.mxu0
      %v2592 = vadd.f32 0.0, %v2591
      %2593 = vmatmul.f32.gmra.mxu0 %v2554
      %v2594 = vpop.f32.mrf.mxu0
      %v2595 = vadd.f32 0.0, %v2594
      %2596 = vmatmul.f32.gmra.mxu0 %v2557
      %v2597 = vpop.f32.mrf.mxu0
      %v2598 = vadd.f32 0.0, %v2597
      %2599 = vmatmul.f32.gmra.mxu0 %v2560
      %v2600 = vpop.f32.mrf.mxu0
      %v2601 = vadd.f32 0.0, %v2600
      %2602 = vmatmul.f32.gmra.mxu0 %v2563
      %v2603 = vpop.f32.mrf.mxu0
      %v2604 = vadd.f32 0.0, %v2603
      %2605 = vmatmul.f32.gmra.mxu0 %v2566
      %v2606 = vpop.f32.mrf.mxu0
      %v2607 = vadd.f32 0.0, %v2606
      %2608 = vdwg.mxu0
      %2609 = vmatpush.msra.mxu0 0.0
      %2610 = vmatpush.msra.mxu0 0.0
      %2611 = vmatpush.msra.mxu0 0.0
      %2612 = vmatpush.msra.mxu0 0.0
      %2613 = vmatpush.msra.mxu0 0.0
      %2614 = vmatpush.msra.mxu0 0.0
      %2615 = vmatpush.msra.mxu0 0.0
      %2616 = vmatpush.msra.mxu0 0.0
      %2617 = vmatpush.msra.mxu0 0.0
      %2618 = vmatpush.msra.mxu0 0.0
      %2619 = vmatpush.msra.mxu0 0.0
      %2620 = vmatpush.msra.mxu0 0.0
      %2621 = vmatpush.msra.mxu0 0.0
      %2622 = vmatpush.msra.mxu0 0.0
      %2623 = vmatpush.msra.mxu0 %v2532
      %2624 = vmatpush.msra.mxu0 %v2528
      %2625 = vmatmul.f32.gmra.mxu0 %v2545
      %v2626 = vpop.f32.mrf.mxu0
      %v2627 = vadd.f32 0.0, %v2626
      %2628 = vmatmul.f32.gmra.mxu0 %v2548
      %v2629 = vpop.f32.mrf.mxu0
      %v2630 = vadd.f32 0.0, %v2629
      %2631 = vmatmul.f32.gmra.mxu0 %v2551
      %v2632 = vpop.f32.mrf.mxu0
      %v2633 = vadd.f32 0.0, %v2632
      %2634 = vmatmul.f32.gmra.mxu0 %v2554
      %v2635 = vpop.f32.mrf.mxu0
      %v2636 = vadd.f32 0.0, %v2635
      %2637 = vmatmul.f32.gmra.mxu0 %v2557
      %v2638 = vpop.f32.mrf.mxu0
      %v2639 = vadd.f32 0.0, %v2638
      %2640 = vmatmul.f32.gmra.mxu0 %v2560
      %v2641 = vpop.f32.mrf.mxu0
      %v2642 = vadd.f32 0.0, %v2641
      %2643 = vmatmul.f32.gmra.mxu0 %v2563
      %v2644 = vpop.f32.mrf.mxu0
      %v2645 = vadd.f32 0.0, %v2644
      %2646 = vmatmul.f32.gmra.mxu0 %v2566
      %v2647 = vpop.f32.mrf.mxu0
      %v2648 = vadd.f32 0.0, %v2647
      %2649 = vdwg.mxu0
      %2650 = vmatpush.msra.mxu0 0.0
      %2651 = vmatpush.msra.mxu0 0.0
      %2652 = vmatpush.msra.mxu0 0.0
      %2653 = vmatpush.msra.mxu0 0.0
      %2654 = vmatpush.msra.mxu0 0.0
      %2655 = vmatpush.msra.mxu0 0.0
      %2656 = vmatpush.msra.mxu0 0.0
      %2657 = vmatpush.msra.mxu0 0.0
      %2658 = vmatpush.msra.mxu0 0.0
      %2659 = vmatpush.msra.mxu0 0.0
      %2660 = vmatpush.msra.mxu0 0.0
      %2661 = vmatpush.msra.mxu0 0.0
      %2662 = vmatpush.msra.mxu0 0.0
      %2663 = vmatpush.msra.mxu0 0.0
      %2664 = vmatpush.msra.mxu0 %v2533
      %2665 = vmatpush.msra.mxu0 %v2529
      %2666 = vmatmul.f32.gmra.mxu0 %v2545
      %v2667 = vpop.f32.mrf.mxu0
      %v2668 = vadd.f32 0.0, %v2667
      %2669 = vmatmul.f32.gmra.mxu0 %v2548
      %v2670 = vpop.f32.mrf.mxu0
      %v2671 = vadd.f32 0.0, %v2670
      %2672 = vmatmul.f32.gmra.mxu0 %v2551
      %v2673 = vpop.f32.mrf.mxu0
      %v2674 = vadd.f32 0.0, %v2673
      %2675 = vmatmul.f32.gmra.mxu0 %v2554
      %v2676 = vpop.f32.mrf.mxu0
      %v2677 = vadd.f32 0.0, %v2676
      %2678 = vmatmul.f32.gmra.mxu0 %v2557
      %v2679 = vpop.f32.mrf.mxu0
      %v2680 = vadd.f32 0.0, %v2679
      %2681 = vmatmul.f32.gmra.mxu0 %v2560
      %v2682 = vpop.f32.mrf.mxu0
      %v2683 = vadd.f32 0.0, %v2682
      %2684 = vmatmul.f32.gmra.mxu0 %v2563
      %v2685 = vpop.f32.mrf.mxu0
      %v2686 = vadd.f32 0.0, %v2685
      %2687 = vmatmul.f32.gmra.mxu0 %v2566
      %v2688 = vpop.f32.mrf.mxu0
      %v2689 = vadd.f32 0.0, %v2688
      %2690 = vdwg.mxu0
      %2691 = vmatpush.msra.mxu0 0.0
      %2692 = vmatpush.msra.mxu0 0.0
      %2693 = vmatpush.msra.mxu0 0.0
      %2694 = vmatpush.msra.mxu0 0.0
      %2695 = vmatpush.msra.mxu0 0.0
      %2696 = vmatpush.msra.mxu0 0.0
      %2697 = vmatpush.msra.mxu0 0.0
      %2698 = vmatpush.msra.mxu0 0.0
      %2699 = vmatpush.msra.mxu0 0.0
      %2700 = vmatpush.msra.mxu0 0.0
      %2701 = vmatpush.msra.mxu0 0.0
      %2702 = vmatpush.msra.mxu0 0.0
      %2703 = vmatpush.msra.mxu0 0.0
      %2704 = vmatpush.msra.mxu0 0.0
      %2705 = vmatpush.msra.mxu0 %v2534
      %2706 = vmatpush.msra.mxu0 %v2530
      %2707 = vmatmul.f32.gmra.mxu0 %v2545
      %v2708 = vpop.f32.mrf.mxu0
      %v2709 = vadd.f32 0.0, %v2708
      %2710 = vmatmul.f32.gmra.mxu0 %v2548
      %v2711 = vpop.f32.mrf.mxu0
      %v2712 = vadd.f32 0.0, %v2711
      %2713 = vmatmul.f32.gmra.mxu0 %v2551
      %v2714 = vpop.f32.mrf.mxu0
      %v2715 = vadd.f32 0.0, %v2714
      %2716 = vmatmul.f32.gmra.mxu0 %v2554
      %v2717 = vpop.f32.mrf.mxu0
      %v2718 = vadd.f32 0.0, %v2717
      %2719 = vmatmul.f32.gmra.mxu0 %v2557
      %v2720 = vpop.f32.mrf.mxu0
      %v2721 = vadd.f32 0.0, %v2720
      %2722 = vmatmul.f32.gmra.mxu0 %v2560
      %v2723 = vpop.f32.mrf.mxu0
      %v2724 = vadd.f32 0.0, %v2723
      %2725 = vmatmul.f32.gmra.mxu0 %v2563
      %v2726 = vpop.f32.mrf.mxu0
      %v2727 = vadd.f32 0.0, %v2726
      %2728 = vmatmul.f32.gmra.mxu0 %v2566
      %v2729 = vpop.f32.mrf.mxu0
      %v2730 = vadd.f32 0.0, %v2729
      %2731 = vdwg.mxu0
      %v2732 = vadd.f32 %v2586, %v2627
      %2733 = vadd.xlane.f32.xlu0 %v2732
      %v2734 = vpop.xlane.xlu0 %2733
      %v2735 = vadd.f32 %v2589, %v2630
      %2736 = vadd.xlane.f32.xlu0 %v2735
      %v2737 = vpop.xlane.xlu0 %2736
      %v2738 = vadd.f32 %v2592, %v2633
      %2739 = vadd.xlane.f32.xlu0 %v2738
      %v2740 = vpop.xlane.xlu0 %2739
      %v2741 = vadd.f32 %v2595, %v2636
      %2742 = vadd.xlane.f32.xlu0 %v2741
      %v2743 = vpop.xlane.xlu0 %2742
      %v2744 = vadd.f32 %v2598, %v2639
      %2745 = vadd.xlane.f32.xlu0 %v2744
      %v2746 = vpop.xlane.xlu0 %2745
      %v2747 = vadd.f32 %v2601, %v2642
      %2748 = vadd.xlane.f32.xlu0 %v2747
      %v2749 = vpop.xlane.xlu0 %2748
      %v2750 = vadd.f32 %v2604, %v2645
      %2751 = vadd.xlane.f32.xlu0 %v2750
      %v2752 = vpop.xlane.xlu0 %2751
      %v2753 = vadd.f32 %v2607, %v2648
      %2754 = vadd.xlane.f32.xlu0 %v2753
      %v2755 = vpop.xlane.xlu0 %2754
      %v2756 = vmul.f32 %v2734, %v699
      %v2757 = vmul.f32 %v2737, %v699
      %v2758 = vmul.f32 %v2740, %v699
      %v2759 = vmul.f32 %v2743, %v699
      %v2760 = vmul.f32 %v2746, %v699
      %v2761 = vmul.f32 %v2749, %v699
      %v2762 = vmul.f32 %v2752, %v699
      %v2763 = vmul.f32 %v2755, %v699
      %v2764 = vmul.f32 %v2586, %v2586
      %v2765 = vmul.f32 %v2627, %v2627
      %v2766 = vmul.f32 %v2589, %v2589
      %v2767 = vmul.f32 %v2630, %v2630
      %v2768 = vmul.f32 %v2592, %v2592
      %v2769 = vmul.f32 %v2633, %v2633
      %v2770 = vmul.f32 %v2595, %v2595
      %v2771 = vmul.f32 %v2636, %v2636
      %v2772 = vmul.f32 %v2598, %v2598
      %v2773 = vmul.f32 %v2639, %v2639
      %v2774 = vmul.f32 %v2601, %v2601
      %v2775 = vmul.f32 %v2642, %v2642
      %v2776 = vmul.f32 %v2604, %v2604
      %v2777 = vmul.f32 %v2645, %v2645
      %v2778 = vmul.f32 %v2607, %v2607
      %v2779 = vmul.f32 %v2648, %v2648
      %v2780 = vadd.f32 %v2764, %v2765
      %2781 = vadd.xlane.f32.xlu0 %v2780
      %v2782 = vpop.xlane.xlu0 %2781
      %v2783 = vadd.f32 %v2766, %v2767
      %2784 = vadd.xlane.f32.xlu0 %v2783
      %v2785 = vpop.xlane.xlu0 %2784
      %v2786 = vadd.f32 %v2768, %v2769
      %2787 = vadd.xlane.f32.xlu0 %v2786
      %v2788 = vpop.xlane.xlu0 %2787
      %v2789 = vadd.f32 %v2770, %v2771
      %2790 = vadd.xlane.f32.xlu0 %v2789
      %v2791 = vpop.xlane.xlu0 %2790
      %v2792 = vadd.f32 %v2772, %v2773
      %2793 = vadd.xlane.f32.xlu0 %v2792
      %v2794 = vpop.xlane.xlu0 %2793
      %v2795 = vadd.f32 %v2774, %v2775
      %2796 = vadd.xlane.f32.xlu0 %v2795
      %v2797 = vpop.xlane.xlu0 %2796
      %v2798 = vadd.f32 %v2776, %v2777
      %2799 = vadd.xlane.f32.xlu0 %v2798
      %v2800 = vpop.xlane.xlu0 %2799
      %v2801 = vadd.f32 %v2778, %v2779
      %2802 = vadd.xlane.f32.xlu0 %v2801
      %v2803 = vpop.xlane.xlu0 %2802
      %v2804 = vmul.f32 %v2782, %v699
      %v2805 = vmul.f32 %v2785, %v699
      %v2806 = vmul.f32 %v2788, %v699
      %v2807 = vmul.f32 %v2791, %v699
      %v2808 = vmul.f32 %v2794, %v699
      %v2809 = vmul.f32 %v2797, %v699
      %v2810 = vmul.f32 %v2800, %v699
      %v2811 = vmul.f32 %v2803, %v699
      %v2812 = vsub.f32 %v2586, %v2756
      %v2813 = vsub.f32 %v2627, %v2756
      %v2814 = vsub.f32 %v2589, %v2757
      %v2815 = vsub.f32 %v2630, %v2757
      %v2816 = vsub.f32 %v2592, %v2758
      %v2817 = vsub.f32 %v2633, %v2758
      %v2818 = vsub.f32 %v2595, %v2759
      %v2819 = vsub.f32 %v2636, %v2759
      %v2820 = vsub.f32 %v2598, %v2760
      %v2821 = vsub.f32 %v2639, %v2760
      %v2822 = vsub.f32 %v2601, %v2761
      %v2823 = vsub.f32 %v2642, %v2761
      %v2824 = vsub.f32 %v2604, %v2762
      %v2825 = vsub.f32 %v2645, %v2762
      %v2826 = vsub.f32 %v2607, %v2763
      %v2827 = vsub.f32 %v2648, %v2763
      %v2828 = vmul.f32 %v2756, %v2756
      %v2829 = vmul.f32 %v2757, %v2757
      %v2830 = vmul.f32 %v2758, %v2758
      %v2831 = vmul.f32 %v2759, %v2759
      %v2832 = vmul.f32 %v2760, %v2760
      %v2833 = vmul.f32 %v2761, %v2761
      %v2834 = vmul.f32 %v2762, %v2762
      %v2835 = vmul.f32 %v2763, %v2763
      %v2836 = vsub.f32 %v2804, %v2828
      %v2837 = vsub.f32 %v2805, %v2829
      %v2838 = vsub.f32 %v2806, %v2830
      %v2839 = vsub.f32 %v2807, %v2831
      %v2840 = vsub.f32 %v2808, %v2832
      %v2841 = vsub.f32 %v2809, %v2833
      %v2842 = vsub.f32 %v2810, %v2834
      %v2843 = vsub.f32 %v2811, %v2835
      %v2844 = vadd.f32 %v2836, 1e-05
      %v2845 = vadd.f32 %v2837, 1e-05
      %v2846 = vadd.f32 %v2838, 1e-05
      %v2847 = vadd.f32 %v2839, 1e-05
      %v2848 = vadd.f32 %v2840, 1e-05
      %v2849 = vadd.f32 %v2841, 1e-05
      %v2850 = vadd.f32 %v2842, 1e-05
      %v2851 = vadd.f32 %v2843, 1e-05
      %v2852 = vrsqrt.pop %v2844
      %v2853 = vmul.f32 %v2852, %v2844
      %v2854 = vmul.f32 %v2853, %v2852
      %v2855 = vmul.f32 0.5, %v2854
      %v2856 = vsub.f32 1.5, %v2855
      %v2857 = vmul.f32 %v2852, %v2856
      %vm2858 = vweird.f32 %v2844
      %vm2859 = vweird.f32 %v2852
      %vm2860 = vmor %vm2858, %vm2859
      %v2861 = vsel %vm2860, %v2852, %v2857
      %v2862 = vrsqrt.pop %v2845
      %v2863 = vmul.f32 %v2862, %v2845
      %v2864 = vmul.f32 %v2863, %v2862
      %v2865 = vmul.f32 0.5, %v2864
      %v2866 = vsub.f32 1.5, %v2865
      %v2867 = vmul.f32 %v2862, %v2866
      %vm2868 = vweird.f32 %v2845
      %vm2869 = vweird.f32 %v2862
      %vm2870 = vmor %vm2868, %vm2869
      %v2871 = vsel %vm2870, %v2862, %v2867
      %v2872 = vrsqrt.pop %v2846
      %v2873 = vmul.f32 %v2872, %v2846
      %v2874 = vmul.f32 %v2873, %v2872
      %v2875 = vmul.f32 0.5, %v2874
      %v2876 = vsub.f32 1.5, %v2875
      %v2877 = vmul.f32 %v2872, %v2876
      %vm2878 = vweird.f32 %v2846
      %vm2879 = vweird.f32 %v2872
      %vm2880 = vmor %vm2878, %vm2879
      %v2881 = vsel %vm2880, %v2872, %v2877
      %v2882 = vrsqrt.pop %v2847
      %v2883 = vmul.f32 %v2882, %v2847
      %v2884 = vmul.f32 %v2883, %v2882
      %v2885 = vmul.f32 0.5, %v2884
      %v2886 = vsub.f32 1.5, %v2885
      %v2887 = vmul.f32 %v2882, %v2886
      %vm2888 = vweird.f32 %v2847
      %vm2889 = vweird.f32 %v2882
      %vm2890 = vmor %vm2888, %vm2889
      %v2891 = vsel %vm2890, %v2882, %v2887
      %v2892 = vrsqrt.pop %v2848
      %v2893 = vmul.f32 %v2892, %v2848
      %v2894 = vmul.f32 %v2893, %v2892
      %v2895 = vmul.f32 0.5, %v2894
      %v2896 = vsub.f32 1.5, %v2895
      %v2897 = vmul.f32 %v2892, %v2896
      %vm2898 = vweird.f32 %v2848
      %vm2899 = vweird.f32 %v2892
      %vm2900 = vmor %vm2898, %vm2899
      %v2901 = vsel %vm2900, %v2892, %v2897
      %v2902 = vrsqrt.pop %v2849
      %v2903 = vmul.f32 %v2902, %v2849
      %v2904 = vmul.f32 %v2903, %v2902
      %v2905 = vmul.f32 0.5, %v2904
      %v2906 = vsub.f32 1.5, %v2905
      %v2907 = vmul.f32 %v2902, %v2906
      %vm2908 = vweird.f32 %v2849
      %vm2909 = vweird.f32 %v2902
      %vm2910 = vmor %vm2908, %vm2909
      %v2911 = vsel %vm2910, %v2902, %v2907
      %v2912 = vrsqrt.pop %v2850
      %v2913 = vmul.f32 %v2912, %v2850
      %v2914 = vmul.f32 %v2913, %v2912
      %v2915 = vmul.f32 0.5, %v2914
      %v2916 = vsub.f32 1.5, %v2915
      %v2917 = vmul.f32 %v2912, %v2916
      %vm2918 = vweird.f32 %v2850
      %vm2919 = vweird.f32 %v2912
      %vm2920 = vmor %vm2918, %vm2919
      %v2921 = vsel %vm2920, %v2912, %v2917
      %v2922 = vrsqrt.pop %v2851
      %v2923 = vmul.f32 %v2922, %v2851
      %v2924 = vmul.f32 %v2923, %v2922
      %v2925 = vmul.f32 0.5, %v2924
      %v2926 = vsub.f32 1.5, %v2925
      %v2927 = vmul.f32 %v2922, %v2926
      %vm2928 = vweird.f32 %v2851
      %vm2929 = vweird.f32 %v2922
      %vm2930 = vmor %vm2928, %vm2929
      %v2931 = vsel %vm2930, %v2922, %v2927
      %v2932 = vmul.f32 %v2812, %v2861
      %v2933 = vmul.f32 %v2813, %v2861
      %v2934 = vmul.f32 %v2814, %v2871
      %v2935 = vmul.f32 %v2815, %v2871
      %v2936 = vmul.f32 %v2816, %v2881
      %v2937 = vmul.f32 %v2817, %v2881
      %v2938 = vmul.f32 %v2818, %v2891
      %v2939 = vmul.f32 %v2819, %v2891
      %v2940 = vmul.f32 %v2820, %v2901
      %v2941 = vmul.f32 %v2821, %v2901
      %v2942 = vmul.f32 %v2822, %v2911
      %v2943 = vmul.f32 %v2823, %v2911
      %v2944 = vmul.f32 %v2824, %v2921
      %v2945 = vmul.f32 %v2825, %v2921
      %v2946 = vmul.f32 %v2826, %v2931
      %v2947 = vmul.f32 %v2827, %v2931
      %v2948 = vadd.f32 %v2668, %v2709
      %2949 = vadd.xlane.f32.xlu0 %v2948
      %v2950 = vpop.xlane.xlu0 %2949
      %v2951 = vadd.f32 %v2671, %v2712
      %2952 = vadd.xlane.f32.xlu0 %v2951
      %v2953 = vpop.xlane.xlu0 %2952
      %v2954 = vadd.f32 %v2674, %v2715
      %2955 = vadd.xlane.f32.xlu0 %v2954
      %v2956 = vpop.xlane.xlu0 %2955
      %v2957 = vadd.f32 %v2677, %v2718
      %2958 = vadd.xlane.f32.xlu0 %v2957
      %v2959 = vpop.xlane.xlu0 %2958
      %v2960 = vadd.f32 %v2680, %v2721
      %2961 = vadd.xlane.f32.xlu0 %v2960
      %v2962 = vpop.xlane.xlu0 %2961
      %v2963 = vadd.f32 %v2683, %v2724
      %2964 = vadd.xlane.f32.xlu0 %v2963
      %v2965 = vpop.xlane.xlu0 %2964
      %v2966 = vadd.f32 %v2686, %v2727
      %2967 = vadd.xlane.f32.xlu0 %v2966
      %v2968 = vpop.xlane.xlu0 %2967
      %v2969 = vadd.f32 %v2689, %v2730
      %2970 = vadd.xlane.f32.xlu0 %v2969
      %v2971 = vpop.xlane.xlu0 %2970
      %v2972 = vmul.f32 %v2950, %v699
      %v2973 = vmul.f32 %v2953, %v699
      %v2974 = vmul.f32 %v2956, %v699
      %v2975 = vmul.f32 %v2959, %v699
      %v2976 = vmul.f32 %v2962, %v699
      %v2977 = vmul.f32 %v2965, %v699
      %v2978 = vmul.f32 %v2968, %v699
      %v2979 = vmul.f32 %v2971, %v699
      %v2980 = vmul.f32 %v2668, %v2668
      %v2981 = vmul.f32 %v2709, %v2709
      %v2982 = vmul.f32 %v2671, %v2671
      %v2983 = vmul.f32 %v2712, %v2712
      %v2984 = vmul.f32 %v2674, %v2674
      %v2985 = vmul.f32 %v2715, %v2715
      %v2986 = vmul.f32 %v2677, %v2677
      %v2987 = vmul.f32 %v2718, %v2718
      %v2988 = vmul.f32 %v2680, %v2680
      %v2989 = vmul.f32 %v2721, %v2721
      %v2990 = vmul.f32 %v2683, %v2683
      %v2991 = vmul.f32 %v2724, %v2724
      %v2992 = vmul.f32 %v2686, %v2686
      %v2993 = vmul.f32 %v2727, %v2727
      %v2994 = vmul.f32 %v2689, %v2689
      %v2995 = vmul.f32 %v2730, %v2730
      %v2996 = vadd.f32 %v2980, %v2981
      %2997 = vadd.xlane.f32.xlu0 %v2996
      %v2998 = vpop.xlane.xlu0 %2997
      %v2999 = vadd.f32 %v2982, %v2983
      %3000 = vadd.xlane.f32.xlu0 %v2999
      %v3001 = vpop.xlane.xlu0 %3000
      %v3002 = vadd.f32 %v2984, %v2985
      %3003 = vadd.xlane.f32.xlu0 %v3002
      %v3004 = vpop.xlane.xlu0 %3003
      %v3005 = vadd.f32 %v2986, %v2987
      %3006 = vadd.xlane.f32.xlu0 %v3005
      %v3007 = vpop.xlane.xlu0 %3006
      %v3008 = vadd.f32 %v2988, %v2989
      %3009 = vadd.xlane.f32.xlu0 %v3008
      %v3010 = vpop.xlane.xlu0 %3009
      %v3011 = vadd.f32 %v2990, %v2991
      %3012 = vadd.xlane.f32.xlu0 %v3011
      %v3013 = vpop.xlane.xlu0 %3012
      %v3014 = vadd.f32 %v2992, %v2993
      %3015 = vadd.xlane.f32.xlu0 %v3014
      %v3016 = vpop.xlane.xlu0 %3015
      %v3017 = vadd.f32 %v2994, %v2995
      %3018 = vadd.xlane.f32.xlu0 %v3017
      %v3019 = vpop.xlane.xlu0 %3018
      %v3020 = vmul.f32 %v2998, %v699
      %v3021 = vmul.f32 %v3001, %v699
      %v3022 = vmul.f32 %v3004, %v699
      %v3023 = vmul.f32 %v3007, %v699
      %v3024 = vmul.f32 %v3010, %v699
      %v3025 = vmul.f32 %v3013, %v699
      %v3026 = vmul.f32 %v3016, %v699
      %v3027 = vmul.f32 %v3019, %v699
      %v3028 = vsub.f32 %v2668, %v2972
      %v3029 = vsub.f32 %v2709, %v2972
      %v3030 = vsub.f32 %v2671, %v2973
      %v3031 = vsub.f32 %v2712, %v2973
      %v3032 = vsub.f32 %v2674, %v2974
      %v3033 = vsub.f32 %v2715, %v2974
      %v3034 = vsub.f32 %v2677, %v2975
      %v3035 = vsub.f32 %v2718, %v2975
      %v3036 = vsub.f32 %v2680, %v2976
      %v3037 = vsub.f32 %v2721, %v2976
      %v3038 = vsub.f32 %v2683, %v2977
      %v3039 = vsub.f32 %v2724, %v2977
      %v3040 = vsub.f32 %v2686, %v2978
      %v3041 = vsub.f32 %v2727, %v2978
      %v3042 = vsub.f32 %v2689, %v2979
      %v3043 = vsub.f32 %v2730, %v2979
      %v3044 = vmul.f32 %v2972, %v2972
      %v3045 = vmul.f32 %v2973, %v2973
      %v3046 = vmul.f32 %v2974, %v2974
      %v3047 = vmul.f32 %v2975, %v2975
      %v3048 = vmul.f32 %v2976, %v2976
      %v3049 = vmul.f32 %v2977, %v2977
      %v3050 = vmul.f32 %v2978, %v2978
      %v3051 = vmul.f32 %v2979, %v2979
      %v3052 = vsub.f32 %v3020, %v3044
      %v3053 = vsub.f32 %v3021, %v3045
      %v3054 = vsub.f32 %v3022, %v3046
      %v3055 = vsub.f32 %v3023, %v3047
      %v3056 = vsub.f32 %v3024, %v3048
      %v3057 = vsub.f32 %v3025, %v3049
      %v3058 = vsub.f32 %v3026, %v3050
      %v3059 = vsub.f32 %v3027, %v3051
      %v3060 = vadd.f32 %v3052, 1e-05
      %v3061 = vadd.f32 %v3053, 1e-05
      %v3062 = vadd.f32 %v3054, 1e-05
      %v3063 = vadd.f32 %v3055, 1e-05
      %v3064 = vadd.f32 %v3056, 1e-05
      %v3065 = vadd.f32 %v3057, 1e-05
      %v3066 = vadd.f32 %v3058, 1e-05
      %v3067 = vadd.f32 %v3059, 1e-05
      %v3068 = vrsqrt.pop %v3060
      %v3069 = vmul.f32 %v3068, %v3060
      %v3070 = vmul.f32 %v3069, %v3068
      %v3071 = vmul.f32 0.5, %v3070
      %v3072 = vsub.f32 1.5, %v3071
      %v3073 = vmul.f32 %v3068, %v3072
      %vm3074 = vweird.f32 %v3060
      %vm3075 = vweird.f32 %v3068
      %vm3076 = vmor %vm3074, %vm3075
      %v3077 = vsel %vm3076, %v3068, %v3073
      %v3078 = vrsqrt.pop %v3061
      %v3079 = vmul.f32 %v3078, %v3061
      %v3080 = vmul.f32 %v3079, %v3078
      %v3081 = vmul.f32 0.5, %v3080
      %v3082 = vsub.f32 1.5, %v3081
      %v3083 = vmul.f32 %v3078, %v3082
      %vm3084 = vweird.f32 %v3061
      %vm3085 = vweird.f32 %v3078
      %vm3086 = vmor %vm3084, %vm3085
      %v3087 = vsel %vm3086, %v3078, %v3083
      %v3088 = vrsqrt.pop %v3062
      %v3089 = vmul.f32 %v3088, %v3062
      %v3090 = vmul.f32 %v3089, %v3088
      %v3091 = vmul.f32 0.5, %v3090
      %v3092 = vsub.f32 1.5, %v3091
      %v3093 = vmul.f32 %v3088, %v3092
      %vm3094 = vweird.f32 %v3062
      %vm3095 = vweird.f32 %v3088
      %vm3096 = vmor %vm3094, %vm3095
      %v3097 = vsel %vm3096, %v3088, %v3093
      %v3098 = vrsqrt.pop %v3063
      %v3099 = vmul.f32 %v3098, %v3063
      %v3100 = vmul.f32 %v3099, %v3098
      %v3101 = vmul.f32 0.5, %v3100
      %v3102 = vsub.f32 1.5, %v3101
      %v3103 = vmul.f32 %v3098, %v3102
      %vm3104 = vweird.f32 %v3063
      %vm3105 = vweird.f32 %v3098
      %vm3106 = vmor %vm3104, %vm3105
      %v3107 = vsel %vm3106, %v3098, %v3103
      %v3108 = vrsqrt.pop %v3064
      %v3109 = vmul.f32 %v3108, %v3064
      %v3110 = vmul.f32 %v3109, %v3108
      %v3111 = vmul.f32 0.5, %v3110
      %v3112 = vsub.f32 1.5, %v3111
      %v3113 = vmul.f32 %v3108, %v3112
      %vm3114 = vweird.f32 %v3064
      %vm3115 = vweird.f32 %v3108
      %vm3116 = vmor %vm3114, %vm3115
      %v3117 = vsel %vm3116, %v3108, %v3113
      %v3118 = vrsqrt.pop %v3065
      %v3119 = vmul.f32 %v3118, %v3065
      %v3120 = vmul.f32 %v3119, %v3118
      %v3121 = vmul.f32 0.5, %v3120
      %v3122 = vsub.f32 1.5, %v3121
      %v3123 = vmul.f32 %v3118, %v3122
      %vm3124 = vweird.f32 %v3065
      %vm3125 = vweird.f32 %v3118
      %vm3126 = vmor %vm3124, %vm3125
      %v3127 = vsel %vm3126, %v3118, %v3123
      %v3128 = vrsqrt.pop %v3066
      %v3129 = vmul.f32 %v3128, %v3066
      %v3130 = vmul.f32 %v3129, %v3128
      %v3131 = vmul.f32 0.5, %v3130
      %v3132 = vsub.f32 1.5, %v3131
      %v3133 = vmul.f32 %v3128, %v3132
      %vm3134 = vweird.f32 %v3066
      %vm3135 = vweird.f32 %v3128
      %vm3136 = vmor %vm3134, %vm3135
      %v3137 = vsel %vm3136, %v3128, %v3133
      %v3138 = vrsqrt.pop %v3067
      %v3139 = vmul.f32 %v3138, %v3067
      %v3140 = vmul.f32 %v3139, %v3138
      %v3141 = vmul.f32 0.5, %v3140
      %v3142 = vsub.f32 1.5, %v3141
      %v3143 = vmul.f32 %v3138, %v3142
      %vm3144 = vweird.f32 %v3067
      %vm3145 = vweird.f32 %v3138
      %vm3146 = vmor %vm3144, %vm3145
      %v3147 = vsel %vm3146, %v3138, %v3143
      %v3148 = vmul.f32 %v3028, %v3077
      %v3149 = vmul.f32 %v3029, %v3077
      %v3150 = vmul.f32 %v3030, %v3087
      %v3151 = vmul.f32 %v3031, %v3087
      %v3152 = vmul.f32 %v3032, %v3097
      %v3153 = vmul.f32 %v3033, %v3097
      %v3154 = vmul.f32 %v3034, %v3107
      %v3155 = vmul.f32 %v3035, %v3107
      %v3156 = vmul.f32 %v3036, %v3117
      %v3157 = vmul.f32 %v3037, %v3117
      %v3158 = vmul.f32 %v3038, %v3127
      %v3159 = vmul.f32 %v3039, %v3127
      %v3160 = vmul.f32 %v3040, %v3137
      %v3161 = vmul.f32 %v3041, %v3137
      %v3162 = vmul.f32 %v3042, %v3147
      %v3163 = vmul.f32 %v3043, %v3147
      %vm3164 = vcmp.ge.f32.partialorder %v2932, 0.0
      %vm3165 = vcmp.ge.f32.partialorder %v2933, 0.0
      %vm3166 = vcmp.ge.f32.partialorder %v3148, 0.0
      %vm3167 = vcmp.ge.f32.partialorder %v3149, 0.0
      %vm3168 = vcmp.ge.f32.partialorder %v2934, 0.0
      %vm3169 = vcmp.ge.f32.partialorder %v2935, 0.0
      %vm3170 = vcmp.ge.f32.partialorder %v3150, 0.0
      %vm3171 = vcmp.ge.f32.partialorder %v3151, 0.0
      %vm3172 = vcmp.ge.f32.partialorder %v2936, 0.0
      %vm3173 = vcmp.ge.f32.partialorder %v2937, 0.0
      %vm3174 = vcmp.ge.f32.partialorder %v3152, 0.0
      %vm3175 = vcmp.ge.f32.partialorder %v3153, 0.0
      %vm3176 = vcmp.ge.f32.partialorder %v2938, 0.0
      %vm3177 = vcmp.ge.f32.partialorder %v2939, 0.0
      %vm3178 = vcmp.ge.f32.partialorder %v3154, 0.0
      %vm3179 = vcmp.ge.f32.partialorder %v3155, 0.0
      %vm3180 = vcmp.ge.f32.partialorder %v2940, 0.0
      %vm3181 = vcmp.ge.f32.partialorder %v2941, 0.0
      %vm3182 = vcmp.ge.f32.partialorder %v3156, 0.0
      %vm3183 = vcmp.ge.f32.partialorder %v3157, 0.0
      %vm3184 = vcmp.ge.f32.partialorder %v2942, 0.0
      %vm3185 = vcmp.ge.f32.partialorder %v2943, 0.0
      %vm3186 = vcmp.ge.f32.partialorder %v3158, 0.0
      %vm3187 = vcmp.ge.f32.partialorder %v3159, 0.0
      %vm3188 = vcmp.ge.f32.partialorder %v2944, 0.0
      %vm3189 = vcmp.ge.f32.partialorder %v2945, 0.0
      %vm3190 = vcmp.ge.f32.partialorder %v3160, 0.0
      %vm3191 = vcmp.ge.f32.partialorder %v3161, 0.0
      %vm3192 = vcmp.ge.f32.partialorder %v2946, 0.0
      %vm3193 = vcmp.ge.f32.partialorder %v2947, 0.0
      %vm3194 = vcmp.ge.f32.partialorder %v3162, 0.0
      %vm3195 = vcmp.ge.f32.partialorder %v3163, 0.0
      %v3196 = vmul.f32 %v2932, 0.01
      %v3197 = vmul.f32 %v2933, 0.01
      %v3198 = vmul.f32 %v3148, 0.01
      %v3199 = vmul.f32 %v3149, 0.01
      %v3200 = vmul.f32 %v2934, 0.01
      %v3201 = vmul.f32 %v2935, 0.01
      %v3202 = vmul.f32 %v3150, 0.01
      %v3203 = vmul.f32 %v3151, 0.01
      %v3204 = vmul.f32 %v2936, 0.01
      %v3205 = vmul.f32 %v2937, 0.01
      %v3206 = vmul.f32 %v3152, 0.01
      %v3207 = vmul.f32 %v3153, 0.01
      %v3208 = vmul.f32 %v2938, 0.01
      %v3209 = vmul.f32 %v2939, 0.01
      %v3210 = vmul.f32 %v3154, 0.01
      %v3211 = vmul.f32 %v3155, 0.01
      %v3212 = vmul.f32 %v2940, 0.01
      %v3213 = vmul.f32 %v2941, 0.01
      %v3214 = vmul.f32 %v3156, 0.01
      %v3215 = vmul.f32 %v3157, 0.01
      %v3216 = vmul.f32 %v2942, 0.01
      %v3217 = vmul.f32 %v2943, 0.01
      %v3218 = vmul.f32 %v3158, 0.01
      %v3219 = vmul.f32 %v3159, 0.01
      %v3220 = vmul.f32 %v2944, 0.01
      %v3221 = vmul.f32 %v2945, 0.01
      %v3222 = vmul.f32 %v3160, 0.01
      %v3223 = vmul.f32 %v3161, 0.01
      %v3224 = vmul.f32 %v2946, 0.01
      %v3225 = vmul.f32 %v2947, 0.01
      %v3226 = vmul.f32 %v3162, 0.01
      %v3227 = vmul.f32 %v3163, 0.01
      %v3228 = vsel %vm3164, %v2932, %v3196
      %v3229 = vsel %vm3165, %v2933, %v3197
      %v3230 = vsel %vm3166, %v3148, %v3198
      %v3231 = vsel %vm3167, %v3149, %v3199
      %v3232 = vsel %vm3168, %v2934, %v3200
      %v3233 = vsel %vm3169, %v2935, %v3201
      %v3234 = vsel %vm3170, %v3150, %v3202
      %v3235 = vsel %vm3171, %v3151, %v3203
      %v3236 = vsel %vm3172, %v2936, %v3204
      %v3237 = vsel %vm3173, %v2937, %v3205
      %v3238 = vsel %vm3174, %v3152, %v3206
      %v3239 = vsel %vm3175, %v3153, %v3207
      %v3240 = vsel %vm3176, %v2938, %v3208
      %v3241 = vsel %vm3177, %v2939, %v3209
      %v3242 = vsel %vm3178, %v3154, %v3210
      %v3243 = vsel %vm3179, %v3155, %v3211
      %v3244 = vsel %vm3180, %v2940, %v3212
      %v3245 = vsel %vm3181, %v2941, %v3213
      %v3246 = vsel %vm3182, %v3156, %v3214
      %v3247 = vsel %vm3183, %v3157, %v3215
      %v3248 = vsel %vm3184, %v2942, %v3216
      %v3249 = vsel %vm3185, %v2943, %v3217
      %v3250 = vsel %vm3186, %v3158, %v3218
      %v3251 = vsel %vm3187, %v3159, %v3219
      %v3252 = vsel %vm3188, %v2944, %v3220
      %v3253 = vsel %vm3189, %v2945, %v3221
      %v3254 = vsel %vm3190, %v3160, %v3222
      %v3255 = vsel %vm3191, %v3161, %v3223
      %v3256 = vsel %vm3192, %v2946, %v3224
      %v3257 = vsel %vm3193, %v2947, %v3225
      %v3258 = vsel %vm3194, %v3162, %v3226
      %v3259 = vsel %vm3195, %v3163, %v3227
      %s3260 = scalar_lea.vmem %s6, 16
      %v3261 = vld [vmem:[%s3260] sm:$0x3f]
      %s3262 = scalar_lea.vmem %s7, 16
      %v3263 = vld [vmem:[%s3262] sm:$0x3f]
      %3265 = vset.pattern.permute.xlu0 0
      %3266 = vperm.xlu0 %3265, %v3263
      %v3267 = vpop.permute.xlu0 %3266
      %v3270 = vsel %vm1211, %v3261, 0
      %3272 = vmatpush.msra.mxu0 0.0
      %3273 = vmatpush.msra.mxu0 0.0
      %3274 = vmatpush.msra.mxu0 0.0
      %3275 = vmatpush.msra.mxu0 0.0
      %3276 = vmatpush.msra.mxu0 0.0
      %3277 = vmatpush.msra.mxu0 0.0
      %3278 = vmatpush.msra.mxu0 0.0
      %3279 = vmatpush.msra.mxu0 0.0
      %3280 = vmatpush.msra.mxu0 %v3256
      %3281 = vmatpush.msra.mxu0 %v3252
      %3282 = vmatpush.msra.mxu0 %v3248
      %3283 = vmatpush.msra.mxu0 %v3244
      %3284 = vmatpush.msra.mxu0 %v3240
      %3285 = vmatpush.msra.mxu0 %v3236
      %3286 = vmatpush.msra.mxu0 %v3232
      %3287 = vmatpush.msra.mxu0 %v3228
      %3288 = vmatmul.f32.gmra.mxu0 %v3270
      %v3289 = vpop.f32.mrf.mxu0
      %v3290 = vadd.f32 %v3267, %v3289
      %3291 = vdwg.mxu0
      %3292 = vmatpush.msra.mxu0 0.0
      %3293 = vmatpush.msra.mxu0 0.0
      %3294 = vmatpush.msra.mxu0 0.0
      %3295 = vmatpush.msra.mxu0 0.0
      %3296 = vmatpush.msra.mxu0 0.0
      %3297 = vmatpush.msra.mxu0 0.0
      %3298 = vmatpush.msra.mxu0 0.0
      %3299 = vmatpush.msra.mxu0 0.0
      %3300 = vmatpush.msra.mxu0 %v3257
      %3301 = vmatpush.msra.mxu0 %v3253
      %3302 = vmatpush.msra.mxu0 %v3249
      %3303 = vmatpush.msra.mxu0 %v3245
      %3304 = vmatpush.msra.mxu0 %v3241
      %3305 = vmatpush.msra.mxu0 %v3237
      %3306 = vmatpush.msra.mxu0 %v3233
      %3307 = vmatpush.msra.mxu0 %v3229
      %3308 = vmatmul.f32.gmra.mxu0 %v3270
      %v3309 = vpop.f32.mrf.mxu0
      %v3310 = vadd.f32 %v3267, %v3309
      %3311 = vdwg.mxu0
      %3312 = vmatpush.msra.mxu0 0.0
      %3313 = vmatpush.msra.mxu0 0.0
      %3314 = vmatpush.msra.mxu0 0.0
      %3315 = vmatpush.msra.mxu0 0.0
      %3316 = vmatpush.msra.mxu0 0.0
      %3317 = vmatpush.msra.mxu0 0.0
      %3318 = vmatpush.msra.mxu0 0.0
      %3319 = vmatpush.msra.mxu0 0.0
      %3320 = vmatpush.msra.mxu0 %v3258
      %3321 = vmatpush.msra.mxu0 %v3254
      %3322 = vmatpush.msra.mxu0 %v3250
      %3323 = vmatpush.msra.mxu0 %v3246
      %3324 = vmatpush.msra.mxu0 %v3242
      %3325 = vmatpush.msra.mxu0 %v3238
      %3326 = vmatpush.msra.mxu0 %v3234
      %3327 = vmatpush.msra.mxu0 %v3230
      %3328 = vmatmul.f32.gmra.mxu0 %v3270
      %v3329 = vpop.f32.mrf.mxu0
      %v3330 = vadd.f32 %v3267, %v3329
      %3331 = vdwg.mxu0
      %3332 = vmatpush.msra.mxu0 0.0
      %3333 = vmatpush.msra.mxu0 0.0
      %3334 = vmatpush.msra.mxu0 0.0
      %3335 = vmatpush.msra.mxu0 0.0
      %3336 = vmatpush.msra.mxu0 0.0
      %3337 = vmatpush.msra.mxu0 0.0
      %3338 = vmatpush.msra.mxu0 0.0
      %3339 = vmatpush.msra.mxu0 0.0
      %3340 = vmatpush.msra.mxu0 %v3259
      %3341 = vmatpush.msra.mxu0 %v3255
      %3342 = vmatpush.msra.mxu0 %v3251
      %3343 = vmatpush.msra.mxu0 %v3247
      %3344 = vmatpush.msra.mxu0 %v3243
      %3345 = vmatpush.msra.mxu0 %v3239
      %3346 = vmatpush.msra.mxu0 %v3235
      %3347 = vmatpush.msra.mxu0 %v3231
      %3348 = vmatmul.f32.gmra.mxu0 %v3270
      %v3349 = vpop.f32.mrf.mxu0
      %v3350 = vadd.f32 %v3267, %v3349
      %3351 = vdwg.mxu0
      %v3352 = vmax.f32 %v3290, -10.0
      %v3353 = vmax.f32 %v3310, -10.0
      %v3354 = vmax.f32 %v3330, -10.0
      %v3355 = vmax.f32 %v3350, -10.0
      %v3356 = vmin.f32 %v3352, 10.0
      %v3357 = vmin.f32 %v3353, 10.0
      %v3358 = vmin.f32 %v3354, 10.0
      %v3359 = vmin.f32 %v3355, 10.0
      %v3360 = vadd.f32 %v3356, 0.0
      %v3361 = vadd.f32 %v3357, 0.0
      %v3362 = vadd.f32 %v3358, 0.0
      %v3363 = vadd.f32 %v3359, 0.0
      %s3364 = scalar_lea.vmem %s2, 8
      %v3365 = vld [vmem:[%s3364] sm:$0x7]
      %vm3366 = vcmp.gt.f32.partialorder %v3365, 0.5
      %v3371 = vrot.slane %v3290, 3
      %v3372 = vrot.slane %v3310, 3
      %v3373 = vrot.slane %v3330, 3
      %v3374 = vrot.slane %v3350, 3
      %v3379 = vsub.f32 %v2397, %v3371
      %v3380 = vsub.f32 %v2398, %v3372
      %v3381 = vsub.f32 %v2399, %v3373
      %v3382 = vsub.f32 %v2400, %v3374
      %v3383 = vsub.f32 0.0, %v3360
      %v3384 = vsub.f32 0.0, %v3361
      %v3385 = vsub.f32 0.0, %v3362
      %v3386 = vsub.f32 0.0, %v3363
      %v3387 = vmul.f32 %v3383, 1.442695
      %v3388 = vpow.pop %v3387
      %v3389 = vmul.f32 %v3384, 1.442695
      %v3390 = vpow.pop %v3389
      %v3391 = vmul.f32 %v3385, 1.442695
      %v3392 = vpow.pop %v3391
      %v3393 = vmul.f32 %v3386, 1.442695
      %v3394 = vpow.pop %v3393
      %v3395 = vmul.f32 %v3379, %v3388
      %v3396 = vmul.f32 %v3380, %v3390
      %v3397 = vmul.f32 %v3381, %v3392
      %v3398 = vmul.f32 %v3382, %v3394
      %v3399 = vsel %vm3366, 1, 0
      %3400 = vset.pattern.permute.xlu0 0
      %3401 = vperm.xlu0 %3400, %v3399
      %v3402 = vpop.permute.xlu0 %3401
      %vm3403 = vcmp.eq.s32.totalorder %v3402, 1
      %v3404 = vsel %vm3403, %v2397, %v3395
      %v3405 = vsel %vm3403, %v2398, %v3396
      %v3406 = vsel %vm3403, %v2399, %v3397
      %v3407 = vsel %vm3403, %v2400, %v3398
      %s3408 = scalar_lea.vmem %s3, 48
      %v3409 = vld [vmem:[%s3408] sm:$0xff]
      %v3410 = vld [vmem:[%s3408 + $0x8] sm:$0xff]
      %s3411 = scalar_lea.vmem %s4, 48
      %v3412 = vld [vmem:[%s3411] sm:$0xff]
      %v3413 = vld [vmem:[%s3411 + $0x8] sm:$0xff]
      %3415 = vset.pattern.permute.xlu0 0
      %3416 = vperm.xlu0 %3415, %v3412
      %v3417 = vpop.permute.xlu0 %3416
      %3420 = vset.pattern.permute.xlu0 0
      %3421 = vperm.xlu0 %3420, %v3413
      %v3422 = vpop.permute.xlu0 %3421
      %v3425 = vsel %vm356, %v3409, 0
      %v3428 = vsel %vm356, %v3410, 0
      %v3431 = vsel %vm363, %v3404, 0
      %v3434 = vsel %vm363, %v3405, 0
      %v3437 = vsel %vm363, %v3406, 0
      %v3440 = vsel %vm363, %v3407, 0
      %3442 = vmatpush.msra.mxu0 0.0
      %3443 = vmatpush.msra.mxu0 0.0
      %3444 = vmatpush.msra.mxu0 0.0
      %3445 = vmatpush.msra.mxu0 0.0
      %3446 = vmatpush.msra.mxu0 0.0
      %3447 = vmatpush.msra.mxu0 0.0
      %3448 = vmatpush.msra.mxu0 0.0
      %3449 = vmatpush.msra.mxu0 0.0
      %3450 = vmatpush.msra.mxu0 0.0
      %3451 = vmatpush.msra.mxu0 0.0
      %3452 = vmatpush.msra.mxu0 0.0
      %3453 = vmatpush.msra.mxu0 0.0
      %3454 = vmatpush.msra.mxu0 0.0
      %3455 = vmatpush.msra.mxu0 0.0
      %3456 = vmatpush.msra.mxu0 0.0
      %3457 = vmatpush.msra.mxu0 %v3431
      %3458 = vmatmul.f32.gmra.mxu0 %v3425
      %v3459 = vpop.f32.mrf.mxu0
      %v3460 = vadd.f32 %v3417, %v3459
      %3461 = vmatmul.f32.gmra.mxu0 %v3428
      %v3462 = vpop.f32.mrf.mxu0
      %v3463 = vadd.f32 %v3422, %v3462
      %3464 = vdwg.mxu0
      %3465 = vmatpush.msra.mxu0 0.0
      %3466 = vmatpush.msra.mxu0 0.0
      %3467 = vmatpush.msra.mxu0 0.0
      %3468 = vmatpush.msra.mxu0 0.0
      %3469 = vmatpush.msra.mxu0 0.0
      %3470 = vmatpush.msra.mxu0 0.0
      %3471 = vmatpush.msra.mxu0 0.0
      %3472 = vmatpush.msra.mxu0 0.0
      %3473 = vmatpush.msra.mxu0 0.0
      %3474 = vmatpush.msra.mxu0 0.0
      %3475 = vmatpush.msra.mxu0 0.0
      %3476 = vmatpush.msra.mxu0 0.0
      %3477 = vmatpush.msra.mxu0 0.0
      %3478 = vmatpush.msra.mxu0 0.0
      %3479 = vmatpush.msra.mxu0 0.0
      %3480 = vmatpush.msra.mxu0 %v3434
      %3481 = vmatmul.f32.gmra.mxu0 %v3425
      %v3482 = vpop.f32.mrf.mxu0
      %v3483 = vadd.f32 %v3417, %v3482
      %3484 = vmatmul.f32.gmra.mxu0 %v3428
      %v3485 = vpop.f32.mrf.mxu0
      %v3486 = vadd.f32 %v3422, %v3485
      %3487 = vdwg.mxu0
      %3488 = vmatpush.msra.mxu0 0.0
      %3489 = vmatpush.msra.mxu0 0.0
      %3490 = vmatpush.msra.mxu0 0.0
      %3491 = vmatpush.msra.mxu0 0.0
      %3492 = vmatpush.msra.mxu0 0.0
      %3493 = vmatpush.msra.mxu0 0.0
      %3494 = vmatpush.msra.mxu0 0.0
      %3495 = vmatpush.msra.mxu0 0.0
      %3496 = vmatpush.msra.mxu0 0.0
      %3497 = vmatpush.msra.mxu0 0.0
      %3498 = vmatpush.msra.mxu0 0.0
      %3499 = vmatpush.msra.mxu0 0.0
      %3500 = vmatpush.msra.mxu0 0.0
      %3501 = vmatpush.msra.mxu0 0.0
      %3502 = vmatpush.msra.mxu0 0.0
      %3503 = vmatpush.msra.mxu0 %v3437
      %3504 = vmatmul.f32.gmra.mxu0 %v3425
      %v3505 = vpop.f32.mrf.mxu0
      %v3506 = vadd.f32 %v3417, %v3505
      %3507 = vmatmul.f32.gmra.mxu0 %v3428
      %v3508 = vpop.f32.mrf.mxu0
      %v3509 = vadd.f32 %v3422, %v3508
      %3510 = vdwg.mxu0
      %3511 = vmatpush.msra.mxu0 0.0
      %3512 = vmatpush.msra.mxu0 0.0
      %3513 = vmatpush.msra.mxu0 0.0
      %3514 = vmatpush.msra.mxu0 0.0
      %3515 = vmatpush.msra.mxu0 0.0
      %3516 = vmatpush.msra.mxu0 0.0
      %3517 = vmatpush.msra.mxu0 0.0
      %3518 = vmatpush.msra.mxu0 0.0
      %3519 = vmatpush.msra.mxu0 0.0
      %3520 = vmatpush.msra.mxu0 0.0
      %3521 = vmatpush.msra.mxu0 0.0
      %3522 = vmatpush.msra.mxu0 0.0
      %3523 = vmatpush.msra.mxu0 0.0
      %3524 = vmatpush.msra.mxu0 0.0
      %3525 = vmatpush.msra.mxu0 0.0
      %3526 = vmatpush.msra.mxu0 %v3440
      %3527 = vmatmul.f32.gmra.mxu0 %v3425
      %v3528 = vpop.f32.mrf.mxu0
      %v3529 = vadd.f32 %v3417, %v3528
      %3530 = vmatmul.f32.gmra.mxu0 %v3428
      %v3531 = vpop.f32.mrf.mxu0
      %v3532 = vadd.f32 %v3422, %v3531
      %3533 = vdwg.mxu0
      %v3534 = vmax.f32 %v3460, 0.0
      %v3535 = vmax.f32 %v3483, 0.0
      %v3536 = vmax.f32 %v3506, 0.0
      %v3537 = vmax.f32 %v3529, 0.0
      %v3538 = vmax.f32 %v3463, 0.0
      %v3539 = vmax.f32 %v3486, 0.0
      %v3540 = vmax.f32 %v3509, 0.0
      %v3541 = vmax.f32 %v3532, 0.0
      %s3542 = scalar_lea.vmem %s5, 192
      %v3543 = vld [vmem:[%s3542] sm:$0xff]
      %v3544 = vld [vmem:[%s3542 + $0x8] sm:$0xff]
      %v3545 = vld [vmem:[%s3542 + $0x10] sm:$0xff]
      %v3546 = vld [vmem:[%s3542 + $0x18] sm:$0xff]
      %v3547 = vld [vmem:[%s3542 + $0x20] sm:$0xff]
      %v3548 = vld [vmem:[%s3542 + $0x28] sm:$0xff]
      %v3549 = vld [vmem:[%s3542 + $0x30] sm:$0xff]
      %v3550 = vld [vmem:[%s3542 + $0x38] sm:$0xff]
      %v3552 = vsel %vm480, %v3543, 0
      %v3555 = vsel %vm480, %v3544, 0
      %v3558 = vsel %vm480, %v3545, 0
      %v3561 = vsel %vm480, %v3546, 0
      %v3564 = vsel %vm480, %v3547, 0
      %v3567 = vsel %vm480, %v3548, 0
      %v3570 = vsel %vm480, %v3549, 0
      %v3573 = vsel %vm480, %v3550, 0
      %3575 = vmatpush.msra.mxu0 0.0
      %3576 = vmatpush.msra.mxu0 0.0
      %3577 = vmatpush.msra.mxu0 0.0
      %3578 = vmatpush.msra.mxu0 0.0
      %3579 = vmatpush.msra.mxu0 0.0
      %3580 = vmatpush.msra.mxu0 0.0
      %3581 = vmatpush.msra.mxu0 0.0
      %3582 = vmatpush.msra.mxu0 0.0
      %3583 = vmatpush.msra.mxu0 0.0
      %3584 = vmatpush.msra.mxu0 0.0
      %3585 = vmatpush.msra.mxu0 0.0
      %3586 = vmatpush.msra.mxu0 0.0
      %3587 = vmatpush.msra.mxu0 0.0
      %3588 = vmatpush.msra.mxu0 0.0
      %3589 = vmatpush.msra.mxu0 %v3538
      %3590 = vmatpush.msra.mxu0 %v3534
      %3591 = vmatmul.f32.gmra.mxu0 %v3552
      %v3592 = vpop.f32.mrf.mxu0
      %v3593 = vadd.f32 0.0, %v3592
      %3594 = vmatmul.f32.gmra.mxu0 %v3555
      %v3595 = vpop.f32.mrf.mxu0
      %v3596 = vadd.f32 0.0, %v3595
      %3597 = vmatmul.f32.gmra.mxu0 %v3558
      %v3598 = vpop.f32.mrf.mxu0
      %v3599 = vadd.f32 0.0, %v3598
      %3600 = vmatmul.f32.gmra.mxu0 %v3561
      %v3601 = vpop.f32.mrf.mxu0
      %v3602 = vadd.f32 0.0, %v3601
      %3603 = vmatmul.f32.gmra.mxu0 %v3564
      %v3604 = vpop.f32.mrf.mxu0
      %v3605 = vadd.f32 0.0, %v3604
      %3606 = vmatmul.f32.gmra.mxu0 %v3567
      %v3607 = vpop.f32.mrf.mxu0
      %v3608 = vadd.f32 0.0, %v3607
      %3609 = vmatmul.f32.gmra.mxu0 %v3570
      %v3610 = vpop.f32.mrf.mxu0
      %v3611 = vadd.f32 0.0, %v3610
      %3612 = vmatmul.f32.gmra.mxu0 %v3573
      %v3613 = vpop.f32.mrf.mxu0
      %v3614 = vadd.f32 0.0, %v3613
      %3615 = vdwg.mxu0
      %3616 = vmatpush.msra.mxu0 0.0
      %3617 = vmatpush.msra.mxu0 0.0
      %3618 = vmatpush.msra.mxu0 0.0
      %3619 = vmatpush.msra.mxu0 0.0
      %3620 = vmatpush.msra.mxu0 0.0
      %3621 = vmatpush.msra.mxu0 0.0
      %3622 = vmatpush.msra.mxu0 0.0
      %3623 = vmatpush.msra.mxu0 0.0
      %3624 = vmatpush.msra.mxu0 0.0
      %3625 = vmatpush.msra.mxu0 0.0
      %3626 = vmatpush.msra.mxu0 0.0
      %3627 = vmatpush.msra.mxu0 0.0
      %3628 = vmatpush.msra.mxu0 0.0
      %3629 = vmatpush.msra.mxu0 0.0
      %3630 = vmatpush.msra.mxu0 %v3539
      %3631 = vmatpush.msra.mxu0 %v3535
      %3632 = vmatmul.f32.gmra.mxu0 %v3552
      %v3633 = vpop.f32.mrf.mxu0
      %v3634 = vadd.f32 0.0, %v3633
      %3635 = vmatmul.f32.gmra.mxu0 %v3555
      %v3636 = vpop.f32.mrf.mxu0
      %v3637 = vadd.f32 0.0, %v3636
      %3638 = vmatmul.f32.gmra.mxu0 %v3558
      %v3639 = vpop.f32.mrf.mxu0
      %v3640 = vadd.f32 0.0, %v3639
      %3641 = vmatmul.f32.gmra.mxu0 %v3561
      %v3642 = vpop.f32.mrf.mxu0
      %v3643 = vadd.f32 0.0, %v3642
      %3644 = vmatmul.f32.gmra.mxu0 %v3564
      %v3645 = vpop.f32.mrf.mxu0
      %v3646 = vadd.f32 0.0, %v3645
      %3647 = vmatmul.f32.gmra.mxu0 %v3567
      %v3648 = vpop.f32.mrf.mxu0
      %v3649 = vadd.f32 0.0, %v3648
      %3650 = vmatmul.f32.gmra.mxu0 %v3570
      %v3651 = vpop.f32.mrf.mxu0
      %v3652 = vadd.f32 0.0, %v3651
      %3653 = vmatmul.f32.gmra.mxu0 %v3573
      %v3654 = vpop.f32.mrf.mxu0
      %v3655 = vadd.f32 0.0, %v3654
      %3656 = vdwg.mxu0
      %3657 = vmatpush.msra.mxu0 0.0
      %3658 = vmatpush.msra.mxu0 0.0
      %3659 = vmatpush.msra.mxu0 0.0
      %3660 = vmatpush.msra.mxu0 0.0
      %3661 = vmatpush.msra.mxu0 0.0
      %3662 = vmatpush.msra.mxu0 0.0
      %3663 = vmatpush.msra.mxu0 0.0
      %3664 = vmatpush.msra.mxu0 0.0
      %3665 = vmatpush.msra.mxu0 0.0
      %3666 = vmatpush.msra.mxu0 0.0
      %3667 = vmatpush.msra.mxu0 0.0
      %3668 = vmatpush.msra.mxu0 0.0
      %3669 = vmatpush.msra.mxu0 0.0
      %3670 = vmatpush.msra.mxu0 0.0
      %3671 = vmatpush.msra.mxu0 %v3540
      %3672 = vmatpush.msra.mxu0 %v3536
      %3673 = vmatmul.f32.gmra.mxu0 %v3552
      %v3674 = vpop.f32.mrf.mxu0
      %v3675 = vadd.f32 0.0, %v3674
      %3676 = vmatmul.f32.gmra.mxu0 %v3555
      %v3677 = vpop.f32.mrf.mxu0
      %v3678 = vadd.f32 0.0, %v3677
      %3679 = vmatmul.f32.gmra.mxu0 %v3558
      %v3680 = vpop.f32.mrf.mxu0
      %v3681 = vadd.f32 0.0, %v3680
      %3682 = vmatmul.f32.gmra.mxu0 %v3561
      %v3683 = vpop.f32.mrf.mxu0
      %v3684 = vadd.f32 0.0, %v3683
      %3685 = vmatmul.f32.gmra.mxu0 %v3564
      %v3686 = vpop.f32.mrf.mxu0
      %v3687 = vadd.f32 0.0, %v3686
      %3688 = vmatmul.f32.gmra.mxu0 %v3567
      %v3689 = vpop.f32.mrf.mxu0
      %v3690 = vadd.f32 0.0, %v3689
      %3691 = vmatmul.f32.gmra.mxu0 %v3570
      %v3692 = vpop.f32.mrf.mxu0
      %v3693 = vadd.f32 0.0, %v3692
      %3694 = vmatmul.f32.gmra.mxu0 %v3573
      %v3695 = vpop.f32.mrf.mxu0
      %v3696 = vadd.f32 0.0, %v3695
      %3697 = vdwg.mxu0
      %3698 = vmatpush.msra.mxu0 0.0
      %3699 = vmatpush.msra.mxu0 0.0
      %3700 = vmatpush.msra.mxu0 0.0
      %3701 = vmatpush.msra.mxu0 0.0
      %3702 = vmatpush.msra.mxu0 0.0
      %3703 = vmatpush.msra.mxu0 0.0
      %3704 = vmatpush.msra.mxu0 0.0
      %3705 = vmatpush.msra.mxu0 0.0
      %3706 = vmatpush.msra.mxu0 0.0
      %3707 = vmatpush.msra.mxu0 0.0
      %3708 = vmatpush.msra.mxu0 0.0
      %3709 = vmatpush.msra.mxu0 0.0
      %3710 = vmatpush.msra.mxu0 0.0
      %3711 = vmatpush.msra.mxu0 0.0
      %3712 = vmatpush.msra.mxu0 %v3541
      %3713 = vmatpush.msra.mxu0 %v3537
      %3714 = vmatmul.f32.gmra.mxu0 %v3552
      %v3715 = vpop.f32.mrf.mxu0
      %v3716 = vadd.f32 0.0, %v3715
      %3717 = vmatmul.f32.gmra.mxu0 %v3555
      %v3718 = vpop.f32.mrf.mxu0
      %v3719 = vadd.f32 0.0, %v3718
      %3720 = vmatmul.f32.gmra.mxu0 %v3558
      %v3721 = vpop.f32.mrf.mxu0
      %v3722 = vadd.f32 0.0, %v3721
      %3723 = vmatmul.f32.gmra.mxu0 %v3561
      %v3724 = vpop.f32.mrf.mxu0
      %v3725 = vadd.f32 0.0, %v3724
      %3726 = vmatmul.f32.gmra.mxu0 %v3564
      %v3727 = vpop.f32.mrf.mxu0
      %v3728 = vadd.f32 0.0, %v3727
      %3729 = vmatmul.f32.gmra.mxu0 %v3567
      %v3730 = vpop.f32.mrf.mxu0
      %v3731 = vadd.f32 0.0, %v3730
      %3732 = vmatmul.f32.gmra.mxu0 %v3570
      %v3733 = vpop.f32.mrf.mxu0
      %v3734 = vadd.f32 0.0, %v3733
      %3735 = vmatmul.f32.gmra.mxu0 %v3573
      %v3736 = vpop.f32.mrf.mxu0
      %v3737 = vadd.f32 0.0, %v3736
      %3738 = vdwg.mxu0
      %v3739 = vadd.f32 %v3593, %v3634
      %3740 = vadd.xlane.f32.xlu0 %v3739
      %v3741 = vpop.xlane.xlu0 %3740
      %v3742 = vadd.f32 %v3596, %v3637
      %3743 = vadd.xlane.f32.xlu0 %v3742
      %v3744 = vpop.xlane.xlu0 %3743
      %v3745 = vadd.f32 %v3599, %v3640
      %3746 = vadd.xlane.f32.xlu0 %v3745
      %v3747 = vpop.xlane.xlu0 %3746
      %v3748 = vadd.f32 %v3602, %v3643
      %3749 = vadd.xlane.f32.xlu0 %v3748
      %v3750 = vpop.xlane.xlu0 %3749
      %v3751 = vadd.f32 %v3605, %v3646
      %3752 = vadd.xlane.f32.xlu0 %v3751
      %v3753 = vpop.xlane.xlu0 %3752
      %v3754 = vadd.f32 %v3608, %v3649
      %3755 = vadd.xlane.f32.xlu0 %v3754
      %v3756 = vpop.xlane.xlu0 %3755
      %v3757 = vadd.f32 %v3611, %v3652
      %3758 = vadd.xlane.f32.xlu0 %v3757
      %v3759 = vpop.xlane.xlu0 %3758
      %v3760 = vadd.f32 %v3614, %v3655
      %3761 = vadd.xlane.f32.xlu0 %v3760
      %v3762 = vpop.xlane.xlu0 %3761
      %v3763 = vmul.f32 %v3741, %v699
      %v3764 = vmul.f32 %v3744, %v699
      %v3765 = vmul.f32 %v3747, %v699
      %v3766 = vmul.f32 %v3750, %v699
      %v3767 = vmul.f32 %v3753, %v699
      %v3768 = vmul.f32 %v3756, %v699
      %v3769 = vmul.f32 %v3759, %v699
      %v3770 = vmul.f32 %v3762, %v699
      %v3771 = vmul.f32 %v3593, %v3593
      %v3772 = vmul.f32 %v3634, %v3634
      %v3773 = vmul.f32 %v3596, %v3596
      %v3774 = vmul.f32 %v3637, %v3637
      %v3775 = vmul.f32 %v3599, %v3599
      %v3776 = vmul.f32 %v3640, %v3640
      %v3777 = vmul.f32 %v3602, %v3602
      %v3778 = vmul.f32 %v3643, %v3643
      %v3779 = vmul.f32 %v3605, %v3605
      %v3780 = vmul.f32 %v3646, %v3646
      %v3781 = vmul.f32 %v3608, %v3608
      %v3782 = vmul.f32 %v3649, %v3649
      %v3783 = vmul.f32 %v3611, %v3611
      %v3784 = vmul.f32 %v3652, %v3652
      %v3785 = vmul.f32 %v3614, %v3614
      %v3786 = vmul.f32 %v3655, %v3655
      %v3787 = vadd.f32 %v3771, %v3772
      %3788 = vadd.xlane.f32.xlu0 %v3787
      %v3789 = vpop.xlane.xlu0 %3788
      %v3790 = vadd.f32 %v3773, %v3774
      %3791 = vadd.xlane.f32.xlu0 %v3790
      %v3792 = vpop.xlane.xlu0 %3791
      %v3793 = vadd.f32 %v3775, %v3776
      %3794 = vadd.xlane.f32.xlu0 %v3793
      %v3795 = vpop.xlane.xlu0 %3794
      %v3796 = vadd.f32 %v3777, %v3778
      %3797 = vadd.xlane.f32.xlu0 %v3796
      %v3798 = vpop.xlane.xlu0 %3797
      %v3799 = vadd.f32 %v3779, %v3780
      %3800 = vadd.xlane.f32.xlu0 %v3799
      %v3801 = vpop.xlane.xlu0 %3800
      %v3802 = vadd.f32 %v3781, %v3782
      %3803 = vadd.xlane.f32.xlu0 %v3802
      %v3804 = vpop.xlane.xlu0 %3803
      %v3805 = vadd.f32 %v3783, %v3784
      %3806 = vadd.xlane.f32.xlu0 %v3805
      %v3807 = vpop.xlane.xlu0 %3806
      %v3808 = vadd.f32 %v3785, %v3786
      %3809 = vadd.xlane.f32.xlu0 %v3808
      %v3810 = vpop.xlane.xlu0 %3809
      %v3811 = vmul.f32 %v3789, %v699
      %v3812 = vmul.f32 %v3792, %v699
      %v3813 = vmul.f32 %v3795, %v699
      %v3814 = vmul.f32 %v3798, %v699
      %v3815 = vmul.f32 %v3801, %v699
      %v3816 = vmul.f32 %v3804, %v699
      %v3817 = vmul.f32 %v3807, %v699
      %v3818 = vmul.f32 %v3810, %v699
      %v3819 = vsub.f32 %v3593, %v3763
      %v3820 = vsub.f32 %v3634, %v3763
      %v3821 = vsub.f32 %v3596, %v3764
      %v3822 = vsub.f32 %v3637, %v3764
      %v3823 = vsub.f32 %v3599, %v3765
      %v3824 = vsub.f32 %v3640, %v3765
      %v3825 = vsub.f32 %v3602, %v3766
      %v3826 = vsub.f32 %v3643, %v3766
      %v3827 = vsub.f32 %v3605, %v3767
      %v3828 = vsub.f32 %v3646, %v3767
      %v3829 = vsub.f32 %v3608, %v3768
      %v3830 = vsub.f32 %v3649, %v3768
      %v3831 = vsub.f32 %v3611, %v3769
      %v3832 = vsub.f32 %v3652, %v3769
      %v3833 = vsub.f32 %v3614, %v3770
      %v3834 = vsub.f32 %v3655, %v3770
      %v3835 = vmul.f32 %v3763, %v3763
      %v3836 = vmul.f32 %v3764, %v3764
      %v3837 = vmul.f32 %v3765, %v3765
      %v3838 = vmul.f32 %v3766, %v3766
      %v3839 = vmul.f32 %v3767, %v3767
      %v3840 = vmul.f32 %v3768, %v3768
      %v3841 = vmul.f32 %v3769, %v3769
      %v3842 = vmul.f32 %v3770, %v3770
      %v3843 = vsub.f32 %v3811, %v3835
      %v3844 = vsub.f32 %v3812, %v3836
      %v3845 = vsub.f32 %v3813, %v3837
      %v3846 = vsub.f32 %v3814, %v3838
      %v3847 = vsub.f32 %v3815, %v3839
      %v3848 = vsub.f32 %v3816, %v3840
      %v3849 = vsub.f32 %v3817, %v3841
      %v3850 = vsub.f32 %v3818, %v3842
      %v3851 = vadd.f32 %v3843, 1e-05
      %v3852 = vadd.f32 %v3844, 1e-05
      %v3853 = vadd.f32 %v3845, 1e-05
      %v3854 = vadd.f32 %v3846, 1e-05
      %v3855 = vadd.f32 %v3847, 1e-05
      %v3856 = vadd.f32 %v3848, 1e-05
      %v3857 = vadd.f32 %v3849, 1e-05
      %v3858 = vadd.f32 %v3850, 1e-05
      %v3859 = vrsqrt.pop %v3851
      %v3860 = vmul.f32 %v3859, %v3851
      %v3861 = vmul.f32 %v3860, %v3859
      %v3862 = vmul.f32 0.5, %v3861
      %v3863 = vsub.f32 1.5, %v3862
      %v3864 = vmul.f32 %v3859, %v3863
      %vm3865 = vweird.f32 %v3851
      %vm3866 = vweird.f32 %v3859
      %vm3867 = vmor %vm3865, %vm3866
      %v3868 = vsel %vm3867, %v3859, %v3864
      %v3869 = vrsqrt.pop %v3852
      %v3870 = vmul.f32 %v3869, %v3852
      %v3871 = vmul.f32 %v3870, %v3869
      %v3872 = vmul.f32 0.5, %v3871
      %v3873 = vsub.f32 1.5, %v3872
      %v3874 = vmul.f32 %v3869, %v3873
      %vm3875 = vweird.f32 %v3852
      %vm3876 = vweird.f32 %v3869
      %vm3877 = vmor %vm3875, %vm3876
      %v3878 = vsel %vm3877, %v3869, %v3874
      %v3879 = vrsqrt.pop %v3853
      %v3880 = vmul.f32 %v3879, %v3853
      %v3881 = vmul.f32 %v3880, %v3879
      %v3882 = vmul.f32 0.5, %v3881
      %v3883 = vsub.f32 1.5, %v3882
      %v3884 = vmul.f32 %v3879, %v3883
      %vm3885 = vweird.f32 %v3853
      %vm3886 = vweird.f32 %v3879
      %vm3887 = vmor %vm3885, %vm3886
      %v3888 = vsel %vm3887, %v3879, %v3884
      %v3889 = vrsqrt.pop %v3854
      %v3890 = vmul.f32 %v3889, %v3854
      %v3891 = vmul.f32 %v3890, %v3889
      %v3892 = vmul.f32 0.5, %v3891
      %v3893 = vsub.f32 1.5, %v3892
      %v3894 = vmul.f32 %v3889, %v3893
      %vm3895 = vweird.f32 %v3854
      %vm3896 = vweird.f32 %v3889
      %vm3897 = vmor %vm3895, %vm3896
      %v3898 = vsel %vm3897, %v3889, %v3894
      %v3899 = vrsqrt.pop %v3855
      %v3900 = vmul.f32 %v3899, %v3855
      %v3901 = vmul.f32 %v3900, %v3899
      %v3902 = vmul.f32 0.5, %v3901
      %v3903 = vsub.f32 1.5, %v3902
      %v3904 = vmul.f32 %v3899, %v3903
      %vm3905 = vweird.f32 %v3855
      %vm3906 = vweird.f32 %v3899
      %vm3907 = vmor %vm3905, %vm3906
      %v3908 = vsel %vm3907, %v3899, %v3904
      %v3909 = vrsqrt.pop %v3856
      %v3910 = vmul.f32 %v3909, %v3856
      %v3911 = vmul.f32 %v3910, %v3909
      %v3912 = vmul.f32 0.5, %v3911
      %v3913 = vsub.f32 1.5, %v3912
      %v3914 = vmul.f32 %v3909, %v3913
      %vm3915 = vweird.f32 %v3856
      %vm3916 = vweird.f32 %v3909
      %vm3917 = vmor %vm3915, %vm3916
      %v3918 = vsel %vm3917, %v3909, %v3914
      %v3919 = vrsqrt.pop %v3857
      %v3920 = vmul.f32 %v3919, %v3857
      %v3921 = vmul.f32 %v3920, %v3919
      %v3922 = vmul.f32 0.5, %v3921
      %v3923 = vsub.f32 1.5, %v3922
      %v3924 = vmul.f32 %v3919, %v3923
      %vm3925 = vweird.f32 %v3857
      %vm3926 = vweird.f32 %v3919
      %vm3927 = vmor %vm3925, %vm3926
      %v3928 = vsel %vm3927, %v3919, %v3924
      %v3929 = vrsqrt.pop %v3858
      %v3930 = vmul.f32 %v3929, %v3858
      %v3931 = vmul.f32 %v3930, %v3929
      %v3932 = vmul.f32 0.5, %v3931
      %v3933 = vsub.f32 1.5, %v3932
      %v3934 = vmul.f32 %v3929, %v3933
      %vm3935 = vweird.f32 %v3858
      %vm3936 = vweird.f32 %v3929
      %vm3937 = vmor %vm3935, %vm3936
      %v3938 = vsel %vm3937, %v3929, %v3934
      %v3939 = vmul.f32 %v3819, %v3868
      %v3940 = vmul.f32 %v3820, %v3868
      %v3941 = vmul.f32 %v3821, %v3878
      %v3942 = vmul.f32 %v3822, %v3878
      %v3943 = vmul.f32 %v3823, %v3888
      %v3944 = vmul.f32 %v3824, %v3888
      %v3945 = vmul.f32 %v3825, %v3898
      %v3946 = vmul.f32 %v3826, %v3898
      %v3947 = vmul.f32 %v3827, %v3908
      %v3948 = vmul.f32 %v3828, %v3908
      %v3949 = vmul.f32 %v3829, %v3918
      %v3950 = vmul.f32 %v3830, %v3918
      %v3951 = vmul.f32 %v3831, %v3928
      %v3952 = vmul.f32 %v3832, %v3928
      %v3953 = vmul.f32 %v3833, %v3938
      %v3954 = vmul.f32 %v3834, %v3938
      %v3955 = vadd.f32 %v3675, %v3716
      %3956 = vadd.xlane.f32.xlu0 %v3955
      %v3957 = vpop.xlane.xlu0 %3956
      %v3958 = vadd.f32 %v3678, %v3719
      %3959 = vadd.xlane.f32.xlu0 %v3958
      %v3960 = vpop.xlane.xlu0 %3959
      %v3961 = vadd.f32 %v3681, %v3722
      %3962 = vadd.xlane.f32.xlu0 %v3961
      %v3963 = vpop.xlane.xlu0 %3962
      %v3964 = vadd.f32 %v3684, %v3725
      %3965 = vadd.xlane.f32.xlu0 %v3964
      %v3966 = vpop.xlane.xlu0 %3965
      %v3967 = vadd.f32 %v3687, %v3728
      %3968 = vadd.xlane.f32.xlu0 %v3967
      %v3969 = vpop.xlane.xlu0 %3968
      %v3970 = vadd.f32 %v3690, %v3731
      %3971 = vadd.xlane.f32.xlu0 %v3970
      %v3972 = vpop.xlane.xlu0 %3971
      %v3973 = vadd.f32 %v3693, %v3734
      %3974 = vadd.xlane.f32.xlu0 %v3973
      %v3975 = vpop.xlane.xlu0 %3974
      %v3976 = vadd.f32 %v3696, %v3737
      %3977 = vadd.xlane.f32.xlu0 %v3976
      %v3978 = vpop.xlane.xlu0 %3977
      %v3979 = vmul.f32 %v3957, %v699
      %v3980 = vmul.f32 %v3960, %v699
      %v3981 = vmul.f32 %v3963, %v699
      %v3982 = vmul.f32 %v3966, %v699
      %v3983 = vmul.f32 %v3969, %v699
      %v3984 = vmul.f32 %v3972, %v699
      %v3985 = vmul.f32 %v3975, %v699
      %v3986 = vmul.f32 %v3978, %v699
      %v3987 = vmul.f32 %v3675, %v3675
      %v3988 = vmul.f32 %v3716, %v3716
      %v3989 = vmul.f32 %v3678, %v3678
      %v3990 = vmul.f32 %v3719, %v3719
      %v3991 = vmul.f32 %v3681, %v3681
      %v3992 = vmul.f32 %v3722, %v3722
      %v3993 = vmul.f32 %v3684, %v3684
      %v3994 = vmul.f32 %v3725, %v3725
      %v3995 = vmul.f32 %v3687, %v3687
      %v3996 = vmul.f32 %v3728, %v3728
      %v3997 = vmul.f32 %v3690, %v3690
      %v3998 = vmul.f32 %v3731, %v3731
      %v3999 = vmul.f32 %v3693, %v3693
      %v4000 = vmul.f32 %v3734, %v3734
      %v4001 = vmul.f32 %v3696, %v3696
      %v4002 = vmul.f32 %v3737, %v3737
      %v4003 = vadd.f32 %v3987, %v3988
      %4004 = vadd.xlane.f32.xlu0 %v4003
      %v4005 = vpop.xlane.xlu0 %4004
      %v4006 = vadd.f32 %v3989, %v3990
      %4007 = vadd.xlane.f32.xlu0 %v4006
      %v4008 = vpop.xlane.xlu0 %4007
      %v4009 = vadd.f32 %v3991, %v3992
      %4010 = vadd.xlane.f32.xlu0 %v4009
      %v4011 = vpop.xlane.xlu0 %4010
      %v4012 = vadd.f32 %v3993, %v3994
      %4013 = vadd.xlane.f32.xlu0 %v4012
      %v4014 = vpop.xlane.xlu0 %4013
      %v4015 = vadd.f32 %v3995, %v3996
      %4016 = vadd.xlane.f32.xlu0 %v4015
      %v4017 = vpop.xlane.xlu0 %4016
      %v4018 = vadd.f32 %v3997, %v3998
      %4019 = vadd.xlane.f32.xlu0 %v4018
      %v4020 = vpop.xlane.xlu0 %4019
      %v4021 = vadd.f32 %v3999, %v4000
      %4022 = vadd.xlane.f32.xlu0 %v4021
      %v4023 = vpop.xlane.xlu0 %4022
      %v4024 = vadd.f32 %v4001, %v4002
      %4025 = vadd.xlane.f32.xlu0 %v4024
      %v4026 = vpop.xlane.xlu0 %4025
      %v4027 = vmul.f32 %v4005, %v699
      %v4028 = vmul.f32 %v4008, %v699
      %v4029 = vmul.f32 %v4011, %v699
      %v4030 = vmul.f32 %v4014, %v699
      %v4031 = vmul.f32 %v4017, %v699
      %v4032 = vmul.f32 %v4020, %v699
      %v4033 = vmul.f32 %v4023, %v699
      %v4034 = vmul.f32 %v4026, %v699
      %v4035 = vsub.f32 %v3675, %v3979
      %v4036 = vsub.f32 %v3716, %v3979
      %v4037 = vsub.f32 %v3678, %v3980
      %v4038 = vsub.f32 %v3719, %v3980
      %v4039 = vsub.f32 %v3681, %v3981
      %v4040 = vsub.f32 %v3722, %v3981
      %v4041 = vsub.f32 %v3684, %v3982
      %v4042 = vsub.f32 %v3725, %v3982
      %v4043 = vsub.f32 %v3687, %v3983
      %v4044 = vsub.f32 %v3728, %v3983
      %v4045 = vsub.f32 %v3690, %v3984
      %v4046 = vsub.f32 %v3731, %v3984
      %v4047 = vsub.f32 %v3693, %v3985
      %v4048 = vsub.f32 %v3734, %v3985
      %v4049 = vsub.f32 %v3696, %v3986
      %v4050 = vsub.f32 %v3737, %v3986
      %v4051 = vmul.f32 %v3979, %v3979
      %v4052 = vmul.f32 %v3980, %v3980
      %v4053 = vmul.f32 %v3981, %v3981
      %v4054 = vmul.f32 %v3982, %v3982
      %v4055 = vmul.f32 %v3983, %v3983
      %v4056 = vmul.f32 %v3984, %v3984
      %v4057 = vmul.f32 %v3985, %v3985
      %v4058 = vmul.f32 %v3986, %v3986
      %v4059 = vsub.f32 %v4027, %v4051
      %v4060 = vsub.f32 %v4028, %v4052
      %v4061 = vsub.f32 %v4029, %v4053
      %v4062 = vsub.f32 %v4030, %v4054
      %v4063 = vsub.f32 %v4031, %v4055
      %v4064 = vsub.f32 %v4032, %v4056
      %v4065 = vsub.f32 %v4033, %v4057
      %v4066 = vsub.f32 %v4034, %v4058
      %v4067 = vadd.f32 %v4059, 1e-05
      %v4068 = vadd.f32 %v4060, 1e-05
      %v4069 = vadd.f32 %v4061, 1e-05
      %v4070 = vadd.f32 %v4062, 1e-05
      %v4071 = vadd.f32 %v4063, 1e-05
      %v4072 = vadd.f32 %v4064, 1e-05
      %v4073 = vadd.f32 %v4065, 1e-05
      %v4074 = vadd.f32 %v4066, 1e-05
      %v4075 = vrsqrt.pop %v4067
      %v4076 = vmul.f32 %v4075, %v4067
      %v4077 = vmul.f32 %v4076, %v4075
      %v4078 = vmul.f32 0.5, %v4077
      %v4079 = vsub.f32 1.5, %v4078
      %v4080 = vmul.f32 %v4075, %v4079
      %vm4081 = vweird.f32 %v4067
      %vm4082 = vweird.f32 %v4075
      %vm4083 = vmor %vm4081, %vm4082
      %v4084 = vsel %vm4083, %v4075, %v4080
      %v4085 = vrsqrt.pop %v4068
      %v4086 = vmul.f32 %v4085, %v4068
      %v4087 = vmul.f32 %v4086, %v4085
      %v4088 = vmul.f32 0.5, %v4087
      %v4089 = vsub.f32 1.5, %v4088
      %v4090 = vmul.f32 %v4085, %v4089
      %vm4091 = vweird.f32 %v4068
      %vm4092 = vweird.f32 %v4085
      %vm4093 = vmor %vm4091, %vm4092
      %v4094 = vsel %vm4093, %v4085, %v4090
      %v4095 = vrsqrt.pop %v4069
      %v4096 = vmul.f32 %v4095, %v4069
      %v4097 = vmul.f32 %v4096, %v4095
      %v4098 = vmul.f32 0.5, %v4097
      %v4099 = vsub.f32 1.5, %v4098
      %v4100 = vmul.f32 %v4095, %v4099
      %vm4101 = vweird.f32 %v4069
      %vm4102 = vweird.f32 %v4095
      %vm4103 = vmor %vm4101, %vm4102
      %v4104 = vsel %vm4103, %v4095, %v4100
      %v4105 = vrsqrt.pop %v4070
      %v4106 = vmul.f32 %v4105, %v4070
      %v4107 = vmul.f32 %v4106, %v4105
      %v4108 = vmul.f32 0.5, %v4107
      %v4109 = vsub.f32 1.5, %v4108
      %v4110 = vmul.f32 %v4105, %v4109
      %vm4111 = vweird.f32 %v4070
      %vm4112 = vweird.f32 %v4105
      %vm4113 = vmor %vm4111, %vm4112
      %v4114 = vsel %vm4113, %v4105, %v4110
      %v4115 = vrsqrt.pop %v4071
      %v4116 = vmul.f32 %v4115, %v4071
      %v4117 = vmul.f32 %v4116, %v4115
      %v4118 = vmul.f32 0.5, %v4117
      %v4119 = vsub.f32 1.5, %v4118
      %v4120 = vmul.f32 %v4115, %v4119
      %vm4121 = vweird.f32 %v4071
      %vm4122 = vweird.f32 %v4115
      %vm4123 = vmor %vm4121, %vm4122
      %v4124 = vsel %vm4123, %v4115, %v4120
      %v4125 = vrsqrt.pop %v4072
      %v4126 = vmul.f32 %v4125, %v4072
      %v4127 = vmul.f32 %v4126, %v4125
      %v4128 = vmul.f32 0.5, %v4127
      %v4129 = vsub.f32 1.5, %v4128
      %v4130 = vmul.f32 %v4125, %v4129
      %vm4131 = vweird.f32 %v4072
      %vm4132 = vweird.f32 %v4125
      %vm4133 = vmor %vm4131, %vm4132
      %v4134 = vsel %vm4133, %v4125, %v4130
      %v4135 = vrsqrt.pop %v4073
      %v4136 = vmul.f32 %v4135, %v4073
      %v4137 = vmul.f32 %v4136, %v4135
      %v4138 = vmul.f32 0.5, %v4137
      %v4139 = vsub.f32 1.5, %v4138
      %v4140 = vmul.f32 %v4135, %v4139
      %vm4141 = vweird.f32 %v4073
      %vm4142 = vweird.f32 %v4135
      %vm4143 = vmor %vm4141, %vm4142
      %v4144 = vsel %vm4143, %v4135, %v4140
      %v4145 = vrsqrt.pop %v4074
      %v4146 = vmul.f32 %v4145, %v4074
      %v4147 = vmul.f32 %v4146, %v4145
      %v4148 = vmul.f32 0.5, %v4147
      %v4149 = vsub.f32 1.5, %v4148
      %v4150 = vmul.f32 %v4145, %v4149
      %vm4151 = vweird.f32 %v4074
      %vm4152 = vweird.f32 %v4145
      %vm4153 = vmor %vm4151, %vm4152
      %v4154 = vsel %vm4153, %v4145, %v4150
      %v4155 = vmul.f32 %v4035, %v4084
      %v4156 = vmul.f32 %v4036, %v4084
      %v4157 = vmul.f32 %v4037, %v4094
      %v4158 = vmul.f32 %v4038, %v4094
      %v4159 = vmul.f32 %v4039, %v4104
      %v4160 = vmul.f32 %v4040, %v4104
      %v4161 = vmul.f32 %v4041, %v4114
      %v4162 = vmul.f32 %v4042, %v4114
      %v4163 = vmul.f32 %v4043, %v4124
      %v4164 = vmul.f32 %v4044, %v4124
      %v4165 = vmul.f32 %v4045, %v4134
      %v4166 = vmul.f32 %v4046, %v4134
      %v4167 = vmul.f32 %v4047, %v4144
      %v4168 = vmul.f32 %v4048, %v4144
      %v4169 = vmul.f32 %v4049, %v4154
      %v4170 = vmul.f32 %v4050, %v4154
      %vm4171 = vcmp.ge.f32.partialorder %v3939, 0.0
      %vm4172 = vcmp.ge.f32.partialorder %v3940, 0.0
      %vm4173 = vcmp.ge.f32.partialorder %v4155, 0.0
      %vm4174 = vcmp.ge.f32.partialorder %v4156, 0.0
      %vm4175 = vcmp.ge.f32.partialorder %v3941, 0.0
      %vm4176 = vcmp.ge.f32.partialorder %v3942, 0.0
      %vm4177 = vcmp.ge.f32.partialorder %v4157, 0.0
      %vm4178 = vcmp.ge.f32.partialorder %v4158, 0.0
      %vm4179 = vcmp.ge.f32.partialorder %v3943, 0.0
      %vm4180 = vcmp.ge.f32.partialorder %v3944, 0.0
      %vm4181 = vcmp.ge.f32.partialorder %v4159, 0.0
      %vm4182 = vcmp.ge.f32.partialorder %v4160, 0.0
      %vm4183 = vcmp.ge.f32.partialorder %v3945, 0.0
      %vm4184 = vcmp.ge.f32.partialorder %v3946, 0.0
      %vm4185 = vcmp.ge.f32.partialorder %v4161, 0.0
      %vm4186 = vcmp.ge.f32.partialorder %v4162, 0.0
      %vm4187 = vcmp.ge.f32.partialorder %v3947, 0.0
      %vm4188 = vcmp.ge.f32.partialorder %v3948, 0.0
      %vm4189 = vcmp.ge.f32.partialorder %v4163, 0.0
      %vm4190 = vcmp.ge.f32.partialorder %v4164, 0.0
      %vm4191 = vcmp.ge.f32.partialorder %v3949, 0.0
      %vm4192 = vcmp.ge.f32.partialorder %v3950, 0.0
      %vm4193 = vcmp.ge.f32.partialorder %v4165, 0.0
      %vm4194 = vcmp.ge.f32.partialorder %v4166, 0.0
      %vm4195 = vcmp.ge.f32.partialorder %v3951, 0.0
      %vm4196 = vcmp.ge.f32.partialorder %v3952, 0.0
      %vm4197 = vcmp.ge.f32.partialorder %v4167, 0.0
      %vm4198 = vcmp.ge.f32.partialorder %v4168, 0.0
      %vm4199 = vcmp.ge.f32.partialorder %v3953, 0.0
      %vm4200 = vcmp.ge.f32.partialorder %v3954, 0.0
      %vm4201 = vcmp.ge.f32.partialorder %v4169, 0.0
      %vm4202 = vcmp.ge.f32.partialorder %v4170, 0.0
      %v4203 = vmul.f32 %v3939, 0.01
      %v4204 = vmul.f32 %v3940, 0.01
      %v4205 = vmul.f32 %v4155, 0.01
      %v4206 = vmul.f32 %v4156, 0.01
      %v4207 = vmul.f32 %v3941, 0.01
      %v4208 = vmul.f32 %v3942, 0.01
      %v4209 = vmul.f32 %v4157, 0.01
      %v4210 = vmul.f32 %v4158, 0.01
      %v4211 = vmul.f32 %v3943, 0.01
      %v4212 = vmul.f32 %v3944, 0.01
      %v4213 = vmul.f32 %v4159, 0.01
      %v4214 = vmul.f32 %v4160, 0.01
      %v4215 = vmul.f32 %v3945, 0.01
      %v4216 = vmul.f32 %v3946, 0.01
      %v4217 = vmul.f32 %v4161, 0.01
      %v4218 = vmul.f32 %v4162, 0.01
      %v4219 = vmul.f32 %v3947, 0.01
      %v4220 = vmul.f32 %v3948, 0.01
      %v4221 = vmul.f32 %v4163, 0.01
      %v4222 = vmul.f32 %v4164, 0.01
      %v4223 = vmul.f32 %v3949, 0.01
      %v4224 = vmul.f32 %v3950, 0.01
      %v4225 = vmul.f32 %v4165, 0.01
      %v4226 = vmul.f32 %v4166, 0.01
      %v4227 = vmul.f32 %v3951, 0.01
      %v4228 = vmul.f32 %v3952, 0.01
      %v4229 = vmul.f32 %v4167, 0.01
      %v4230 = vmul.f32 %v4168, 0.01
      %v4231 = vmul.f32 %v3953, 0.01
      %v4232 = vmul.f32 %v3954, 0.01
      %v4233 = vmul.f32 %v4169, 0.01
      %v4234 = vmul.f32 %v4170, 0.01
      %v4235 = vsel %vm4171, %v3939, %v4203
      %v4236 = vsel %vm4172, %v3940, %v4204
      %v4237 = vsel %vm4173, %v4155, %v4205
      %v4238 = vsel %vm4174, %v4156, %v4206
      %v4239 = vsel %vm4175, %v3941, %v4207
      %v4240 = vsel %vm4176, %v3942, %v4208
      %v4241 = vsel %vm4177, %v4157, %v4209
      %v4242 = vsel %vm4178, %v4158, %v4210
      %v4243 = vsel %vm4179, %v3943, %v4211
      %v4244 = vsel %vm4180, %v3944, %v4212
      %v4245 = vsel %vm4181, %v4159, %v4213
      %v4246 = vsel %vm4182, %v4160, %v4214
      %v4247 = vsel %vm4183, %v3945, %v4215
      %v4248 = vsel %vm4184, %v3946, %v4216
      %v4249 = vsel %vm4185, %v4161, %v4217
      %v4250 = vsel %vm4186, %v4162, %v4218
      %v4251 = vsel %vm4187, %v3947, %v4219
      %v4252 = vsel %vm4188, %v3948, %v4220
      %v4253 = vsel %vm4189, %v4163, %v4221
      %v4254 = vsel %vm4190, %v4164, %v4222
      %v4255 = vsel %vm4191, %v3949, %v4223
      %v4256 = vsel %vm4192, %v3950, %v4224
      %v4257 = vsel %vm4193, %v4165, %v4225
      %v4258 = vsel %vm4194, %v4166, %v4226
      %v4259 = vsel %vm4195, %v3951, %v4227
      %v4260 = vsel %vm4196, %v3952, %v4228
      %v4261 = vsel %vm4197, %v4167, %v4229
      %v4262 = vsel %vm4198, %v4168, %v4230
      %v4263 = vsel %vm4199, %v3953, %v4231
      %v4264 = vsel %vm4200, %v3954, %v4232
      %v4265 = vsel %vm4201, %v4169, %v4233
      %v4266 = vsel %vm4202, %v4170, %v4234
      %s4267 = scalar_lea.vmem %s6, 24
      %v4268 = vld [vmem:[%s4267] sm:$0x3f]
      %s4269 = scalar_lea.vmem %s7, 24
      %v4270 = vld [vmem:[%s4269] sm:$0x3f]
      %4272 = vset.pattern.permute.xlu0 0
      %4273 = vperm.xlu0 %4272, %v4270
      %v4274 = vpop.permute.xlu0 %4273
      %v4277 = vsel %vm1211, %v4268, 0
      %4279 = vmatpush.msra.mxu0 0.0
      %4280 = vmatpush.msra.mxu0 0.0
      %4281 = vmatpush.msra.mxu0 0.0
      %4282 = vmatpush.msra.mxu0 0.0
      %4283 = vmatpush.msra.mxu0 0.0
      %4284 = vmatpush.msra.mxu0 0.0
      %4285 = vmatpush.msra.mxu0 0.0
      %4286 = vmatpush.msra.mxu0 0.0
      %4287 = vmatpush.msra.mxu0 %v4263
      %4288 = vmatpush.msra.mxu0 %v4259
      %4289 = vmatpush.msra.mxu0 %v4255
      %4290 = vmatpush.msra.mxu0 %v4251
      %4291 = vmatpush.msra.mxu0 %v4247
      %4292 = vmatpush.msra.mxu0 %v4243
      %4293 = vmatpush.msra.mxu0 %v4239
      %4294 = vmatpush.msra.mxu0 %v4235
      %4295 = vmatmul.f32.gmra.mxu0 %v4277
      %v4296 = vpop.f32.mrf.mxu0
      %v4297 = vadd.f32 %v4274, %v4296
      %4298 = vdwg.mxu0
      %4299 = vmatpush.msra.mxu0 0.0
      %4300 = vmatpush.msra.mxu0 0.0
      %4301 = vmatpush.msra.mxu0 0.0
      %4302 = vmatpush.msra.mxu0 0.0
      %4303 = vmatpush.msra.mxu0 0.0
      %4304 = vmatpush.msra.mxu0 0.0
      %4305 = vmatpush.msra.mxu0 0.0
      %4306 = vmatpush.msra.mxu0 0.0
      %4307 = vmatpush.msra.mxu0 %v4264
      %4308 = vmatpush.msra.mxu0 %v4260
      %4309 = vmatpush.msra.mxu0 %v4256
      %4310 = vmatpush.msra.mxu0 %v4252
      %4311 = vmatpush.msra.mxu0 %v4248
      %4312 = vmatpush.msra.mxu0 %v4244
      %4313 = vmatpush.msra.mxu0 %v4240
      %4314 = vmatpush.msra.mxu0 %v4236
      %4315 = vmatmul.f32.gmra.mxu0 %v4277
      %v4316 = vpop.f32.mrf.mxu0
      %v4317 = vadd.f32 %v4274, %v4316
      %4318 = vdwg.mxu0
      %4319 = vmatpush.msra.mxu0 0.0
      %4320 = vmatpush.msra.mxu0 0.0
      %4321 = vmatpush.msra.mxu0 0.0
      %4322 = vmatpush.msra.mxu0 0.0
      %4323 = vmatpush.msra.mxu0 0.0
      %4324 = vmatpush.msra.mxu0 0.0
      %4325 = vmatpush.msra.mxu0 0.0
      %4326 = vmatpush.msra.mxu0 0.0
      %4327 = vmatpush.msra.mxu0 %v4265
      %4328 = vmatpush.msra.mxu0 %v4261
      %4329 = vmatpush.msra.mxu0 %v4257
      %4330 = vmatpush.msra.mxu0 %v4253
      %4331 = vmatpush.msra.mxu0 %v4249
      %4332 = vmatpush.msra.mxu0 %v4245
      %4333 = vmatpush.msra.mxu0 %v4241
      %4334 = vmatpush.msra.mxu0 %v4237
      %4335 = vmatmul.f32.gmra.mxu0 %v4277
      %v4336 = vpop.f32.mrf.mxu0
      %v4337 = vadd.f32 %v4274, %v4336
      %4338 = vdwg.mxu0
      %4339 = vmatpush.msra.mxu0 0.0
      %4340 = vmatpush.msra.mxu0 0.0
      %4341 = vmatpush.msra.mxu0 0.0
      %4342 = vmatpush.msra.mxu0 0.0
      %4343 = vmatpush.msra.mxu0 0.0
      %4344 = vmatpush.msra.mxu0 0.0
      %4345 = vmatpush.msra.mxu0 0.0
      %4346 = vmatpush.msra.mxu0 0.0
      %4347 = vmatpush.msra.mxu0 %v4266
      %4348 = vmatpush.msra.mxu0 %v4262
      %4349 = vmatpush.msra.mxu0 %v4258
      %4350 = vmatpush.msra.mxu0 %v4254
      %4351 = vmatpush.msra.mxu0 %v4250
      %4352 = vmatpush.msra.mxu0 %v4246
      %4353 = vmatpush.msra.mxu0 %v4242
      %4354 = vmatpush.msra.mxu0 %v4238
      %4355 = vmatmul.f32.gmra.mxu0 %v4277
      %v4356 = vpop.f32.mrf.mxu0
      %v4357 = vadd.f32 %v4274, %v4356
      %4358 = vdwg.mxu0
      %v4359 = vmax.f32 %v4297, -10.0
      %v4360 = vmax.f32 %v4317, -10.0
      %v4361 = vmax.f32 %v4337, -10.0
      %v4362 = vmax.f32 %v4357, -10.0
      %v4363 = vmin.f32 %v4359, 10.0
      %v4364 = vmin.f32 %v4360, 10.0
      %v4365 = vmin.f32 %v4361, 10.0
      %v4366 = vmin.f32 %v4362, 10.0
      %v4367 = vadd.f32 %v4363, 0.0
      %v4368 = vadd.f32 %v4364, 0.0
      %v4369 = vadd.f32 %v4365, 0.0
      %v4370 = vadd.f32 %v4366, 0.0
      %s4371 = scalar_lea.vmem %s2, 12
      %v4372 = vld [vmem:[%s4371] sm:$0x7]
      %vm4373 = vcmp.gt.f32.partialorder %v4372, 0.5
      %v4378 = vrot.slane %v4297, 3
      %v4379 = vrot.slane %v4317, 3
      %v4380 = vrot.slane %v4337, 3
      %v4381 = vrot.slane %v4357, 3
      %v4386 = vsub.f32 %v3404, %v4378
      %v4387 = vsub.f32 %v3405, %v4379
      %v4388 = vsub.f32 %v3406, %v4380
      %v4389 = vsub.f32 %v3407, %v4381
      %v4390 = vsub.f32 0.0, %v4367
      %v4391 = vsub.f32 0.0, %v4368
      %v4392 = vsub.f32 0.0, %v4369
      %v4393 = vsub.f32 0.0, %v4370
      %v4394 = vmul.f32 %v4390, 1.442695
      %v4395 = vpow.pop %v4394
      %v4396 = vmul.f32 %v4391, 1.442695
      %v4397 = vpow.pop %v4396
      %v4398 = vmul.f32 %v4392, 1.442695
      %v4399 = vpow.pop %v4398
      %v4400 = vmul.f32 %v4393, 1.442695
      %v4401 = vpow.pop %v4400
      %v4402 = vmul.f32 %v4386, %v4395
      %v4403 = vmul.f32 %v4387, %v4397
      %v4404 = vmul.f32 %v4388, %v4399
      %v4405 = vmul.f32 %v4389, %v4401
      %v4406 = vsel %vm4373, 1, 0
      %4407 = vset.pattern.permute.xlu0 0
      %4408 = vperm.xlu0 %4407, %v4406
      %v4409 = vpop.permute.xlu0 %4408
      %vm4410 = vcmp.eq.s32.totalorder %v4409, 1
      %v4411 = vsel %vm4410, %v3404, %v4402
      %v4412 = vsel %vm4410, %v3405, %v4403
      %v4413 = vsel %vm4410, %v3406, %v4404
      %v4414 = vsel %vm4410, %v3407, %v4405
      %v4415 = vld [vmem:[%s323] sm:$0x77]
      %v4416 = vld [vmem:[%s323 + $0x8] sm:$0x77]
      %4419 = vst [vmem:[#allocation1] ss:$2 sm:$0xff] %v4415
      %s4420 = scalar_lea.vmem [#allocation1], 16
      %4421 = vst [vmem:[%s4420] ss:$2 sm:$0xff] %v4416
      %v4422 = vld.sshfl [vmem:[#allocation1] sm:$0xff pattern:$0x75316420]
      %v4423 = vld.sshfl [vmem:[#allocation1 + $0x8] sm:$0xff pattern:$0x75316420]
      %v4424 = vld.sshfl [vmem:[#allocation1 + $0x10] sm:$0xff pattern:$0x75316420]
      %v4425 = vld.sshfl [vmem:[#allocation1 + $0x18] sm:$0xff pattern:$0x75316420]
      %v4430 = vmul.f32 %v4411, %v4422
      %v4431 = vmul.f32 %v4412, %v4423
      %v4432 = vmul.f32 %v4413, %v4424
      %v4433 = vmul.f32 %v4414, %v4425
      %v4438 = vrot.slane %v4431, 4
      %v4439 = vrot.slane %v4433, 4
      %v4440 = vsel %vm1315, %v4430, %v4438
      %v4441 = vsel %vm1315, %v4432, %v4439
      %4444 = vst [vmem:[%s329] sm:$0x77] %v4440
      %4445 = vst [vmem:[%s329 + $0x8] sm:$0x77] %v4441
      %s4446 = smul.u32 4, %s19
      %p4447 = scmp.lt.s32.totalorder %s4446, 7
      %s4448 = scalar_select %p4447, %s4446, 7
      %s4449 = smul.addr %s4448, 4
      %s4450 = scalar_lea.vmem %s8, %s4449
      // Predicated region
      $region53: #{nvp_forward_pallas.1} parent=51 // pred_check
        %p4451 = pneg %p215
      $region54: #{nvp_forward_pallas.1} parent=51 // pred_check_branch
        %4453 = sbr.rel (%p4451) target = $region56
      $region55: #{nvp_forward_pallas.1} parent=51 // pred_region
        %s4454 = smul.u32 4, %s19
      $region56: #{nvp_forward_pallas.1} parent=51 // pred_fallthru
        _
    $region52: #{nvp_forward_pallas.1} parent=5 // pred_fallthru
      _
    %p4455 = scmp.le.s32.totalorder 2, %s14
    // Predicated region
    $region57: #{nvp_forward_pallas.1} parent=5 // pred_check
      %p4456 = pneg %p4455
    $region58: #{nvp_forward_pallas.1} parent=5 // pred_check_branch
      %4458 = sbr.rel (%p4456) target = $region60
    $region59: #{nvp_forward_pallas.1} parent=5 // pred_region
      %s4459 = ssub.s32 %s14, 2
      // Predicated region
      $region61: #{nvp_forward_pallas.1} parent=59 // pred_check
        %p4460 = pneg %p221
      $region62: #{nvp_forward_pallas.1} parent=59 // pred_check_branch
        %4462 = sbr.rel (%p4460) target = $region64
      $region63: #{nvp_forward_pallas.1} parent=59 // pred_region
        %s4463 = smul.u32 4, %s20
        %p4464 = scmp.lt.s32.totalorder %s4463, 7
        %s4465 = scalar_select %p4464, %s4463, 7
        %s4466 = smul.addr %s4465, 4
        %s4467 = scalar_lea.vmem %s8, %s4466
      $region64: #{nvp_forward_pallas.1} parent=59 // pred_fallthru
        _
    $region60: #{nvp_forward_pallas.1} parent=5 // pred_fallthru
      _
  $region6: #{nvp_forward_pallas.1} parent=0 // loop_footer
    %s18 = sadd.s32 1, %s14
  $region7: #{nvp_forward_pallas.1} parent=0 // loop_footer_branch
    %13 = sbr.rel target = $region3
  $region8: #{nvp_forward_pallas.1} parent=0 // loop_exit
    _

</llo_original>
